<compile_context>
chip_gen: v6e
topology: v6e:2x2x1
jax: 0.10.0
libtpu: 0.0.40
codegen_flags: <defaults>
</compile_context>

<pallas_src>
import functools

import numpy as np
import jax
import jax.numpy as jnp
from jax import lax
from jax.experimental import pallas as pl
from jax.experimental.pallas import tpu as pltpu


# ----------------------------------------------------------------------------
# Fused Pallas kernel: num_layers x LSTM (time-major) + Linear head
# ----------------------------------------------------------------------------
def make_fused_rnn_kernel(num_layers):
    """Kernel signature:

    kernel(x2d,                                  # (T*Bp, Din)  bf16, time-major, batch padded to 8
           wih_0, whh_0, b_0, ..., wih_{L-1}, whh_{L-1}, b_{L-1},
           fc_w, fc_b,                           # (H, Opad) f32, (1, Opad) f32
           h0, c0,                               # (L, Bp, H) f32 each
           out,                                  # (Bp, Opad) f32
           xw_sc[, act_sc])                      # VMEM scratch
    """
    n_in = 1 + 3 * num_layers + 4

    def kernel(*refs):
        x_ref = refs[0]
        layer_refs = refs[1:1 + 3 * num_layers]
        fcw_ref, fcb_ref, h0_ref, c0_ref = refs[1 + 3 * num_layers:n_in]
        out_ref = refs[n_in]
        xw_sc = refs[n_in + 1]
        act_sc = refs[n_in + 2] if num_layers > 1 else None

        _, Bp, H = h0_ref.shape
        TBp = x_ref.shape[0]
        T = TBp // Bp

        h = None
        for l in range(num_layers):
            wih_ref, whh_ref, b_ref = layer_refs[3 * l:3 * l + 3]

            # Hoisted input projection for ALL time steps of this layer (bf16 MXU):
            # one (T*Bp, Din) @ (Din, 4H) matmul, pre-scaled bias folded in, f32 accum.
            src = x_ref[...] if l == 0 else act_sc[...]
            xw_sc[...] = (jnp.dot(src, wih_ref[...],
                                  preferred_element_type=jnp.float32)
                          + b_ref[...])

            whh = whh_ref[...]                      # hoisted (H, 4H) f32 weight load
            h = h0_ref[l]                           # (Bp, H) f32 carries
            c = c0_ref[l]

            def step(t, carry, _l=l, _whh=whh):
                h_t, c_t = carry
                row = pl.multiple_of(t * Bp, Bp)    # full 8-sublane tile slice
                gates = (xw_sc[pl.ds(row, Bp), :]
                         + jnp.dot(h_t, _whh, preferred_element_type=jnp.float32))
                # i/f/o columns were pre-scaled by 0.5, so a single tanh over the
                # whole 128-lane gate vreg gives: sigmoid(x) = 0.5*tanh(x/2)+0.5
                # for i/f/o lanes and tanh(x) for the g lanes.  (gate order i,f,g,o)
                th = jnp.tanh(gates)
                i_g = 0.5 * th[:, 0 * H:1 * H] + 0.5
                f_g = 0.5 * th[:, 1 * H:2 * H] + 0.5
                g_g = th[:, 2 * H:3 * H]
                o_g = 0.5 * th[:, 3 * H:4 * H] + 0.5
                c_n = f_g * c_t + i_g * g_g
                h_n = o_g * jnp.tanh(c_n)
                if _l < num_layers - 1:
                    # Feed the next layer; stays in VMEM (bf16 projection input).
                    act_sc[pl.ds(row, Bp), :] = h_n.astype(act_sc.dtype)
                return (h_n, c_n)

            h, c = lax.fori_loop(0, T, step, (h, c), unroll=True)

        # Fused FC head on the final hidden state of the last layer.
        # Opad is a multiple of 128 -> unmasked lane-dense store.
        out_ref[...] = (jnp.dot(h, fcw_ref[...],
                                preferred_element_type=jnp.float32)
                        + fcb_ref[...]).astype(out_ref.dtype)

    return kernel


_VMEM = pl.BlockSpec(memory_space=pltpu.MemorySpace.VMEM)


# ----------------------------------------------------------------------------
# One-time parameter preparation (kernel layout, not per-call)
# ----------------------------------------------------------------------------
def prepare_params(params):
    """Transpose to (in, out) layout, fold biases, pre-scale i/f/o gate columns by
    0.5 (tanh-based sigmoid), cast input-projection weights to bf16, and pad the
    FC head to a lane-dense 128-wide output."""
    lstm = params["lstm"]
    H = lstm[0][1].shape[1]                       # w_hh is (4H, H)

    col_scale = jnp.concatenate([
        jnp.full((H,), 0.5, jnp.float32),         # i
        jnp.full((H,), 0.5, jnp.float32),         # f
        jnp.ones((H,), jnp.float32),              # g (plain tanh)
        jnp.full((H,), 0.5, jnp.float32),         # o
    ])

    layers = []
    for (w_ih, w_hh, b_ih, b_hh) in lstm:
        wih_t = (jnp.transpose(w_ih) * col_scale).astype(jnp.bfloat16)   # (Din, 4H)
        whh_t = (jnp.transpose(w_hh) * col_scale).astype(jnp.float32)    # (H,   4H)
        b = ((b_ih + b_hh) * col_scale).reshape(1, 4 * H).astype(jnp.float32)
        layers.append((wih_t, whh_t, b))

    O = params["fc_w"].shape[0]
    O_pad = ((O + 127) // 128) * 128
    fc_w = jnp.zeros((H, O_pad), jnp.float32).at[:, :O].set(
        jnp.transpose(params["fc_w"]).astype(jnp.float32))
    fc_b = jnp.zeros((1, O_pad), jnp.float32).at[:, :O].set(
        params["fc_b"].reshape(1, O).astype(jnp.float32))

    return {
        "embedding": params["embedding"],
        "layers": layers,
        "fc_w": fc_w,
        "fc_b": fc_b,
    }


# ----------------------------------------------------------------------------
# Wrapper (embedding lookup / concat / layout are plain-JAX glue)
# ----------------------------------------------------------------------------
def rnn_forward(prepped, rating, review, state, *, out_features):
    """Mirrors RNN.forward(rating, review, state) using prepared params."""
    embeds = jnp.take(prepped["embedding"], review, axis=0)          # (B, S, D)
    inputs = jnp.concatenate([rating[:, None, :], embeds], axis=1)   # (B, T, D)
    x = jnp.transpose(inputs, (1, 0, 2))                             # (T, B, D)
    T, B, D = x.shape

    h0, c0 = state
    L = len(prepped["layers"])
    H = prepped["layers"][0][1].shape[0]                             # whh_t is (H, 4H)
    O_pad = prepped["fc_w"].shape[1]

    # Pad batch to a full 8-sublane tile so every per-step scratch access is
    # tile-aligned; padded rows are sliced off at the end.
    B_pad = ((B + 7) // 8) * 8
    if B_pad != B:
        x = jnp.pad(x, ((0, 0), (0, B_pad - B), (0, 0)))
        h0 = jnp.pad(h0, ((0, 0), (0, B_pad - B), (0, 0)))
        c0 = jnp.pad(c0, ((0, 0), (0, B_pad - B), (0, 0)))
    x2d = x.reshape(T * B_pad, D).astype(jnp.bfloat16)               # bf16 projection path

    args = [x2d]
    for (wih_t, whh_t, b) in prepped["layers"]:
        args += [wih_t, whh_t, b]
    args += [prepped["fc_w"], prepped["fc_b"],
             h0.astype(jnp.float32), c0.astype(jnp.float32)]

    scratch = [pltpu.VMEM((T * B_pad, 4 * H), jnp.float32)]          # hoisted gates (f32)
    if L > 1:
        scratch.append(pltpu.VMEM((T * B_pad, H), jnp.bfloat16))     # inter-layer acts (bf16)

    out = pl.pallas_call(
        make_fused_rnn_kernel(L),
        out_shape=jax.ShapeDtypeStruct((B_pad, O_pad), jnp.float32),
        in_specs=[_VMEM] * len(args),
        out_specs=_VMEM,
        scratch_shapes=scratch,
        compiler_params=pltpu.CompilerParams(
            vmem_limit_bytes=32 * 1024 * 1024),
    )(*args)
    return out[:B, :out_features]


# ----------------------------------------------------------------------------
# Pure-numpy reference (PyTorch LSTM semantics, gate order i,f,g,o)
# ----------------------------------------------------------------------------
def ref_forward(params, rating, review, h0, c0):
    emb = np.asarray(params["embedding"])[np.asarray(review)]
    x = np.concatenate([np.asarray(rating)[:, None, :], emb], axis=1)
    T = x.shape[1]

    def sig(z):
        return 1.0 / (1.0 + np.exp(-z))

    layer_in = x
    for (w_ih, w_hh, b_ih, b_hh) in params["lstm"]:
        w_ih, w_hh = np.asarray(w_ih), np.asarray(w_hh)
        b_ih, b_hh = np.asarray(b_ih), np.asarray(b_hh)
        H = w_hh.shape[1]
        h = np.asarray(h0[len(
            [1 for _ in range(0)])]).copy() if False else None  # placeholder (unused)
        layer_in = layer_in  # no-op
        break
    # (re-run cleanly below — simple explicit loop)
    layer_in = x
    for l, (w_ih, w_hh, b_ih, b_hh) in enumerate(params["lstm"]):
        w_ih, w_hh = np.asarray(w_ih), np.asarray(w_hh)
        b_ih, b_hh = np.asarray(b_ih), np.asarray(b_hh)
        H = w_hh.shape[1]
        h = np.asarray(h0[l]).copy()
        c = np.asarray(c0[l]).copy()
        outs = []
        for t in range(T):
            g = layer_in[:, t, :] @ w_ih.T + h @ w_hh.T + b_ih + b_hh
            i = sig(g[:, :H]); f = sig(g[:, H:2 * H])
            gg = np.tanh(g[:, 2 * H:3 * H]); o = sig(g[:, 3 * H:])
            c = f * c + i * gg
            h = o * np.tanh(c)
            outs.append(h)
        layer_in = np.stack(outs, axis=1)
    return layer_in[:, -1, :] @ np.asarray(params["fc_w"]).T + np.asarray(params["fc_b"])


# ----------------------------------------------------------------------------
# Main
# ----------------------------------------------------------------------------
if __name__ == "__main__":
    vocab_size = 50
    input_size = 32      # embedding dim == LSTM input_size
    hidden_size = 32
    output_size = 8
    num_layers = 2
    batch = 2
    seq = 8

    key = jax.random.PRNGKey(0)
    ks = jax.random.split(key, 4 + 4 * num_layers)

    # Deterministic "pretrained" embedding + LSTM/FC parameters (PyTorch layout).
    embedding = jax.random.normal(ks[0], (vocab_size, input_size), jnp.float32)
    scale = 1.0 / np.sqrt(hidden_size)
    lstm_params = []
    for l in range(num_layers):
        d_in = input_size if l == 0 else hidden_size
        kw = ks[4 + 4 * l: 4 + 4 * (l + 1)]
        w_ih = jax.random.uniform(kw[0], (4 * hidden_size, d_in), jnp.float32, -scale, scale)
        w_hh = jax.random.uniform(kw[1], (4 * hidden_size, hidden_size), jnp.float32, -scale, scale)
        b_ih = jax.random.uniform(kw[2], (4 * hidden_size,), jnp.float32, -scale, scale)
        b_hh = jax.random.uniform(kw[3], (4 * hidden_size,), jnp.float32, -scale, scale)
        lstm_params.append((w_ih, w_hh, b_ih, b_hh))
    fc_w = jax.random.uniform(ks[1], (output_size, hidden_size), jnp.float32, -scale, scale)
    fc_b = jax.random.uniform(ks[2], (output_size,), jnp.float32, -scale, scale)

    params = {"embedding": embedding, "lstm": lstm_params, "fc_w": fc_w, "fc_b": fc_b}

    # One-time kernel-layout parameter prep (transposes, bias fold, gate pre-scale,
    # bf16 casts, FC padding) — not repeated per forward call.
    prepped = prepare_params(params)

    # Inputs (match PyTorch forward): rating (B, input_size), review int ids (B, seq),
    # state = (h0, c0) each (num_layers, B, hidden_size).
    ki = jax.random.split(jax.random.PRNGKey(1), 4)
    rating = jax.random.normal(ki[0], (batch, input_size), jnp.float32)
    review = jax.random.randint(ki[1], (batch, seq), 0, vocab_size, jnp.int32)
    h0 = jax.random.normal(ki[2], (num_layers, batch, hidden_size), jnp.float32)
    c0 = jax.random.normal(ki[3], (num_layers, batch, hidden_size), jnp.float32)

    fwd = jax.jit(functools.partial(rnn_forward, out_features=output_size))
    out = fwd(prepped, rating, review, (h0, c0))
    out = jax.block_until_ready(out)

    expected = ref_forward(params, rating, review, h0, c0)
    # bf16 input-projection path -> slightly relaxed (but still tight) tolerance.
    np.testing.assert_allclose(np.asarray(out), expected, rtol=2e-2, atol=2e-2)

    print("KERNEL_OK")
</pallas_src>

<mosaic_0001>
module attributes {stable_mosaic.version = 11 : i64} {
  func.func @kernel(%arg0: memref<72x32xbf16, #tpu.memory_space<vmem>>, %arg1: memref<32x128xbf16, #tpu.memory_space<vmem>>, %arg2: memref<32x128xf32, #tpu.memory_space<vmem>>, %arg3: memref<1x128xf32, #tpu.memory_space<vmem>>, %arg4: memref<32x128xbf16, #tpu.memory_space<vmem>>, %arg5: memref<32x128xf32, #tpu.memory_space<vmem>>, %arg6: memref<1x128xf32, #tpu.memory_space<vmem>>, %arg7: memref<32x128xf32, #tpu.memory_space<vmem>>, %arg8: memref<1x128xf32, #tpu.memory_space<vmem>>, %arg9: memref<2x8x32xf32, #tpu.memory_space<vmem>>, %arg10: memref<2x8x32xf32, #tpu.memory_space<vmem>>, %arg11: memref<8x128xf32, #tpu.memory_space<vmem>>, %arg12: memref<72x128xf32, #tpu.memory_space<vmem>>, %arg13: memref<72x32xbf16, #tpu.memory_space<vmem>>) attributes {dimension_semantics = [], scalar_prefetch = 0 : i64, scratch_operands = 2 : i64, tpu.core_type = #tpu.core_type<tc>} {
    %c0 = arith.constant 0 : index
    %c0_0 = arith.constant 0 : index
    %0 = vector.load %arg0[%c0, %c0_0] : memref<72x32xbf16, #tpu.memory_space<vmem>>, vector<72x32xbf16>
    %c0_1 = arith.constant 0 : index
    %c0_2 = arith.constant 0 : index
    %1 = vector.load %arg1[%c0_1, %c0_2] : memref<32x128xbf16, #tpu.memory_space<vmem>>, vector<32x128xbf16>
    %cst = arith.constant dense<0.000000e+00> : vector<72x128xf32>
    %2 = tpu.matmul %0, %1, %cst {dimension_numbers = #tpu.dot_dimension_numbers<[1], [0], [0], [1], [0, 0, 1, 1], [], []>} : vector<72x32xbf16>, vector<32x128xbf16>, vector<72x128xf32> -> vector<72x128xf32>
    %c0_3 = arith.constant 0 : index
    %c0_4 = arith.constant 0 : index
    %3 = vector.load %arg3[%c0_3, %c0_4] : memref<1x128xf32, #tpu.memory_space<vmem>>, vector<1x128xf32>
    %4 = vector.broadcast %3 : vector<1x128xf32> to vector<72x128xf32>
    %5 = arith.addf %2, %4 : vector<72x128xf32>
    %c0_5 = arith.constant 0 : index
    %c0_6 = arith.constant 0 : index
    %6 = vector.load %arg12[%c0_5, %c0_6] : memref<72x128xf32, #tpu.memory_space<vmem>>, vector<72x128xf32>
    tpu.vector_store %arg12[%c0_5, %c0_6], %5 {strides = array<i32>} : memref<72x128xf32, #tpu.memory_space<vmem>>, vector<72x128xf32>,
    %c0_7 = arith.constant 0 : index
    %c0_8 = arith.constant 0 : index
    %7 = vector.load %arg2[%c0_7, %c0_8] : memref<32x128xf32, #tpu.memory_space<vmem>>, vector<32x128xf32>
    %c0_9 = arith.constant 0 : index
    %c0_10 = arith.constant 0 : index
    %c0_11 = arith.constant 0 : index
    %8 = vector.load %arg9[%c0_9, %c0_10, %c0_11] : memref<2x8x32xf32, #tpu.memory_space<vmem>>, vector<1x8x32xf32>
    %9 = vector.shape_cast %8 : vector<1x8x32xf32> to vector<8x32xf32>
    %c0_12 = arith.constant 0 : index
    %c0_13 = arith.constant 0 : index
    %c0_14 = arith.constant 0 : index
    %10 = vector.load %arg10[%c0_12, %c0_13, %c0_14] : memref<2x8x32xf32, #tpu.memory_space<vmem>>, vector<1x8x32xf32>
    %11 = vector.shape_cast %10 : vector<1x8x32xf32> to vector<8x32xf32>
    %c0_i32 = arith.constant 0 : i32
    %c8_i32 = arith.constant 8 : i32
    %12 = arith.muli %c0_i32, %c8_i32 : i32
    %13 = tpu.assume_multiple %12, 8 : i32
    %14 = arith.index_cast %13 : i32 to index
    %c0_15 = arith.constant 0 : index
    %15 = vector.load %arg12[%14, %c0_15] : memref<72x128xf32, #tpu.memory_space<vmem>>, vector<8x128xf32>
    %cst_16 = arith.constant dense<0.000000e+00> : vector<8x128xf32>
    %16 = tpu.matmul %9, %7, %cst_16 {dimension_numbers = #tpu.dot_dimension_numbers<[1], [0], [0], [1], [0, 0, 1, 1], [], []>} : vector<8x32xf32>, vector<32x128xf32>, vector<8x128xf32> -> vector<8x128xf32>
    %17 = arith.addf %15, %16 : vector<8x128xf32>
    %18 = math.tanh %17 : vector<8x128xf32>
    %19 = vector.extract_strided_slice %18 {offsets = [0, 0], sizes = [8, 32], strides = [1, 1]} : vector<8x128xf32> to vector<8x32xf32>
    %cst_17 = arith.constant 5.000000e-01 : f32
    %20 = vector.broadcast %cst_17 : f32 to vector<8x32xf32>
    %21 = arith.mulf %20, %19 : vector<8x32xf32>
    %cst_18 = arith.constant 5.000000e-01 : f32
    %22 = vector.broadcast %cst_18 : f32 to vector<8x32xf32>
    %23 = arith.addf %21, %22 : vector<8x32xf32>
    %24 = vector.extract_strided_slice %18 {offsets = [0, 32], sizes = [8, 32], strides = [1, 1]} : vector<8x128xf32> to vector<8x32xf32>
    %cst_19 = arith.constant 5.000000e-01 : f32
    %25 = vector.broadcast %cst_19 : f32 to vector<8x32xf32>
    %26 = arith.mulf %25, %24 : vector<8x32xf32>
    %cst_20 = arith.constant 5.000000e-01 : f32
    %27 = vector.broadcast %cst_20 : f32 to vector<8x32xf32>
    %28 = arith.addf %26, %27 : vector<8x32xf32>
    %29 = vector.extract_strided_slice %18 {offsets = [0, 64], sizes = [8, 32], strides = [1, 1]} : vector<8x128xf32> to vector<8x32xf32>
    %30 = vector.extract_strided_slice %18 {offsets = [0, 96], sizes = [8, 32], strides = [1, 1]} : vector<8x128xf32> to vector<8x32xf32>
    %cst_21 = arith.constant 5.000000e-01 : f32
    %31 = vector.broadcast %cst_21 : f32 to vector<8x32xf32>
    %32 = arith.mulf %31, %30 : vector<8x32xf32>
    %cst_22 = arith.constant 5.000000e-01 : f32
    %33 = vector.broadcast %cst_22 : f32 to vector<8x32xf32>
    %34 = arith.addf %32, %33 : vector<8x32xf32>
    %35 = arith.mulf %28, %11 : vector<8x32xf32>
    %36 = arith.mulf %23, %29 : vector<8x32xf32>
    %37 = arith.addf %35, %36 : vector<8x32xf32>
    %38 = math.tanh %37 : vector<8x32xf32>
    %39 = arith.mulf %34, %38 : vector<8x32xf32>
    %40 = arith.truncf %39 : vector<8x32xf32> to vector<8x32xbf16>
    %41 = arith.index_cast %13 : i32 to index
    %c0_23 = arith.constant 0 : index
    %42 = vector.load %arg13[%41, %c0_23] : memref<72x32xbf16, #tpu.memory_space<vmem>>, vector<8x32xbf16>
    tpu.vector_store %arg13[%41, %c0_23], %40 {strides = array<i32>} : memref<72x32xbf16, #tpu.memory_space<vmem>>, vector<8x32xbf16>,
    %c1_i32 = arith.constant 1 : i32
    %c8_i32_24 = arith.constant 8 : i32
    %43 = arith.muli %c1_i32, %c8_i32_24 : i32
    %44 = tpu.assume_multiple %43, 8 : i32
    %45 = arith.index_cast %44 : i32 to index
    %c0_25 = arith.constant 0 : index
    %46 = vector.load %arg12[%45, %c0_25] : memref<72x128xf32, #tpu.memory_space<vmem>>, vector<8x128xf32>
    %cst_26 = arith.constant dense<0.000000e+00> : vector<8x128xf32>
    %47 = tpu.matmul %39, %7, %cst_26 {dimension_numbers = #tpu.dot_dimension_numbers<[1], [0], [0], [1], [0, 0, 1, 1], [], []>} : vector<8x32xf32>, vector<32x128xf32>, vector<8x128xf32> -> vector<8x128xf32>
    %48 = arith.addf %46, %47 : vector<8x128xf32>
    %49 = math.tanh %48 : vector<8x128xf32>
    %50 = vector.extract_strided_slice %49 {offsets = [0, 0], sizes = [8, 32], strides = [1, 1]} : vector<8x128xf32> to vector<8x32xf32>
    %cst_27 = arith.constant 5.000000e-01 : f32
    %51 = vector.broadcast %cst_27 : f32 to vector<8x32xf32>
    %52 = arith.mulf %51, %50 : vector<8x32xf32>
    %cst_28 = arith.constant 5.000000e-01 : f32
    %53 = vector.broadcast %cst_28 : f32 to vector<8x32xf32>
    %54 = arith.addf %52, %53 : vector<8x32xf32>
    %55 = vector.extract_strided_slice %49 {offsets = [0, 32], sizes = [8, 32], strides = [1, 1]} : vector<8x128xf32> to vector<8x32xf32>
    %cst_29 = arith.constant 5.000000e-01 : f32
    %56 = vector.broadcast %cst_29 : f32 to vector<8x32xf32>
    %57 = arith.mulf %56, %55 : vector<8x32xf32>
    %cst_30 = arith.constant 5.000000e-01 : f32
    %58 = vector.broadcast %cst_30 : f32 to vector<8x32xf32>
    %59 = arith.addf %57, %58 : vector<8x32xf32>
    %60 = vector.extract_strided_slice %49 {offsets = [0, 64], sizes = [8, 32], strides = [1, 1]} : vector<8x128xf32> to vector<8x32xf32>
    %61 = vector.extract_strided_slice %49 {offsets = [0, 96], sizes = [8, 32], strides = [1, 1]} : vector<8x128xf32> to vector<8x32xf32>
    %cst_31 = arith.constant 5.000000e-01 : f32
    %62 = vector.broadcast %cst_31 : f32 to vector<8x32xf32>
    %63 = arith.mulf %62, %61 : vector<8x32xf32>
    %cst_32 = arith.constant 5.000000e-01 : f32
    %64 = vector.broadcast %cst_32 : f32 to vector<8x32xf32>
    %65 = arith.addf %63, %64 : vector<8x32xf32>
    %66 = arith.mulf %59, %37 : vector<8x32xf32>
    %67 = arith.mulf %54, %60 : vector<8x32xf32>
    %68 = arith.addf %66, %67 : vector<8x32xf32>
    %69 = math.tanh %68 : vector<8x32xf32>
    %70 = arith.mulf %65, %69 : vector<8x32xf32>
    %71 = arith.truncf %70 : vector<8x32xf32> to vector<8x32xbf16>
    %72 = arith.index_cast %44 : i32 to index
    %c0_33 = arith.constant 0 : index
    %73 = vector.load %arg13[%72, %c0_33] : memref<72x32xbf16, #tpu.memory_space<vmem>>, vector<8x32xbf16>
    tpu.vector_store %arg13[%72, %c0_33], %71 {strides = array<i32>} : memref<72x32xbf16, #tpu.memory_space<vmem>>, vector<8x32xbf16>,
    %c2_i32 = arith.constant 2 : i32
    %c8_i32_34 = arith.constant 8 : i32
    %74 = arith.muli %c2_i32, %c8_i32_34 : i32
    %75 = tpu.assume_multiple %74, 8 : i32
    %76 = arith.index_cast %75 : i32 to index
    %c0_35 = arith.constant 0 : index
    %77 = vector.load %arg12[%76, %c0_35] : memref<72x128xf32, #tpu.memory_space<vmem>>, vector<8x128xf32>
    %cst_36 = arith.constant dense<0.000000e+00> : vector<8x128xf32>
    %78 = tpu.matmul %70, %7, %cst_36 {dimension_numbers = #tpu.dot_dimension_numbers<[1], [0], [0], [1], [0, 0, 1, 1], [], []>} : vector<8x32xf32>, vector<32x128xf32>, vector<8x128xf32> -> vector<8x128xf32>
    %79 = arith.addf %77, %78 : vector<8x128xf32>
    %80 = math.tanh %79 : vector<8x128xf32>
    %81 = vector.extract_strided_slice %80 {offsets = [0, 0], sizes = [8, 32], strides = [1, 1]} : vector<8x128xf32> to vector<8x32xf32>
    %cst_37 = arith.constant 5.000000e-01 : f32
    %82 = vector.broadcast %cst_37 : f32 to vector<8x32xf32>
    %83 = arith.mulf %82, %81 : vector<8x32xf32>
    %cst_38 = arith.constant 5.000000e-01 : f32
    %84 = vector.broadcast %cst_38 : f32 to vector<8x32xf32>
    %85 = arith.addf %83, %84 : vector<8x32xf32>
    %86 = vector.extract_strided_slice %80 {offsets = [0, 32], sizes = [8, 32], strides = [1, 1]} : vector<8x128xf32> to vector<8x32xf32>
    %cst_39 = arith.constant 5.000000e-01 : f32
    %87 = vector.broadcast %cst_39 : f32 to vector<8x32xf32>
    %88 = arith.mulf %87, %86 : vector<8x32xf32>
    %cst_40 = arith.constant 5.000000e-01 : f32
    %89 = vector.broadcast %cst_40 : f32 to vector<8x32xf32>
    %90 = arith.addf %88, %89 : vector<8x32xf32>
    %91 = vector.extract_strided_slice %80 {offsets = [0, 64], sizes = [8, 32], strides = [1, 1]} : vector<8x128xf32> to vector<8x32xf32>
    %92 = vector.extract_strided_slice %80 {offsets = [0, 96], sizes = [8, 32], strides = [1, 1]} : vector<8x128xf32> to vector<8x32xf32>
    %cst_41 = arith.constant 5.000000e-01 : f32
    %93 = vector.broadcast %cst_41 : f32 to vector<8x32xf32>
    %94 = arith.mulf %93, %92 : vector<8x32xf32>
    %cst_42 = arith.constant 5.000000e-01 : f32
    %95 = vector.broadcast %cst_42 : f32 to vector<8x32xf32>
    %96 = arith.addf %94, %95 : vector<8x32xf32>
    %97 = arith.mulf %90, %68 : vector<8x32xf32>
    %98 = arith.mulf %85, %91 : vector<8x32xf32>
    %99 = arith.addf %97, %98 : vector<8x32xf32>
    %100 = math.tanh %99 : vector<8x32xf32>
    %101 = arith.mulf %96, %100 : vector<8x32xf32>
    %102 = arith.truncf %101 : vector<8x32xf32> to vector<8x32xbf16>
    %103 = arith.index_cast %75 : i32 to index
    %c0_43 = arith.constant 0 : index
    %104 = vector.load %arg13[%103, %c0_43] : memref<72x32xbf16, #tpu.memory_space<vmem>>, vector<8x32xbf16>
    tpu.vector_store %arg13[%103, %c0_43], %102 {strides = array<i32>} : memref<72x32xbf16, #tpu.memory_space<vmem>>, vector<8x32xbf16>,
    %c3_i32 = arith.constant 3 : i32
    %c8_i32_44 = arith.constant 8 : i32
    %105 = arith.muli %c3_i32, %c8_i32_44 : i32
    %106 = tpu.assume_multiple %105, 8 : i32
    %107 = arith.index_cast %106 : i32 to index
    %c0_45 = arith.constant 0 : index
    %108 = vector.load %arg12[%107, %c0_45] : memref<72x128xf32, #tpu.memory_space<vmem>>, vector<8x128xf32>
    %cst_46 = arith.constant dense<0.000000e+00> : vector<8x128xf32>
    %109 = tpu.matmul %101, %7, %cst_46 {dimension_numbers = #tpu.dot_dimension_numbers<[1], [0], [0], [1], [0, 0, 1, 1], [], []>} : vector<8x32xf32>, vector<32x128xf32>, vector<8x128xf32> -> vector<8x128xf32>
    %110 = arith.addf %108, %109 : vector<8x128xf32>
    %111 = math.tanh %110 : vector<8x128xf32>
    %112 = vector.extract_strided_slice %111 {offsets = [0, 0], sizes = [8, 32], strides = [1, 1]} : vector<8x128xf32> to vector<8x32xf32>
    %cst_47 = arith.constant 5.000000e-01 : f32
    %113 = vector.broadcast %cst_47 : f32 to vector<8x32xf32>
    %114 = arith.mulf %113, %112 : vector<8x32xf32>
    %cst_48 = arith.constant 5.000000e-01 : f32
    %115 = vector.broadcast %cst_48 : f32 to vector<8x32xf32>
    %116 = arith.addf %114, %115 : vector<8x32xf32>
    %117 = vector.extract_strided_slice %111 {offsets = [0, 32], sizes = [8, 32], strides = [1, 1]} : vector<8x128xf32> to vector<8x32xf32>
    %cst_49 = arith.constant 5.000000e-01 : f32
    %118 = vector.broadcast %cst_49 : f32 to vector<8x32xf32>
    %119 = arith.mulf %118, %117 : vector<8x32xf32>
    %cst_50 = arith.constant 5.000000e-01 : f32
    %120 = vector.broadcast %cst_50 : f32 to vector<8x32xf32>
    %121 = arith.addf %119, %120 : vector<8x32xf32>
    %122 = vector.extract_strided_slice %111 {offsets = [0, 64], sizes = [8, 32], strides = [1, 1]} : vector<8x128xf32> to vector<8x32xf32>
    %123 = vector.extract_strided_slice %111 {offsets = [0, 96], sizes = [8, 32], strides = [1, 1]} : vector<8x128xf32> to vector<8x32xf32>
    %cst_51 = arith.constant 5.000000e-01 : f32
    %124 = vector.broadcast %cst_51 : f32 to vector<8x32xf32>
    %125 = arith.mulf %124, %123 : vector<8x32xf32>
    %cst_52 = arith.constant 5.000000e-01 : f32
    %126 = vector.broadcast %cst_52 : f32 to vector<8x32xf32>
    %127 = arith.addf %125, %126 : vector<8x32xf32>
    %128 = arith.mulf %121, %99 : vector<8x32xf32>
    %129 = arith.mulf %116, %122 : vector<8x32xf32>
    %130 = arith.addf %128, %129 : vector<8x32xf32>
    %131 = math.tanh %130 : vector<8x32xf32>
    %132 = arith.mulf %127, %131 : vector<8x32xf32>
    %133 = arith.truncf %132 : vector<8x32xf32> to vector<8x32xbf16>
    %134 = arith.index_cast %106 : i32 to index
    %c0_53 = arith.constant 0 : index
    %135 = vector.load %arg13[%134, %c0_53] : memref<72x32xbf16, #tpu.memory_space<vmem>>, vector<8x32xbf16>
    tpu.vector_store %arg13[%134, %c0_53], %133 {strides = array<i32>} : memref<72x32xbf16, #tpu.memory_space<vmem>>, vector<8x32xbf16>,
    %c4_i32 = arith.constant 4 : i32
    %c8_i32_54 = arith.constant 8 : i32
    %136 = arith.muli %c4_i32, %c8_i32_54 : i32
    %137 = tpu.assume_multiple %136, 8 : i32
    %138 = arith.index_cast %137 : i32 to index
    %c0_55 = arith.constant 0 : index
    %139 = vector.load %arg12[%138, %c0_55] : memref<72x128xf32, #tpu.memory_space<vmem>>, vector<8x128xf32>
    %cst_56 = arith.constant dense<0.000000e+00> : vector<8x128xf32>
    %140 = tpu.matmul %132, %7, %cst_56 {dimension_numbers = #tpu.dot_dimension_numbers<[1], [0], [0], [1], [0, 0, 1, 1], [], []>} : vector<8x32xf32>, vector<32x128xf32>, vector<8x128xf32> -> vector<8x128xf32>
    %141 = arith.addf %139, %140 : vector<8x128xf32>
    %142 = math.tanh %141 : vector<8x128xf32>
    %143 = vector.extract_strided_slice %142 {offsets = [0, 0], sizes = [8, 32], strides = [1, 1]} : vector<8x128xf32> to vector<8x32xf32>
    %cst_57 = arith.constant 5.000000e-01 : f32
    %144 = vector.broadcast %cst_57 : f32 to vector<8x32xf32>
    %145 = arith.mulf %144, %143 : vector<8x32xf32>
    %cst_58 = arith.constant 5.000000e-01 : f32
    %146 = vector.broadcast %cst_58 : f32 to vector<8x32xf32>
    %147 = arith.addf %145, %146 : vector<8x32xf32>
    %148 = vector.extract_strided_slice %142 {offsets = [0, 32], sizes = [8, 32], strides = [1, 1]} : vector<8x128xf32> to vector<8x32xf32>
    %cst_59 = arith.constant 5.000000e-01 : f32
    %149 = vector.broadcast %cst_59 : f32 to vector<8x32xf32>
    %150 = arith.mulf %149, %148 : vector<8x32xf32>
    %cst_60 = arith.constant 5.000000e-01 : f32
    %151 = vector.broadcast %cst_60 : f32 to vector<8x32xf32>
    %152 = arith.addf %150, %151 : vector<8x32xf32>
    %153 = vector.extract_strided_slice %142 {offsets = [0, 64], sizes = [8, 32], strides = [1, 1]} : vector<8x128xf32> to vector<8x32xf32>
    %154 = vector.extract_strided_slice %142 {offsets = [0, 96], sizes = [8, 32], strides = [1, 1]} : vector<8x128xf32> to vector<8x32xf32>
    %cst_61 = arith.constant 5.000000e-01 : f32
    %155 = vector.broadcast %cst_61 : f32 to vector<8x32xf32>
    %156 = arith.mulf %155, %154 : vector<8x32xf32>
    %cst_62 = arith.constant 5.000000e-01 : f32
    %157 = vector.broadcast %cst_62 : f32 to vector<8x32xf32>
    %158 = arith.addf %156, %157 : vector<8x32xf32>
    %159 = arith.mulf %152, %130 : vector<8x32xf32>
    %160 = arith.mulf %147, %153 : vector<8x32xf32>
    %161 = arith.addf %159, %160 : vector<8x32xf32>
    %162 = math.tanh %161 : vector<8x32xf32>
    %163 = arith.mulf %158, %162 : vector<8x32xf32>
    %164 = arith.truncf %163 : vector<8x32xf32> to vector<8x32xbf16>
    %165 = arith.index_cast %137 : i32 to index
    %c0_63 = arith.constant 0 : index
    %166 = vector.load %arg13[%165, %c0_63] : memref<72x32xbf16, #tpu.memory_space<vmem>>, vector<8x32xbf16>
    tpu.vector_store %arg13[%165, %c0_63], %164 {strides = array<i32>} : memref<72x32xbf16, #tpu.memory_space<vmem>>, vector<8x32xbf16>,
    %c5_i32 = arith.constant 5 : i32
    %c8_i32_64 = arith.constant 8 : i32
    %167 = arith.muli %c5_i32, %c8_i32_64 : i32
    %168 = tpu.assume_multiple %167, 8 : i32
    %169 = arith.index_cast %168 : i32 to index
    %c0_65 = arith.constant 0 : index
    %170 = vector.load %arg12[%169, %c0_65] : memref<72x128xf32, #tpu.memory_space<vmem>>, vector<8x128xf32>
    %cst_66 = arith.constant dense<0.000000e+00> : vector<8x128xf32>
    %171 = tpu.matmul %163, %7, %cst_66 {dimension_numbers = #tpu.dot_dimension_numbers<[1], [0], [0], [1], [0, 0, 1, 1], [], []>} : vector<8x32xf32>, vector<32x128xf32>, vector<8x128xf32> -> vector<8x128xf32>
    %172 = arith.addf %170, %171 : vector<8x128xf32>
    %173 = math.tanh %172 : vector<8x128xf32>
    %174 = vector.extract_strided_slice %173 {offsets = [0, 0], sizes = [8, 32], strides = [1, 1]} : vector<8x128xf32> to vector<8x32xf32>
    %cst_67 = arith.constant 5.000000e-01 : f32
    %175 = vector.broadcast %cst_67 : f32 to vector<8x32xf32>
    %176 = arith.mulf %175, %174 : vector<8x32xf32>
    %cst_68 = arith.constant 5.000000e-01 : f32
    %177 = vector.broadcast %cst_68 : f32 to vector<8x32xf32>
    %178 = arith.addf %176, %177 : vector<8x32xf32>
    %179 = vector.extract_strided_slice %173 {offsets = [0, 32], sizes = [8, 32], strides = [1, 1]} : vector<8x128xf32> to vector<8x32xf32>
    %cst_69 = arith.constant 5.000000e-01 : f32
    %180 = vector.broadcast %cst_69 : f32 to vector<8x32xf32>
    %181 = arith.mulf %180, %179 : vector<8x32xf32>
    %cst_70 = arith.constant 5.000000e-01 : f32
    %182 = vector.broadcast %cst_70 : f32 to vector<8x32xf32>
    %183 = arith.addf %181, %182 : vector<8x32xf32>
    %184 = vector.extract_strided_slice %173 {offsets = [0, 64], sizes = [8, 32], strides = [1, 1]} : vector<8x128xf32> to vector<8x32xf32>
    %185 = vector.extract_strided_slice %173 {offsets = [0, 96], sizes = [8, 32], strides = [1, 1]} : vector<8x128xf32> to vector<8x32xf32>
    %cst_71 = arith.constant 5.000000e-01 : f32
    %186 = vector.broadcast %cst_71 : f32 to vector<8x32xf32>
    %187 = arith.mulf %186, %185 : vector<8x32xf32>
    %cst_72 = arith.constant 5.000000e-01 : f32
    %188 = vector.broadcast %cst_72 : f32 to vector<8x32xf32>
    %189 = arith.addf %187, %188 : vector<8x32xf32>
    %190 = arith.mulf %183, %161 : vector<8x32xf32>
    %191 = arith.mulf %178, %184 : vector<8x32xf32>
    %192 = arith.addf %190, %191 : vector<8x32xf32>
    %193 = math.tanh %192 : vector<8x32xf32>
    %194 = arith.mulf %189, %193 : vector<8x32xf32>
    %195 = arith.truncf %194 : vector<8x32xf32> to vector<8x32xbf16>
    %196 = arith.index_cast %168 : i32 to index
    %c0_73 = arith.constant 0 : index
    %197 = vector.load %arg13[%196, %c0_73] : memref<72x32xbf16, #tpu.memory_space<vmem>>, vector<8x32xbf16>
    tpu.vector_store %arg13[%196, %c0_73], %195 {strides = array<i32>} : memref<72x32xbf16, #tpu.memory_space<vmem>>, vector<8x32xbf16>,
    %c6_i32 = arith.constant 6 : i32
    %c8_i32_74 = arith.constant 8 : i32
    %198 = arith.muli %c6_i32, %c8_i32_74 : i32
    %199 = tpu.assume_multiple %198, 8 : i32
    %200 = arith.index_cast %199 : i32 to index
    %c0_75 = arith.constant 0 : index
    %201 = vector.load %arg12[%200, %c0_75] : memref<72x128xf32, #tpu.memory_space<vmem>>, vector<8x128xf32>
    %cst_76 = arith.constant dense<0.000000e+00> : vector<8x128xf32>
    %202 = tpu.matmul %194, %7, %cst_76 {dimension_numbers = #tpu.dot_dimension_numbers<[1], [0], [0], [1], [0, 0, 1, 1], [], []>} : vector<8x32xf32>, vector<32x128xf32>, vector<8x128xf32> -> vector<8x128xf32>
    %203 = arith.addf %201, %202 : vector<8x128xf32>
    %204 = math.tanh %203 : vector<8x128xf32>
    %205 = vector.extract_strided_slice %204 {offsets = [0, 0], sizes = [8, 32], strides = [1, 1]} : vector<8x128xf32> to vector<8x32xf32>
    %cst_77 = arith.constant 5.000000e-01 : f32
    %206 = vector.broadcast %cst_77 : f32 to vector<8x32xf32>
    %207 = arith.mulf %206, %205 : vector<8x32xf32>
    %cst_78 = arith.constant 5.000000e-01 : f32
    %208 = vector.broadcast %cst_78 : f32 to vector<8x32xf32>
    %209 = arith.addf %207, %208 : vector<8x32xf32>
    %210 = vector.extract_strided_slice %204 {offsets = [0, 32], sizes = [8, 32], strides = [1, 1]} : vector<8x128xf32> to vector<8x32xf32>
    %cst_79 = arith.constant 5.000000e-01 : f32
    %211 = vector.broadcast %cst_79 : f32 to vector<8x32xf32>
    %212 = arith.mulf %211, %210 : vector<8x32xf32>
    %cst_80 = arith.constant 5.000000e-01 : f32
    %213 = vector.broadcast %cst_80 : f32 to vector<8x32xf32>
    %214 = arith.addf %212, %213 : vector<8x32xf32>
    %215 = vector.extract_strided_slice %204 {offsets = [0, 64], sizes = [8, 32], strides = [1, 1]} : vector<8x128xf32> to vector<8x32xf32>
    %216 = vector.extract_strided_slice %204 {offsets = [0, 96], sizes = [8, 32], strides = [1, 1]} : vector<8x128xf32> to vector<8x32xf32>
    %cst_81 = arith.constant 5.000000e-01 : f32
    %217 = vector.broadcast %cst_81 : f32 to vector<8x32xf32>
    %218 = arith.mulf %217, %216 : vector<8x32xf32>
    %cst_82 = arith.constant 5.000000e-01 : f32
    %219 = vector.broadcast %cst_82 : f32 to vector<8x32xf32>
    %220 = arith.addf %218, %219 : vector<8x32xf32>
    %221 = arith.mulf %214, %192 : vector<8x32xf32>
    %222 = arith.mulf %209, %215 : vector<8x32xf32>
    %223 = arith.addf %221, %222 : vector<8x32xf32>
    %224 = math.tanh %223 : vector<8x32xf32>
    %225 = arith.mulf %220, %224 : vector<8x32xf32>
    %226 = arith.truncf %225 : vector<8x32xf32> to vector<8x32xbf16>
    %227 = arith.index_cast %199 : i32 to index
    %c0_83 = arith.constant 0 : index
    %228 = vector.load %arg13[%227, %c0_83] : memref<72x32xbf16, #tpu.memory_space<vmem>>, vector<8x32xbf16>
    tpu.vector_store %arg13[%227, %c0_83], %226 {strides = array<i32>} : memref<72x32xbf16, #tpu.memory_space<vmem>>, vector<8x32xbf16>,
    %c7_i32 = arith.constant 7 : i32
    %c8_i32_84 = arith.constant 8 : i32
    %229 = arith.muli %c7_i32, %c8_i32_84 : i32
    %230 = tpu.assume_multiple %229, 8 : i32
    %231 = arith.index_cast %230 : i32 to index
    %c0_85 = arith.constant 0 : index
    %232 = vector.load %arg12[%231, %c0_85] : memref<72x128xf32, #tpu.memory_space<vmem>>, vector<8x128xf32>
    %cst_86 = arith.constant dense<0.000000e+00> : vector<8x128xf32>
    %233 = tpu.matmul %225, %7, %cst_86 {dimension_numbers = #tpu.dot_dimension_numbers<[1], [0], [0], [1], [0, 0, 1, 1], [], []>} : vector<8x32xf32>, vector<32x128xf32>, vector<8x128xf32> -> vector<8x128xf32>
    %234 = arith.addf %232, %233 : vector<8x128xf32>
    %235 = math.tanh %234 : vector<8x128xf32>
    %236 = vector.extract_strided_slice %235 {offsets = [0, 0], sizes = [8, 32], strides = [1, 1]} : vector<8x128xf32> to vector<8x32xf32>
    %cst_87 = arith.constant 5.000000e-01 : f32
    %237 = vector.broadcast %cst_87 : f32 to vector<8x32xf32>
    %238 = arith.mulf %237, %236 : vector<8x32xf32>
    %cst_88 = arith.constant 5.000000e-01 : f32
    %239 = vector.broadcast %cst_88 : f32 to vector<8x32xf32>
    %240 = arith.addf %238, %239 : vector<8x32xf32>
    %241 = vector.extract_strided_slice %235 {offsets = [0, 32], sizes = [8, 32], strides = [1, 1]} : vector<8x128xf32> to vector<8x32xf32>
    %cst_89 = arith.constant 5.000000e-01 : f32
    %242 = vector.broadcast %cst_89 : f32 to vector<8x32xf32>
    %243 = arith.mulf %242, %241 : vector<8x32xf32>
    %cst_90 = arith.constant 5.000000e-01 : f32
    %244 = vector.broadcast %cst_90 : f32 to vector<8x32xf32>
    %245 = arith.addf %243, %244 : vector<8x32xf32>
    %246 = vector.extract_strided_slice %235 {offsets = [0, 64], sizes = [8, 32], strides = [1, 1]} : vector<8x128xf32> to vector<8x32xf32>
    %247 = vector.extract_strided_slice %235 {offsets = [0, 96], sizes = [8, 32], strides = [1, 1]} : vector<8x128xf32> to vector<8x32xf32>
    %cst_91 = arith.constant 5.000000e-01 : f32
    %248 = vector.broadcast %cst_91 : f32 to vector<8x32xf32>
    %249 = arith.mulf %248, %247 : vector<8x32xf32>
    %cst_92 = arith.constant 5.000000e-01 : f32
    %250 = vector.broadcast %cst_92 : f32 to vector<8x32xf32>
    %251 = arith.addf %249, %250 : vector<8x32xf32>
    %252 = arith.mulf %245, %223 : vector<8x32xf32>
    %253 = arith.mulf %240, %246 : vector<8x32xf32>
    %254 = arith.addf %252, %253 : vector<8x32xf32>
    %255 = math.tanh %254 : vector<8x32xf32>
    %256 = arith.mulf %251, %255 : vector<8x32xf32>
    %257 = arith.truncf %256 : vector<8x32xf32> to vector<8x32xbf16>
    %258 = arith.index_cast %230 : i32 to index
    %c0_93 = arith.constant 0 : index
    %259 = vector.load %arg13[%258, %c0_93] : memref<72x32xbf16, #tpu.memory_space<vmem>>, vector<8x32xbf16>
    tpu.vector_store %arg13[%258, %c0_93], %257 {strides = array<i32>} : memref<72x32xbf16, #tpu.memory_space<vmem>>, vector<8x32xbf16>,
    %c8_i32_94 = arith.constant 8 : i32
    %c8_i32_95 = arith.constant 8 : i32
    %260 = arith.muli %c8_i32_94, %c8_i32_95 : i32
    %261 = tpu.assume_multiple %260, 8 : i32
    %262 = arith.index_cast %261 : i32 to index
    %c0_96 = arith.constant 0 : index
    %263 = vector.load %arg12[%262, %c0_96] : memref<72x128xf32, #tpu.memory_space<vmem>>, vector<8x128xf32>
    %cst_97 = arith.constant dense<0.000000e+00> : vector<8x128xf32>
    %264 = tpu.matmul %256, %7, %cst_97 {dimension_numbers = #tpu.dot_dimension_numbers<[1], [0], [0], [1], [0, 0, 1, 1], [], []>} : vector<8x32xf32>, vector<32x128xf32>, vector<8x128xf32> -> vector<8x128xf32>
    %265 = arith.addf %263, %264 : vector<8x128xf32>
    %266 = math.tanh %265 : vector<8x128xf32>
    %267 = vector.extract_strided_slice %266 {offsets = [0, 0], sizes = [8, 32], strides = [1, 1]} : vector<8x128xf32> to vector<8x32xf32>
    %cst_98 = arith.constant 5.000000e-01 : f32
    %268 = vector.broadcast %cst_98 : f32 to vector<8x32xf32>
    %269 = arith.mulf %268, %267 : vector<8x32xf32>
    %cst_99 = arith.constant 5.000000e-01 : f32
    %270 = vector.broadcast %cst_99 : f32 to vector<8x32xf32>
    %271 = arith.addf %269, %270 : vector<8x32xf32>
    %272 = vector.extract_strided_slice %266 {offsets = [0, 32], sizes = [8, 32], strides = [1, 1]} : vector<8x128xf32> to vector<8x32xf32>
    %cst_100 = arith.constant 5.000000e-01 : f32
    %273 = vector.broadcast %cst_100 : f32 to vector<8x32xf32>
    %274 = arith.mulf %273, %272 : vector<8x32xf32>
    %cst_101 = arith.constant 5.000000e-01 : f32
    %275 = vector.broadcast %cst_101 : f32 to vector<8x32xf32>
    %276 = arith.addf %274, %275 : vector<8x32xf32>
    %277 = vector.extract_strided_slice %266 {offsets = [0, 64], sizes = [8, 32], strides = [1, 1]} : vector<8x128xf32> to vector<8x32xf32>
    %278 = vector.extract_strided_slice %266 {offsets = [0, 96], sizes = [8, 32], strides = [1, 1]} : vector<8x128xf32> to vector<8x32xf32>
    %cst_102 = arith.constant 5.000000e-01 : f32
    %279 = vector.broadcast %cst_102 : f32 to vector<8x32xf32>
    %280 = arith.mulf %279, %278 : vector<8x32xf32>
    %cst_103 = arith.constant 5.000000e-01 : f32
    %281 = vector.broadcast %cst_103 : f32 to vector<8x32xf32>
    %282 = arith.addf %280, %281 : vector<8x32xf32>
    %283 = arith.mulf %276, %254 : vector<8x32xf32>
    %284 = arith.mulf %271, %277 : vector<8x32xf32>
    %285 = arith.addf %283, %284 : vector<8x32xf32>
    %286 = math.tanh %285 : vector<8x32xf32>
    %287 = arith.mulf %282, %286 : vector<8x32xf32>
    %288 = arith.truncf %287 : vector<8x32xf32> to vector<8x32xbf16>
    %289 = arith.index_cast %261 : i32 to index
    %c0_104 = arith.constant 0 : index
    %290 = vector.load %arg13[%289, %c0_104] : memref<72x32xbf16, #tpu.memory_space<vmem>>, vector<8x32xbf16>
    tpu.vector_store %arg13[%289, %c0_104], %288 {strides = array<i32>} : memref<72x32xbf16, #tpu.memory_space<vmem>>, vector<8x32xbf16>,
    %c9_i32 = arith.constant 9 : i32
    %c0_105 = arith.constant 0 : index
    %c0_106 = arith.constant 0 : index
    %291 = vector.load %arg13[%c0_105, %c0_106] : memref<72x32xbf16, #tpu.memory_space<vmem>>, vector<72x32xbf16>
    %c0_107 = arith.constant 0 : index
    %c0_108 = arith.constant 0 : index
    %292 = vector.load %arg4[%c0_107, %c0_108] : memref<32x128xbf16, #tpu.memory_space<vmem>>, vector<32x128xbf16>
    %cst_109 = arith.constant dense<0.000000e+00> : vector<72x128xf32>
    %293 = tpu.matmul %291, %292, %cst_109 {dimension_numbers = #tpu.dot_dimension_numbers<[1], [0], [0], [1], [0, 0, 1, 1], [], []>} : vector<72x32xbf16>, vector<32x128xbf16>, vector<72x128xf32> -> vector<72x128xf32>
    %c0_110 = arith.constant 0 : index
    %c0_111 = arith.constant 0 : index
    %294 = vector.load %arg6[%c0_110, %c0_111] : memref<1x128xf32, #tpu.memory_space<vmem>>, vector<1x128xf32>
    %295 = vector.broadcast %294 : vector<1x128xf32> to vector<72x128xf32>
    %296 = arith.addf %293, %295 : vector<72x128xf32>
    %c0_112 = arith.constant 0 : index
    %c0_113 = arith.constant 0 : index
    %297 = vector.load %arg12[%c0_112, %c0_113] : memref<72x128xf32, #tpu.memory_space<vmem>>, vector<72x128xf32>
    tpu.vector_store %arg12[%c0_112, %c0_113], %296 {strides = array<i32>} : memref<72x128xf32, #tpu.memory_space<vmem>>, vector<72x128xf32>,
    %c0_114 = arith.constant 0 : index
    %c0_115 = arith.constant 0 : index
    %298 = vector.load %arg5[%c0_114, %c0_115] : memref<32x128xf32, #tpu.memory_space<vmem>>, vector<32x128xf32>
    %c1 = arith.constant 1 : index
    %c0_116 = arith.constant 0 : index
    %c0_117 = arith.constant 0 : index
    %299 = vector.load %arg9[%c1, %c0_116, %c0_117] : memref<2x8x32xf32, #tpu.memory_space<vmem>>, vector<1x8x32xf32>
    %300 = vector.shape_cast %299 : vector<1x8x32xf32> to vector<8x32xf32>
    %c1_118 = arith.constant 1 : index
    %c0_119 = arith.constant 0 : index
    %c0_120 = arith.constant 0 : index
    %301 = vector.load %arg10[%c1_118, %c0_119, %c0_120] : memref<2x8x32xf32, #tpu.memory_space<vmem>>, vector<1x8x32xf32>
    %302 = vector.shape_cast %301 : vector<1x8x32xf32> to vector<8x32xf32>
    %c0_i32_121 = arith.constant 0 : i32
    %c8_i32_122 = arith.constant 8 : i32
    %303 = arith.muli %c0_i32_121, %c8_i32_122 : i32
    %304 = tpu.assume_multiple %303, 8 : i32
    %305 = arith.index_cast %304 : i32 to index
    %c0_123 = arith.constant 0 : index
    %306 = vector.load %arg12[%305, %c0_123] : memref<72x128xf32, #tpu.memory_space<vmem>>, vector<8x128xf32>
    %cst_124 = arith.constant dense<0.000000e+00> : vector<8x128xf32>
    %307 = tpu.matmul %300, %298, %cst_124 {dimension_numbers = #tpu.dot_dimension_numbers<[1], [0], [0], [1], [0, 0, 1, 1], [], []>} : vector<8x32xf32>, vector<32x128xf32>, vector<8x128xf32> -> vector<8x128xf32>
    %308 = arith.addf %306, %307 : vector<8x128xf32>
    %309 = math.tanh %308 : vector<8x128xf32>
    %310 = vector.extract_strided_slice %309 {offsets = [0, 0], sizes = [8, 32], strides = [1, 1]} : vector<8x128xf32> to vector<8x32xf32>
    %cst_125 = arith.constant 5.000000e-01 : f32
    %311 = vector.broadcast %cst_125 : f32 to vector<8x32xf32>
    %312 = arith.mulf %311, %310 : vector<8x32xf32>
    %cst_126 = arith.constant 5.000000e-01 : f32
    %313 = vector.broadcast %cst_126 : f32 to vector<8x32xf32>
    %314 = arith.addf %312, %313 : vector<8x32xf32>
    %315 = vector.extract_strided_slice %309 {offsets = [0, 32], sizes = [8, 32], strides = [1, 1]} : vector<8x128xf32> to vector<8x32xf32>
    %cst_127 = arith.constant 5.000000e-01 : f32
    %316 = vector.broadcast %cst_127 : f32 to vector<8x32xf32>
    %317 = arith.mulf %316, %315 : vector<8x32xf32>
    %cst_128 = arith.constant 5.000000e-01 : f32
    %318 = vector.broadcast %cst_128 : f32 to vector<8x32xf32>
    %319 = arith.addf %317, %318 : vector<8x32xf32>
    %320 = vector.extract_strided_slice %309 {offsets = [0, 64], sizes = [8, 32], strides = [1, 1]} : vector<8x128xf32> to vector<8x32xf32>
    %321 = vector.extract_strided_slice %309 {offsets = [0, 96], sizes = [8, 32], strides = [1, 1]} : vector<8x128xf32> to vector<8x32xf32>
    %cst_129 = arith.constant 5.000000e-01 : f32
    %322 = vector.broadcast %cst_129 : f32 to vector<8x32xf32>
    %323 = arith.mulf %322, %321 : vector<8x32xf32>
    %cst_130 = arith.constant 5.000000e-01 : f32
    %324 = vector.broadcast %cst_130 : f32 to vector<8x32xf32>
    %325 = arith.addf %323, %324 : vector<8x32xf32>
    %326 = arith.mulf %319, %302 : vector<8x32xf32>
    %327 = arith.mulf %314, %320 : vector<8x32xf32>
    %328 = arith.addf %326, %327 : vector<8x32xf32>
    %329 = math.tanh %328 : vector<8x32xf32>
    %330 = arith.mulf %325, %329 : vector<8x32xf32>
    %c1_i32_131 = arith.constant 1 : i32
    %c8_i32_132 = arith.constant 8 : i32
    %331 = arith.muli %c1_i32_131, %c8_i32_132 : i32
    %332 = tpu.assume_multiple %331, 8 : i32
    %333 = arith.index_cast %332 : i32 to index
    %c0_133 = arith.constant 0 : index
    %334 = vector.load %arg12[%333, %c0_133] : memref<72x128xf32, #tpu.memory_space<vmem>>, vector<8x128xf32>
    %cst_134 = arith.constant dense<0.000000e+00> : vector<8x128xf32>
    %335 = tpu.matmul %330, %298, %cst_134 {dimension_numbers = #tpu.dot_dimension_numbers<[1], [0], [0], [1], [0, 0, 1, 1], [], []>} : vector<8x32xf32>, vector<32x128xf32>, vector<8x128xf32> -> vector<8x128xf32>
    %336 = arith.addf %334, %335 : vector<8x128xf32>
    %337 = math.tanh %336 : vector<8x128xf32>
    %338 = vector.extract_strided_slice %337 {offsets = [0, 0], sizes = [8, 32], strides = [1, 1]} : vector<8x128xf32> to vector<8x32xf32>
    %cst_135 = arith.constant 5.000000e-01 : f32
    %339 = vector.broadcast %cst_135 : f32 to vector<8x32xf32>
    %340 = arith.mulf %339, %338 : vector<8x32xf32>
    %cst_136 = arith.constant 5.000000e-01 : f32
    %341 = vector.broadcast %cst_136 : f32 to vector<8x32xf32>
    %342 = arith.addf %340, %341 : vector<8x32xf32>
    %343 = vector.extract_strided_slice %337 {offsets = [0, 32], sizes = [8, 32], strides = [1, 1]} : vector<8x128xf32> to vector<8x32xf32>
    %cst_137 = arith.constant 5.000000e-01 : f32
    %344 = vector.broadcast %cst_137 : f32 to vector<8x32xf32>
    %345 = arith.mulf %344, %343 : vector<8x32xf32>
    %cst_138 = arith.constant 5.000000e-01 : f32
    %346 = vector.broadcast %cst_138 : f32 to vector<8x32xf32>
    %347 = arith.addf %345, %346 : vector<8x32xf32>
    %348 = vector.extract_strided_slice %337 {offsets = [0, 64], sizes = [8, 32], strides = [1, 1]} : vector<8x128xf32> to vector<8x32xf32>
    %349 = vector.extract_strided_slice %337 {offsets = [0, 96], sizes = [8, 32], strides = [1, 1]} : vector<8x128xf32> to vector<8x32xf32>
    %cst_139 = arith.constant 5.000000e-01 : f32
    %350 = vector.broadcast %cst_139 : f32 to vector<8x32xf32>
    %351 = arith.mulf %350, %349 : vector<8x32xf32>
    %cst_140 = arith.constant 5.000000e-01 : f32
    %352 = vector.broadcast %cst_140 : f32 to vector<8x32xf32>
    %353 = arith.addf %351, %352 : vector<8x32xf32>
    %354 = arith.mulf %347, %328 : vector<8x32xf32>
    %355 = arith.mulf %342, %348 : vector<8x32xf32>
    %356 = arith.addf %354, %355 : vector<8x32xf32>
    %357 = math.tanh %356 : vector<8x32xf32>
    %358 = arith.mulf %353, %357 : vector<8x32xf32>
    %c2_i32_141 = arith.constant 2 : i32
    %c8_i32_142 = arith.constant 8 : i32
    %359 = arith.muli %c2_i32_141, %c8_i32_142 : i32
    %360 = tpu.assume_multiple %359, 8 : i32
    %361 = arith.index_cast %360 : i32 to index
    %c0_143 = arith.constant 0 : index
    %362 = vector.load %arg12[%361, %c0_143] : memref<72x128xf32, #tpu.memory_space<vmem>>, vector<8x128xf32>
    %cst_144 = arith.constant dense<0.000000e+00> : vector<8x128xf32>
    %363 = tpu.matmul %358, %298, %cst_144 {dimension_numbers = #tpu.dot_dimension_numbers<[1], [0], [0], [1], [0, 0, 1, 1], [], []>} : vector<8x32xf32>, vector<32x128xf32>, vector<8x128xf32> -> vector<8x128xf32>
    %364 = arith.addf %362, %363 : vector<8x128xf32>
    %365 = math.tanh %364 : vector<8x128xf32>
    %366 = vector.extract_strided_slice %365 {offsets = [0, 0], sizes = [8, 32], strides = [1, 1]} : vector<8x128xf32> to vector<8x32xf32>
    %cst_145 = arith.constant 5.000000e-01 : f32
    %367 = vector.broadcast %cst_145 : f32 to vector<8x32xf32>
    %368 = arith.mulf %367, %366 : vector<8x32xf32>
    %cst_146 = arith.constant 5.000000e-01 : f32
    %369 = vector.broadcast %cst_146 : f32 to vector<8x32xf32>
    %370 = arith.addf %368, %369 : vector<8x32xf32>
    %371 = vector.extract_strided_slice %365 {offsets = [0, 32], sizes = [8, 32], strides = [1, 1]} : vector<8x128xf32> to vector<8x32xf32>
    %cst_147 = arith.constant 5.000000e-01 : f32
    %372 = vector.broadcast %cst_147 : f32 to vector<8x32xf32>
    %373 = arith.mulf %372, %371 : vector<8x32xf32>
    %cst_148 = arith.constant 5.000000e-01 : f32
    %374 = vector.broadcast %cst_148 : f32 to vector<8x32xf32>
    %375 = arith.addf %373, %374 : vector<8x32xf32>
    %376 = vector.extract_strided_slice %365 {offsets = [0, 64], sizes = [8, 32], strides = [1, 1]} : vector<8x128xf32> to vector<8x32xf32>
    %377 = vector.extract_strided_slice %365 {offsets = [0, 96], sizes = [8, 32], strides = [1, 1]} : vector<8x128xf32> to vector<8x32xf32>
    %cst_149 = arith.constant 5.000000e-01 : f32
    %378 = vector.broadcast %cst_149 : f32 to vector<8x32xf32>
    %379 = arith.mulf %378, %377 : vector<8x32xf32>
    %cst_150 = arith.constant 5.000000e-01 : f32
    %380 = vector.broadcast %cst_150 : f32 to vector<8x32xf32>
    %381 = arith.addf %379, %380 : vector<8x32xf32>
    %382 = arith.mulf %375, %356 : vector<8x32xf32>
    %383 = arith.mulf %370, %376 : vector<8x32xf32>
    %384 = arith.addf %382, %383 : vector<8x32xf32>
    %385 = math.tanh %384 : vector<8x32xf32>
    %386 = arith.mulf %381, %385 : vector<8x32xf32>
    %c3_i32_151 = arith.constant 3 : i32
    %c8_i32_152 = arith.constant 8 : i32
    %387 = arith.muli %c3_i32_151, %c8_i32_152 : i32
    %388 = tpu.assume_multiple %387, 8 : i32
    %389 = arith.index_cast %388 : i32 to index
    %c0_153 = arith.constant 0 : index
    %390 = vector.load %arg12[%389, %c0_153] : memref<72x128xf32, #tpu.memory_space<vmem>>, vector<8x128xf32>
    %cst_154 = arith.constant dense<0.000000e+00> : vector<8x128xf32>
    %391 = tpu.matmul %386, %298, %cst_154 {dimension_numbers = #tpu.dot_dimension_numbers<[1], [0], [0], [1], [0, 0, 1, 1], [], []>} : vector<8x32xf32>, vector<32x128xf32>, vector<8x128xf32> -> vector<8x128xf32>
    %392 = arith.addf %390, %391 : vector<8x128xf32>
    %393 = math.tanh %392 : vector<8x128xf32>
    %394 = vector.extract_strided_slice %393 {offsets = [0, 0], sizes = [8, 32], strides = [1, 1]} : vector<8x128xf32> to vector<8x32xf32>
    %cst_155 = arith.constant 5.000000e-01 : f32
    %395 = vector.broadcast %cst_155 : f32 to vector<8x32xf32>
    %396 = arith.mulf %395, %394 : vector<8x32xf32>
    %cst_156 = arith.constant 5.000000e-01 : f32
    %397 = vector.broadcast %cst_156 : f32 to vector<8x32xf32>
    %398 = arith.addf %396, %397 : vector<8x32xf32>
    %399 = vector.extract_strided_slice %393 {offsets = [0, 32], sizes = [8, 32], strides = [1, 1]} : vector<8x128xf32> to vector<8x32xf32>
    %cst_157 = arith.constant 5.000000e-01 : f32
    %400 = vector.broadcast %cst_157 : f32 to vector<8x32xf32>
    %401 = arith.mulf %400, %399 : vector<8x32xf32>
    %cst_158 = arith.constant 5.000000e-01 : f32
    %402 = vector.broadcast %cst_158 : f32 to vector<8x32xf32>
    %403 = arith.addf %401, %402 : vector<8x32xf32>
    %404 = vector.extract_strided_slice %393 {offsets = [0, 64], sizes = [8, 32], strides = [1, 1]} : vector<8x128xf32> to vector<8x32xf32>
    %405 = vector.extract_strided_slice %393 {offsets = [0, 96], sizes = [8, 32], strides = [1, 1]} : vector<8x128xf32> to vector<8x32xf32>
    %cst_159 = arith.constant 5.000000e-01 : f32
    %406 = vector.broadcast %cst_159 : f32 to vector<8x32xf32>
    %407 = arith.mulf %406, %405 : vector<8x32xf32>
    %cst_160 = arith.constant 5.000000e-01 : f32
    %408 = vector.broadcast %cst_160 : f32 to vector<8x32xf32>
    %409 = arith.addf %407, %408 : vector<8x32xf32>
    %410 = arith.mulf %403, %384 : vector<8x32xf32>
    %411 = arith.mulf %398, %404 : vector<8x32xf32>
    %412 = arith.addf %410, %411 : vector<8x32xf32>
    %413 = math.tanh %412 : vector<8x32xf32>
    %414 = arith.mulf %409, %413 : vector<8x32xf32>
    %c4_i32_161 = arith.constant 4 : i32
    %c8_i32_162 = arith.constant 8 : i32
    %415 = arith.muli %c4_i32_161, %c8_i32_162 : i32
    %416 = tpu.assume_multiple %415, 8 : i32
    %417 = arith.index_cast %416 : i32 to index
    %c0_163 = arith.constant 0 : index
    %418 = vector.load %arg12[%417, %c0_163] : memref<72x128xf32, #tpu.memory_space<vmem>>, vector<8x128xf32>
    %cst_164 = arith.constant dense<0.000000e+00> : vector<8x128xf32>
    %419 = tpu.matmul %414, %298, %cst_164 {dimension_numbers = #tpu.dot_dimension_numbers<[1], [0], [0], [1], [0, 0, 1, 1], [], []>} : vector<8x32xf32>, vector<32x128xf32>, vector<8x128xf32> -> vector<8x128xf32>
    %420 = arith.addf %418, %419 : vector<8x128xf32>
    %421 = math.tanh %420 : vector<8x128xf32>
    %422 = vector.extract_strided_slice %421 {offsets = [0, 0], sizes = [8, 32], strides = [1, 1]} : vector<8x128xf32> to vector<8x32xf32>
    %cst_165 = arith.constant 5.000000e-01 : f32
    %423 = vector.broadcast %cst_165 : f32 to vector<8x32xf32>
    %424 = arith.mulf %423, %422 : vector<8x32xf32>
    %cst_166 = arith.constant 5.000000e-01 : f32
    %425 = vector.broadcast %cst_166 : f32 to vector<8x32xf32>
    %426 = arith.addf %424, %425 : vector<8x32xf32>
    %427 = vector.extract_strided_slice %421 {offsets = [0, 32], sizes = [8, 32], strides = [1, 1]} : vector<8x128xf32> to vector<8x32xf32>
    %cst_167 = arith.constant 5.000000e-01 : f32
    %428 = vector.broadcast %cst_167 : f32 to vector<8x32xf32>
    %429 = arith.mulf %428, %427 : vector<8x32xf32>
    %cst_168 = arith.constant 5.000000e-01 : f32
    %430 = vector.broadcast %cst_168 : f32 to vector<8x32xf32>
    %431 = arith.addf %429, %430 : vector<8x32xf32>
    %432 = vector.extract_strided_slice %421 {offsets = [0, 64], sizes = [8, 32], strides = [1, 1]} : vector<8x128xf32> to vector<8x32xf32>
    %433 = vector.extract_strided_slice %421 {offsets = [0, 96], sizes = [8, 32], strides = [1, 1]} : vector<8x128xf32> to vector<8x32xf32>
    %cst_169 = arith.constant 5.000000e-01 : f32
    %434 = vector.broadcast %cst_169 : f32 to vector<8x32xf32>
    %435 = arith.mulf %434, %433 : vector<8x32xf32>
    %cst_170 = arith.constant 5.000000e-01 : f32
    %436 = vector.broadcast %cst_170 : f32 to vector<8x32xf32>
    %437 = arith.addf %435, %436 : vector<8x32xf32>
    %438 = arith.mulf %431, %412 : vector<8x32xf32>
    %439 = arith.mulf %426, %432 : vector<8x32xf32>
    %440 = arith.addf %438, %439 : vector<8x32xf32>
    %441 = math.tanh %440 : vector<8x32xf32>
    %442 = arith.mulf %437, %441 : vector<8x32xf32>
    %c5_i32_171 = arith.constant 5 : i32
    %c8_i32_172 = arith.constant 8 : i32
    %443 = arith.muli %c5_i32_171, %c8_i32_172 : i32
    %444 = tpu.assume_multiple %443, 8 : i32
    %445 = arith.index_cast %444 : i32 to index
    %c0_173 = arith.constant 0 : index
    %446 = vector.load %arg12[%445, %c0_173] : memref<72x128xf32, #tpu.memory_space<vmem>>, vector<8x128xf32>
    %cst_174 = arith.constant dense<0.000000e+00> : vector<8x128xf32>
    %447 = tpu.matmul %442, %298, %cst_174 {dimension_numbers = #tpu.dot_dimension_numbers<[1], [0], [0], [1], [0, 0, 1, 1], [], []>} : vector<8x32xf32>, vector<32x128xf32>, vector<8x128xf32> -> vector<8x128xf32>
    %448 = arith.addf %446, %447 : vector<8x128xf32>
    %449 = math.tanh %448 : vector<8x128xf32>
    %450 = vector.extract_strided_slice %449 {offsets = [0, 0], sizes = [8, 32], strides = [1, 1]} : vector<8x128xf32> to vector<8x32xf32>
    %cst_175 = arith.constant 5.000000e-01 : f32
    %451 = vector.broadcast %cst_175 : f32 to vector<8x32xf32>
    %452 = arith.mulf %451, %450 : vector<8x32xf32>
    %cst_176 = arith.constant 5.000000e-01 : f32
    %453 = vector.broadcast %cst_176 : f32 to vector<8x32xf32>
    %454 = arith.addf %452, %453 : vector<8x32xf32>
    %455 = vector.extract_strided_slice %449 {offsets = [0, 32], sizes = [8, 32], strides = [1, 1]} : vector<8x128xf32> to vector<8x32xf32>
    %cst_177 = arith.constant 5.000000e-01 : f32
    %456 = vector.broadcast %cst_177 : f32 to vector<8x32xf32>
    %457 = arith.mulf %456, %455 : vector<8x32xf32>
    %cst_178 = arith.constant 5.000000e-01 : f32
    %458 = vector.broadcast %cst_178 : f32 to vector<8x32xf32>
    %459 = arith.addf %457, %458 : vector<8x32xf32>
    %460 = vector.extract_strided_slice %449 {offsets = [0, 64], sizes = [8, 32], strides = [1, 1]} : vector<8x128xf32> to vector<8x32xf32>
    %461 = vector.extract_strided_slice %449 {offsets = [0, 96], sizes = [8, 32], strides = [1, 1]} : vector<8x128xf32> to vector<8x32xf32>
    %cst_179 = arith.constant 5.000000e-01 : f32
    %462 = vector.broadcast %cst_179 : f32 to vector<8x32xf32>
    %463 = arith.mulf %462, %461 : vector<8x32xf32>
    %cst_180 = arith.constant 5.000000e-01 : f32
    %464 = vector.broadcast %cst_180 : f32 to vector<8x32xf32>
    %465 = arith.addf %463, %464 : vector<8x32xf32>
    %466 = arith.mulf %459, %440 : vector<8x32xf32>
    %467 = arith.mulf %454, %460 : vector<8x32xf32>
    %468 = arith.addf %466, %467 : vector<8x32xf32>
    %469 = math.tanh %468 : vector<8x32xf32>
    %470 = arith.mulf %465, %469 : vector<8x32xf32>
    %c6_i32_181 = arith.constant 6 : i32
    %c8_i32_182 = arith.constant 8 : i32
    %471 = arith.muli %c6_i32_181, %c8_i32_182 : i32
    %472 = tpu.assume_multiple %471, 8 : i32
    %473 = arith.index_cast %472 : i32 to index
    %c0_183 = arith.constant 0 : index
    %474 = vector.load %arg12[%473, %c0_183] : memref<72x128xf32, #tpu.memory_space<vmem>>, vector<8x128xf32>
    %cst_184 = arith.constant dense<0.000000e+00> : vector<8x128xf32>
    %475 = tpu.matmul %470, %298, %cst_184 {dimension_numbers = #tpu.dot_dimension_numbers<[1], [0], [0], [1], [0, 0, 1, 1], [], []>} : vector<8x32xf32>, vector<32x128xf32>, vector<8x128xf32> -> vector<8x128xf32>
    %476 = arith.addf %474, %475 : vector<8x128xf32>
    %477 = math.tanh %476 : vector<8x128xf32>
    %478 = vector.extract_strided_slice %477 {offsets = [0, 0], sizes = [8, 32], strides = [1, 1]} : vector<8x128xf32> to vector<8x32xf32>
    %cst_185 = arith.constant 5.000000e-01 : f32
    %479 = vector.broadcast %cst_185 : f32 to vector<8x32xf32>
    %480 = arith.mulf %479, %478 : vector<8x32xf32>
    %cst_186 = arith.constant 5.000000e-01 : f32
    %481 = vector.broadcast %cst_186 : f32 to vector<8x32xf32>
    %482 = arith.addf %480, %481 : vector<8x32xf32>
    %483 = vector.extract_strided_slice %477 {offsets = [0, 32], sizes = [8, 32], strides = [1, 1]} : vector<8x128xf32> to vector<8x32xf32>
    %cst_187 = arith.constant 5.000000e-01 : f32
    %484 = vector.broadcast %cst_187 : f32 to vector<8x32xf32>
    %485 = arith.mulf %484, %483 : vector<8x32xf32>
    %cst_188 = arith.constant 5.000000e-01 : f32
    %486 = vector.broadcast %cst_188 : f32 to vector<8x32xf32>
    %487 = arith.addf %485, %486 : vector<8x32xf32>
    %488 = vector.extract_strided_slice %477 {offsets = [0, 64], sizes = [8, 32], strides = [1, 1]} : vector<8x128xf32> to vector<8x32xf32>
    %489 = vector.extract_strided_slice %477 {offsets = [0, 96], sizes = [8, 32], strides = [1, 1]} : vector<8x128xf32> to vector<8x32xf32>
    %cst_189 = arith.constant 5.000000e-01 : f32
    %490 = vector.broadcast %cst_189 : f32 to vector<8x32xf32>
    %491 = arith.mulf %490, %489 : vector<8x32xf32>
    %cst_190 = arith.constant 5.000000e-01 : f32
    %492 = vector.broadcast %cst_190 : f32 to vector<8x32xf32>
    %493 = arith.addf %491, %492 : vector<8x32xf32>
    %494 = arith.mulf %487, %468 : vector<8x32xf32>
    %495 = arith.mulf %482, %488 : vector<8x32xf32>
    %496 = arith.addf %494, %495 : vector<8x32xf32>
    %497 = math.tanh %496 : vector<8x32xf32>
    %498 = arith.mulf %493, %497 : vector<8x32xf32>
    %c7_i32_191 = arith.constant 7 : i32
    %c8_i32_192 = arith.constant 8 : i32
    %499 = arith.muli %c7_i32_191, %c8_i32_192 : i32
    %500 = tpu.assume_multiple %499, 8 : i32
    %501 = arith.index_cast %500 : i32 to index
    %c0_193 = arith.constant 0 : index
    %502 = vector.load %arg12[%501, %c0_193] : memref<72x128xf32, #tpu.memory_space<vmem>>, vector<8x128xf32>
    %cst_194 = arith.constant dense<0.000000e+00> : vector<8x128xf32>
    %503 = tpu.matmul %498, %298, %cst_194 {dimension_numbers = #tpu.dot_dimension_numbers<[1], [0], [0], [1], [0, 0, 1, 1], [], []>} : vector<8x32xf32>, vector<32x128xf32>, vector<8x128xf32> -> vector<8x128xf32>
    %504 = arith.addf %502, %503 : vector<8x128xf32>
    %505 = math.tanh %504 : vector<8x128xf32>
    %506 = vector.extract_strided_slice %505 {offsets = [0, 0], sizes = [8, 32], strides = [1, 1]} : vector<8x128xf32> to vector<8x32xf32>
    %cst_195 = arith.constant 5.000000e-01 : f32
    %507 = vector.broadcast %cst_195 : f32 to vector<8x32xf32>
    %508 = arith.mulf %507, %506 : vector<8x32xf32>
    %cst_196 = arith.constant 5.000000e-01 : f32
    %509 = vector.broadcast %cst_196 : f32 to vector<8x32xf32>
    %510 = arith.addf %508, %509 : vector<8x32xf32>
    %511 = vector.extract_strided_slice %505 {offsets = [0, 32], sizes = [8, 32], strides = [1, 1]} : vector<8x128xf32> to vector<8x32xf32>
    %cst_197 = arith.constant 5.000000e-01 : f32
    %512 = vector.broadcast %cst_197 : f32 to vector<8x32xf32>
    %513 = arith.mulf %512, %511 : vector<8x32xf32>
    %cst_198 = arith.constant 5.000000e-01 : f32
    %514 = vector.broadcast %cst_198 : f32 to vector<8x32xf32>
    %515 = arith.addf %513, %514 : vector<8x32xf32>
    %516 = vector.extract_strided_slice %505 {offsets = [0, 64], sizes = [8, 32], strides = [1, 1]} : vector<8x128xf32> to vector<8x32xf32>
    %517 = vector.extract_strided_slice %505 {offsets = [0, 96], sizes = [8, 32], strides = [1, 1]} : vector<8x128xf32> to vector<8x32xf32>
    %cst_199 = arith.constant 5.000000e-01 : f32
    %518 = vector.broadcast %cst_199 : f32 to vector<8x32xf32>
    %519 = arith.mulf %518, %517 : vector<8x32xf32>
    %cst_200 = arith.constant 5.000000e-01 : f32
    %520 = vector.broadcast %cst_200 : f32 to vector<8x32xf32>
    %521 = arith.addf %519, %520 : vector<8x32xf32>
    %522 = arith.mulf %515, %496 : vector<8x32xf32>
    %523 = arith.mulf %510, %516 : vector<8x32xf32>
    %524 = arith.addf %522, %523 : vector<8x32xf32>
    %525 = math.tanh %524 : vector<8x32xf32>
    %526 = arith.mulf %521, %525 : vector<8x32xf32>
    %c8_i32_201 = arith.constant 8 : i32
    %c8_i32_202 = arith.constant 8 : i32
    %527 = arith.muli %c8_i32_201, %c8_i32_202 : i32
    %528 = tpu.assume_multiple %527, 8 : i32
    %529 = arith.index_cast %528 : i32 to index
    %c0_203 = arith.constant 0 : index
    %530 = vector.load %arg12[%529, %c0_203] : memref<72x128xf32, #tpu.memory_space<vmem>>, vector<8x128xf32>
    %cst_204 = arith.constant dense<0.000000e+00> : vector<8x128xf32>
    %531 = tpu.matmul %526, %298, %cst_204 {dimension_numbers = #tpu.dot_dimension_numbers<[1], [0], [0], [1], [0, 0, 1, 1], [], []>} : vector<8x32xf32>, vector<32x128xf32>, vector<8x128xf32> -> vector<8x128xf32>
    %532 = arith.addf %530, %531 : vector<8x128xf32>
    %533 = math.tanh %532 : vector<8x128xf32>
    %534 = vector.extract_strided_slice %533 {offsets = [0, 0], sizes = [8, 32], strides = [1, 1]} : vector<8x128xf32> to vector<8x32xf32>
    %cst_205 = arith.constant 5.000000e-01 : f32
    %535 = vector.broadcast %cst_205 : f32 to vector<8x32xf32>
    %536 = arith.mulf %535, %534 : vector<8x32xf32>
    %cst_206 = arith.constant 5.000000e-01 : f32
    %537 = vector.broadcast %cst_206 : f32 to vector<8x32xf32>
    %538 = arith.addf %536, %537 : vector<8x32xf32>
    %539 = vector.extract_strided_slice %533 {offsets = [0, 32], sizes = [8, 32], strides = [1, 1]} : vector<8x128xf32> to vector<8x32xf32>
    %cst_207 = arith.constant 5.000000e-01 : f32
    %540 = vector.broadcast %cst_207 : f32 to vector<8x32xf32>
    %541 = arith.mulf %540, %539 : vector<8x32xf32>
    %cst_208 = arith.constant 5.000000e-01 : f32
    %542 = vector.broadcast %cst_208 : f32 to vector<8x32xf32>
    %543 = arith.addf %541, %542 : vector<8x32xf32>
    %544 = vector.extract_strided_slice %533 {offsets = [0, 64], sizes = [8, 32], strides = [1, 1]} : vector<8x128xf32> to vector<8x32xf32>
    %545 = vector.extract_strided_slice %533 {offsets = [0, 96], sizes = [8, 32], strides = [1, 1]} : vector<8x128xf32> to vector<8x32xf32>
    %cst_209 = arith.constant 5.000000e-01 : f32
    %546 = vector.broadcast %cst_209 : f32 to vector<8x32xf32>
    %547 = arith.mulf %546, %545 : vector<8x32xf32>
    %cst_210 = arith.constant 5.000000e-01 : f32
    %548 = vector.broadcast %cst_210 : f32 to vector<8x32xf32>
    %549 = arith.addf %547, %548 : vector<8x32xf32>
    %550 = arith.mulf %543, %524 : vector<8x32xf32>
    %551 = arith.mulf %538, %544 : vector<8x32xf32>
    %552 = arith.addf %550, %551 : vector<8x32xf32>
    %553 = math.tanh %552 : vector<8x32xf32>
    %554 = arith.mulf %549, %553 : vector<8x32xf32>
    %c9_i32_211 = arith.constant 9 : i32
    %c0_212 = arith.constant 0 : index
    %c0_213 = arith.constant 0 : index
    %555 = vector.load %arg7[%c0_212, %c0_213] : memref<32x128xf32, #tpu.memory_space<vmem>>, vector<32x128xf32>
    %cst_214 = arith.constant dense<0.000000e+00> : vector<8x128xf32>
    %556 = tpu.matmul %554, %555, %cst_214 {dimension_numbers = #tpu.dot_dimension_numbers<[1], [0], [0], [1], [0, 0, 1, 1], [], []>} : vector<8x32xf32>, vector<32x128xf32>, vector<8x128xf32> -> vector<8x128xf32>
    %c0_215 = arith.constant 0 : index
    %c0_216 = arith.constant 0 : index
    %557 = vector.load %arg8[%c0_215, %c0_216] : memref<1x128xf32, #tpu.memory_space<vmem>>, vector<1x128xf32>
    %558 = vector.broadcast %557 : vector<1x128xf32> to vector<8x128xf32>
    %559 = arith.addf %556, %558 : vector<8x128xf32>
    %c0_217 = arith.constant 0 : index
    %c0_218 = arith.constant 0 : index
    %560 = vector.load %arg11[%c0_217, %c0_218] : memref<8x128xf32, #tpu.memory_space<vmem>>, vector<8x128xf32>
    tpu.vector_store %arg11[%c0_217, %c0_218], %559 {strides = array<i32>} : memref<8x128xf32, #tpu.memory_space<vmem>>, vector<8x128xf32>,
    return
  }
}

</mosaic_0001>

<llo_original>
// kernel: rnn_forward.1
$region0: #{rnn_forward.1}
  #allocation0 [shape = 'u32[]', space=smem, size = 0x4, offset = 0x4, fixed_abs, tag = 'smem constant byte address 0x4 - core index']
  #allocation1 [shape = 'u32[144,128]{1,0:T(1,128)}', space=vmem, size = 0x12000, scoped, tag = 'internal scratch']
  #allocation2 [shape = 'f32[72,128]{1,0:T(8,128)}', space=vmem, size = 0x9000, scoped, tag = 'scratch operand']
  #allocation3 [shape = 'bf16[72,32]{1,0:T(8,128)(2,1)}', space=vmem, size = 0x4800, scoped, tag = 'scratch operand']
  %s0 = inlined_call_operand.vmem [shape: bf16[72,32], index: 0, kind: input, shape index: {}]
  %s1 = inlined_call_operand.vmem [shape: bf16[32,128], index: 1, kind: input, shape index: {}]
  %s2 = inlined_call_operand.vmem [shape: f32[32,128], index: 2, kind: input, shape index: {}]
  %s3 = inlined_call_operand.vmem [shape: f32[1,128], index: 3, kind: input, shape index: {}]
  %s4 = inlined_call_operand.vmem [shape: bf16[32,128], index: 4, kind: input, shape index: {}]
  %s5 = inlined_call_operand.vmem [shape: f32[32,128], index: 5, kind: input, shape index: {}]
  %s6 = inlined_call_operand.vmem [shape: f32[1,128], index: 6, kind: input, shape index: {}]
  %s7 = inlined_call_operand.vmem [shape: f32[32,128], index: 7, kind: input, shape index: {}]
  %s8 = inlined_call_operand.vmem [shape: f32[1,128], index: 8, kind: input, shape index: {}]
  %s9 = inlined_call_operand.vmem [shape: f32[2,8,32], index: 9, kind: input, shape index: {}]
  %s10 = inlined_call_operand.vmem [shape: f32[2,8,32], index: 10, kind: input, shape index: {}]
  %s11 = inlined_call_operand.vmem [shape: f32[8,128], index: 11, kind: output, shape index: {}]
  %s12 = sld [smem:[#allocation0]]
  $region54: #{rnn_forward.1} parent=0
    _
  %s14 = ssub.s32 1, %s12
  %s15 = scalar_select 0, %s14, %s12
  // Predicated region
  $region2: #{rnn_forward.1} parent=0 // pred_check
    _
  $region3: #{rnn_forward.1} parent=0 // pred_check_branch
    %17 = sbr.rel (0) target = $region5
  $region4: #{rnn_forward.1} parent=0 // pred_region
    _
  $region5: #{rnn_forward.1} parent=0 // pred_fallthru
    _
  // Predicated region
  $region6: #{rnn_forward.1} parent=0 // pred_check
    _
  $region7: #{rnn_forward.1} parent=0 // pred_check_branch
    %19 = sbr.rel (0) target = $region9
  $region8: #{rnn_forward.1} parent=0 // pred_region
    _
  $region9: #{rnn_forward.1} parent=0 // pred_fallthru
    _
  // Predicated region
  $region10: #{rnn_forward.1} parent=0 // pred_check
    _
  $region11: #{rnn_forward.1} parent=0 // pred_check_branch
    %21 = sbr.rel (0) target = $region13
  $region12: #{rnn_forward.1} parent=0 // pred_region
    _
  $region13: #{rnn_forward.1} parent=0 // pred_fallthru
    _
  // Predicated region
  $region14: #{rnn_forward.1} parent=0 // pred_check
    _
  $region15: #{rnn_forward.1} parent=0 // pred_check_branch
    %23 = sbr.rel (0) target = $region17
  $region16: #{rnn_forward.1} parent=0 // pred_region
    _
  $region17: #{rnn_forward.1} parent=0 // pred_fallthru
    _
  // Predicated region
  $region18: #{rnn_forward.1} parent=0 // pred_check
    _
  $region19: #{rnn_forward.1} parent=0 // pred_check_branch
    %25 = sbr.rel (0) target = $region21
  $region20: #{rnn_forward.1} parent=0 // pred_region
    _
  $region21: #{rnn_forward.1} parent=0 // pred_fallthru
    _
  // Predicated region
  $region22: #{rnn_forward.1} parent=0 // pred_check
    _
  $region23: #{rnn_forward.1} parent=0 // pred_check_branch
    %27 = sbr.rel (0) target = $region25
  $region24: #{rnn_forward.1} parent=0 // pred_region
    _
  $region25: #{rnn_forward.1} parent=0 // pred_fallthru
    _
  // Predicated region
  $region26: #{rnn_forward.1} parent=0 // pred_check
    _
  $region27: #{rnn_forward.1} parent=0 // pred_check_branch
    %29 = sbr.rel (0) target = $region29
  $region28: #{rnn_forward.1} parent=0 // pred_region
    _
  $region29: #{rnn_forward.1} parent=0 // pred_fallthru
    _
  // Predicated region
  $region30: #{rnn_forward.1} parent=0 // pred_check
    _
  $region31: #{rnn_forward.1} parent=0 // pred_check_branch
    %31 = sbr.rel (0) target = $region33
  $region32: #{rnn_forward.1} parent=0 // pred_region
    _
  $region33: #{rnn_forward.1} parent=0 // pred_fallthru
    _
  // Predicated region
  $region34: #{rnn_forward.1} parent=0 // pred_check
    _
  $region35: #{rnn_forward.1} parent=0 // pred_check_branch
    %33 = sbr.rel (0) target = $region37
  $region36: #{rnn_forward.1} parent=0 // pred_region
    _
  $region37: #{rnn_forward.1} parent=0 // pred_fallthru
    _
  // Predicated region
  $region38: #{rnn_forward.1} parent=0 // pred_check
    _
  $region39: #{rnn_forward.1} parent=0 // pred_check_branch
    %35 = sbr.rel (0) target = $region41
  $region40: #{rnn_forward.1} parent=0 // pred_region
    _
  $region41: #{rnn_forward.1} parent=0 // pred_fallthru
    _
  // Predicated region
  $region42: #{rnn_forward.1} parent=0 // pred_check
    _
  $region43: #{rnn_forward.1} parent=0 // pred_check_branch
    %37 = sbr.rel (0) target = $region45
  $region44: #{rnn_forward.1} parent=0 // pred_region
    _
  $region45: #{rnn_forward.1} parent=0 // pred_fallthru
    _
  %v39 = vld [vmem:[%s0] sm:$0xf]
  %v40 = vld [vmem:[%s0 + $0x4] sm:$0xf]
  %v41 = vld [vmem:[%s0 + $0x8] sm:$0xf]
  %v42 = vld [vmem:[%s0 + $0xc] sm:$0xf]
  %v43 = vld [vmem:[%s0 + $0x10] sm:$0xf]
  %v44 = vld [vmem:[%s0 + $0x14] sm:$0xf]
  %v45 = vld [vmem:[%s0 + $0x18] sm:$0xf]
  %v46 = vld [vmem:[%s0 + $0x1c] sm:$0xf]
  %v47 = vld [vmem:[%s0 + $0x20] sm:$0xf]
  %v48 = vld [vmem:[%s1] sm:$0xf]
  %v49 = vld [vmem:[%s1 + $0x4] sm:$0xf]
  %v50 = vld [vmem:[%s1 + $0x8] sm:$0xf]
  %v51 = vld [vmem:[%s1 + $0xc] sm:$0xf]
  %v52 = vld [vmem:[%s3] sm:$0x1]
  %v54 = vlaneseq
  %v55 = vshrl.u32 %v54, 7
  %v56 = vsub.s32 0, %v55
  %v57 = vrot.slane %v52, %v56
  %v68 = vunpack.c.l.b16 %v39
  %v69 = vunpack.c.l.b16 %v40
  %v70 = vunpack.c.l.b16 %v41
  %v71 = vunpack.c.l.b16 %v42
  %v72 = vunpack.c.l.b16 %v43
  %v73 = vunpack.c.l.b16 %v44
  %v74 = vunpack.c.l.b16 %v45
  %v75 = vunpack.c.l.b16 %v46
  %v76 = vunpack.c.l.b16 %v47
  %v77 = vpack.c.b16 %v69, %v68
  %v78 = vpack.c.b16 %v71, %v70
  %v79 = vpack.c.b16 %v73, %v72
  %v80 = vpack.c.b16 %v75, %v74
  %v81 = vpack.c.b16 %v76, %v76
  %v86 = vunpack.c.l.b16 %v48
  %v87 = vunpack.c.l.b16 %v49
  %v88 = vunpack.c.l.b16 %v50
  %v89 = vunpack.c.l.b16 %v51
  %v90 = vpack.c.b16 %v87, %v86
  %v91 = vpack.c.b16 %v89, %v88
  %vm94 = vcmask 261120
  %v96 = vsel %vm94, %v77, 0
  %v99 = vsel %vm94, %v78, 0
  %v102 = vsel %vm94, %v79, 0
  %v105 = vsel %vm94, %v80, 0
  %v108 = vsel %vm94, %v81, 0
  %110 = vmatprep.subr.bf16.mxu0 0
  %111 = vmatpush1.bf16.msra.mxu0 0
  %112 = vmatprep.subr.bf16.mxu0 0
  %113 = vmatpush1.bf16.msra.mxu0 0
  %114 = vmatprep.subr.bf16.mxu0 0
  %115 = vmatpush1.bf16.msra.mxu0 0
  %116 = vmatprep.subr.bf16.mxu0 0
  %117 = vmatpush1.bf16.msra.mxu0 0
  %118 = vmatprep.subr.bf16.mxu0 0
  %119 = vmatpush1.bf16.msra.mxu0 0
  %120 = vmatprep.subr.bf16.mxu0 0
  %121 = vmatpush1.bf16.msra.mxu0 0
  %122 = vmatprep.subr.bf16.mxu0 0
  %123 = vmatpush1.bf16.msra.mxu0 %v91
  %124 = vmatprep.subr.bf16.mxu0 0
  %125 = vmatpush1.bf16.msra.mxu0 %v90
  %126 = vmatprep.subr.bf16.mxu0 0
  %127 = vmatpush2.bf16.msra.mxu0 0
  %128 = vmatprep.subr.bf16.mxu0 0
  %129 = vmatpush2.bf16.msra.mxu0 0
  %130 = vmatprep.subr.bf16.mxu0 0
  %131 = vmatpush2.bf16.msra.mxu0 0
  %132 = vmatprep.subr.bf16.mxu0 0
  %133 = vmatpush2.bf16.msra.mxu0 0
  %134 = vmatprep.subr.bf16.mxu0 0
  %135 = vmatpush2.bf16.msra.mxu0 0
  %136 = vmatprep.subr.bf16.mxu0 0
  %137 = vmatpush2.bf16.msra.mxu0 0
  %138 = vmatprep.subr.bf16.mxu0 0
  %139 = vmatpush2.bf16.msra.mxu0 0
  %140 = vmatprep.subr.bf16.mxu0 0
  %141 = vmatpush2.bf16.msra.mxu0 0
  %142 = vmatprep.mubr.bf16.mxu0 0
  %143 = vmatmul.mubr.bf16.gmra.mxu0 %v96
  %v144 = vpop.f32.mrf.mxu0
  %v145 = vadd.f32 %v57, %v144
  %v146 = vpop.f32.mrf.mxu0
  %v147 = vpop.f32.mrf.mxu0
  %v148 = vadd.f32 %v57, %v147
  %v149 = vpop.f32.mrf.mxu0
  %150 = vmatprep.mubr.bf16.mxu0 0
  %151 = vmatmul.mubr.bf16.gmra.mxu0 %v99
  %v152 = vpop.f32.mrf.mxu0
  %v153 = vadd.f32 %v57, %v152
  %v154 = vpop.f32.mrf.mxu0
  %v155 = vpop.f32.mrf.mxu0
  %v156 = vadd.f32 %v57, %v155
  %v157 = vpop.f32.mrf.mxu0
  %158 = vmatprep.mubr.bf16.mxu0 0
  %159 = vmatmul.mubr.bf16.gmra.mxu0 %v102
  %v160 = vpop.f32.mrf.mxu0
  %v161 = vadd.f32 %v57, %v160
  %v162 = vpop.f32.mrf.mxu0
  %v163 = vpop.f32.mrf.mxu0
  %v164 = vadd.f32 %v57, %v163
  %v165 = vpop.f32.mrf.mxu0
  %166 = vmatprep.mubr.bf16.mxu0 0
  %167 = vmatmul.mubr.bf16.gmra.mxu0 %v105
  %v168 = vpop.f32.mrf.mxu0
  %v169 = vadd.f32 %v57, %v168
  %v170 = vpop.f32.mrf.mxu0
  %v171 = vpop.f32.mrf.mxu0
  %v172 = vadd.f32 %v57, %v171
  %v173 = vpop.f32.mrf.mxu0
  %174 = vmatprep.mubr.bf16.mxu0 0
  %175 = vmatmul.mubr.bf16.gmra.mxu0 %v108
  %v176 = vpop.f32.mrf.mxu0
  %v177 = vadd.f32 %v57, %v176
  %v178 = vpop.f32.mrf.mxu0
  %v179 = vpop.f32.mrf.mxu0
  %v180 = vpop.f32.mrf.mxu0
  %181 = vdwg.mxu0
  %182 = vst [vmem:[#allocation2] sm:$0xff] %v145
  %183 = vst [vmem:[#allocation2 + $0x8] sm:$0xff] %v148
  %184 = vst [vmem:[#allocation2 + $0x10] sm:$0xff] %v153
  %185 = vst [vmem:[#allocation2 + $0x18] sm:$0xff] %v156
  %186 = vst [vmem:[#allocation2 + $0x20] sm:$0xff] %v161
  %187 = vst [vmem:[#allocation2 + $0x28] sm:$0xff] %v164
  %188 = vst [vmem:[#allocation2 + $0x30] sm:$0xff] %v169
  %189 = vst [vmem:[#allocation2 + $0x38] sm:$0xff] %v172
  %190 = vst [vmem:[#allocation2 + $0x40] sm:$0xff] %v177
  %v191 = vld [vmem:[%s2] sm:$0xff]
  %v192 = vld [vmem:[%s2 + $0x8] sm:$0xff]
  %v193 = vld [vmem:[%s2 + $0x10] sm:$0xff]
  %v194 = vld [vmem:[%s2 + $0x18] sm:$0xff]
  %v195 = vld [vmem:[%s9] sm:$0xff]
  %v196 = vld [vmem:[%s10] sm:$0xff]
  %v197 = vld [vmem:[#allocation2] sm:$0xff]
  %v199 = vsel %vm94, %v195, 0
  %201 = vmatprep.subr.mxu0 0.0
  %202 = vmatpush1.msra.mxu0 0.0
  %203 = vmatprep.subr.mxu0 0.0
  %204 = vmatpush1.msra.mxu0 0.0
  %205 = vmatprep.subr.mxu0 0.0
  %206 = vmatpush1.msra.mxu0 0.0
  %207 = vmatprep.subr.mxu0 0.0
  %208 = vmatpush1.msra.mxu0 0.0
  %209 = vmatprep.subr.mxu0 0.0
  %210 = vmatpush1.msra.mxu0 0.0
  %211 = vmatprep.subr.mxu0 0.0
  %212 = vmatpush1.msra.mxu0 0.0
  %213 = vmatprep.subr.mxu0 0.0
  %214 = vmatpush1.msra.mxu0 0.0
  %215 = vmatprep.subr.mxu0 0.0
  %216 = vmatpush1.msra.mxu0 0.0
  %217 = vmatprep.subr.mxu0 0.0
  %218 = vmatpush1.msra.mxu0 0.0
  %219 = vmatprep.subr.mxu0 0.0
  %220 = vmatpush1.msra.mxu0 0.0
  %221 = vmatprep.subr.mxu0 0.0
  %222 = vmatpush1.msra.mxu0 0.0
  %223 = vmatprep.subr.mxu0 0.0
  %224 = vmatpush1.msra.mxu0 0.0
  %225 = vmatprep.subr.mxu0 0.0
  %226 = vmatpush1.msra.mxu0 %v194
  %227 = vmatprep.subr.mxu0 0.0
  %228 = vmatpush1.msra.mxu0 %v193
  %229 = vmatprep.subr.mxu0 0.0
  %230 = vmatpush1.msra.mxu0 %v192
  %231 = vmatprep.subr.mxu0 0.0
  %232 = vmatpush1.msra.mxu0 %v191
  %233 = vmatprep.subr.mxu0 0.0
  %234 = vmatpush2.msra.mxu0 0.0
  %235 = vmatprep.subr.mxu0 0.0
  %236 = vmatpush2.msra.mxu0 0.0
  %237 = vmatprep.subr.mxu0 0.0
  %238 = vmatpush2.msra.mxu0 0.0
  %239 = vmatprep.subr.mxu0 0.0
  %240 = vmatpush2.msra.mxu0 0.0
  %241 = vmatprep.subr.mxu0 0.0
  %242 = vmatpush2.msra.mxu0 0.0
  %243 = vmatprep.subr.mxu0 0.0
  %244 = vmatpush2.msra.mxu0 0.0
  %245 = vmatprep.subr.mxu0 0.0
  %246 = vmatpush2.msra.mxu0 0.0
  %247 = vmatprep.subr.mxu0 0.0
  %248 = vmatpush2.msra.mxu0 0.0
  %249 = vmatprep.subr.mxu0 0.0
  %250 = vmatpush2.msra.mxu0 0.0
  %251 = vmatprep.subr.mxu0 0.0
  %252 = vmatpush2.msra.mxu0 0.0
  %253 = vmatprep.subr.mxu0 0.0
  %254 = vmatpush2.msra.mxu0 0.0
  %255 = vmatprep.subr.mxu0 0.0
  %256 = vmatpush2.msra.mxu0 0.0
  %257 = vmatprep.subr.mxu0 0.0
  %258 = vmatpush2.msra.mxu0 0.0
  %259 = vmatprep.subr.mxu0 0.0
  %260 = vmatpush2.msra.mxu0 0.0
  %261 = vmatprep.subr.mxu0 0.0
  %262 = vmatpush2.msra.mxu0 0.0
  %263 = vmatprep.subr.mxu0 0.0
  %264 = vmatpush2.msra.mxu0 0.0
  %265 = vmatprep.mubr.f32.mxu0 0.0
  %266 = vmatmul.mubr.f32.gmra.mxu0 %v199
  %v267 = vpop.f32.mrf.mxu0
  %v268 = vadd.f32 0.0, %v267
  %v269 = vpop.f32.mrf.mxu0
  %270 = vdwg.mxu0
  %v271 = vadd.f32 %v197, %v268
  %v272 = vtanh.pop %v271
  %v273 = vmul.f32 %v272, 0.5
  %v274 = vadd.f32 %v273, 0.5
  %276 = vrot.lane.b32.xlu0 %v196, 32
  %v277 = vpop.permute.xlu0 %276
  %v279 = vmul.f32 %v274, %v277
  %281 = vrot.lane.b32.xlu0 %v272, 64
  %v282 = vpop.permute.xlu0 %281
  %v284 = vmul.f32 %v274, %v282
  %286 = vrot.lane.b32.xlu0 %v284, 32
  %v287 = vpop.permute.xlu0 %286
  %v289 = vadd.f32 %v279, %v287
  %v290 = vtanh.pop %v289
  %292 = vrot.lane.b32.xlu0 %v290, 64
  %v293 = vpop.permute.xlu0 %292
  %v295 = vmul.f32 %v274, %v293
  %v296 = vpack.c.bf16 %v295, %v295
  %v298 = vunpack.c.l.b16 %v296
  %v299 = vpack.c.b16 %v298, %v298
  %300 = vrot.lane.b32.xlu0 %v299, 32
  %v301 = vpop.permute.xlu0 %300
  %vm303 = vcmask 257024
  %304 = vst.msk [vmem:[#allocation3] sm:$0xf] %vm303, %v301
  %s305 = scalar_lea.vmem [#allocation2], 8
  %v306 = vld [vmem:[%s305] sm:$0xff]
  %308 = vrot.lane.b32.xlu0 %v295, 32
  %v309 = vpop.permute.xlu0 %308
  %v310 = vsel %vm94, %v309, 0
  %312 = vmatprep.subr.mxu0 0.0
  %313 = vmatpush1.msra.mxu0 0.0
  %314 = vmatprep.subr.mxu0 0.0
  %315 = vmatpush1.msra.mxu0 0.0
  %316 = vmatprep.subr.mxu0 0.0
  %317 = vmatpush1.msra.mxu0 0.0
  %318 = vmatprep.subr.mxu0 0.0
  %319 = vmatpush1.msra.mxu0 0.0
  %320 = vmatprep.subr.mxu0 0.0
  %321 = vmatpush1.msra.mxu0 0.0
  %322 = vmatprep.subr.mxu0 0.0
  %323 = vmatpush1.msra.mxu0 0.0
  %324 = vmatprep.subr.mxu0 0.0
  %325 = vmatpush1.msra.mxu0 0.0
  %326 = vmatprep.subr.mxu0 0.0
  %327 = vmatpush1.msra.mxu0 0.0
  %328 = vmatprep.subr.mxu0 0.0
  %329 = vmatpush1.msra.mxu0 0.0
  %330 = vmatprep.subr.mxu0 0.0
  %331 = vmatpush1.msra.mxu0 0.0
  %332 = vmatprep.subr.mxu0 0.0
  %333 = vmatpush1.msra.mxu0 0.0
  %334 = vmatprep.subr.mxu0 0.0
  %335 = vmatpush1.msra.mxu0 0.0
  %336 = vmatprep.subr.mxu0 0.0
  %337 = vmatpush1.msra.mxu0 %v194
  %338 = vmatprep.subr.mxu0 0.0
  %339 = vmatpush1.msra.mxu0 %v193
  %340 = vmatprep.subr.mxu0 0.0
  %341 = vmatpush1.msra.mxu0 %v192
  %342 = vmatprep.subr.mxu0 0.0
  %343 = vmatpush1.msra.mxu0 %v191
  %344 = vmatprep.subr.mxu0 0.0
  %345 = vmatpush2.msra.mxu0 0.0
  %346 = vmatprep.subr.mxu0 0.0
  %347 = vmatpush2.msra.mxu0 0.0
  %348 = vmatprep.subr.mxu0 0.0
  %349 = vmatpush2.msra.mxu0 0.0
  %350 = vmatprep.subr.mxu0 0.0
  %351 = vmatpush2.msra.mxu0 0.0
  %352 = vmatprep.subr.mxu0 0.0
  %353 = vmatpush2.msra.mxu0 0.0
  %354 = vmatprep.subr.mxu0 0.0
  %355 = vmatpush2.msra.mxu0 0.0
  %356 = vmatprep.subr.mxu0 0.0
  %357 = vmatpush2.msra.mxu0 0.0
  %358 = vmatprep.subr.mxu0 0.0
  %359 = vmatpush2.msra.mxu0 0.0
  %360 = vmatprep.subr.mxu0 0.0
  %361 = vmatpush2.msra.mxu0 0.0
  %362 = vmatprep.subr.mxu0 0.0
  %363 = vmatpush2.msra.mxu0 0.0
  %364 = vmatprep.subr.mxu0 0.0
  %365 = vmatpush2.msra.mxu0 0.0
  %366 = vmatprep.subr.mxu0 0.0
  %367 = vmatpush2.msra.mxu0 0.0
  %368 = vmatprep.subr.mxu0 0.0
  %369 = vmatpush2.msra.mxu0 0.0
  %370 = vmatprep.subr.mxu0 0.0
  %371 = vmatpush2.msra.mxu0 0.0
  %372 = vmatprep.subr.mxu0 0.0
  %373 = vmatpush2.msra.mxu0 0.0
  %374 = vmatprep.subr.mxu0 0.0
  %375 = vmatpush2.msra.mxu0 0.0
  %376 = vmatprep.mubr.f32.mxu0 0.0
  %377 = vmatmul.mubr.f32.gmra.mxu0 %v310
  %v378 = vpop.f32.mrf.mxu0
  %v379 = vadd.f32 0.0, %v378
  %v380 = vpop.f32.mrf.mxu0
  %381 = vdwg.mxu0
  %v382 = vadd.f32 %v306, %v379
  %v383 = vtanh.pop %v382
  %v384 = vmul.f32 %v383, 0.5
  %v385 = vadd.f32 %v384, 0.5
  %v386 = vmul.f32 %v385, %v289
  %388 = vrot.lane.b32.xlu0 %v383, 64
  %v389 = vpop.permute.xlu0 %388
  %v391 = vmul.f32 %v385, %v389
  %393 = vrot.lane.b32.xlu0 %v391, 32
  %v394 = vpop.permute.xlu0 %393
  %v396 = vadd.f32 %v386, %v394
  %v397 = vtanh.pop %v396
  %399 = vrot.lane.b32.xlu0 %v397, 64
  %v400 = vpop.permute.xlu0 %399
  %v402 = vmul.f32 %v385, %v400
  %v403 = vpack.c.bf16 %v402, %v402
  %v405 = vunpack.c.l.b16 %v403
  %v406 = vpack.c.b16 %v405, %v405
  %407 = vrot.lane.b32.xlu0 %v406, 32
  %v408 = vpop.permute.xlu0 %407
  %s410 = scalar_lea.vmem [#allocation3], 4
  %411 = vst.msk [vmem:[%s410] sm:$0xf] %vm303, %v408
  %s412 = scalar_lea.vmem [#allocation2], 16
  %v413 = vld [vmem:[%s412] sm:$0xff]
  %415 = vrot.lane.b32.xlu0 %v402, 32
  %v416 = vpop.permute.xlu0 %415
  %v417 = vsel %vm94, %v416, 0
  %419 = vmatprep.subr.mxu0 0.0
  %420 = vmatpush1.msra.mxu0 0.0
  %421 = vmatprep.subr.mxu0 0.0
  %422 = vmatpush1.msra.mxu0 0.0
  %423 = vmatprep.subr.mxu0 0.0
  %424 = vmatpush1.msra.mxu0 0.0
  %425 = vmatprep.subr.mxu0 0.0
  %426 = vmatpush1.msra.mxu0 0.0
  %427 = vmatprep.subr.mxu0 0.0
  %428 = vmatpush1.msra.mxu0 0.0
  %429 = vmatprep.subr.mxu0 0.0
  %430 = vmatpush1.msra.mxu0 0.0
  %431 = vmatprep.subr.mxu0 0.0
  %432 = vmatpush1.msra.mxu0 0.0
  %433 = vmatprep.subr.mxu0 0.0
  %434 = vmatpush1.msra.mxu0 0.0
  %435 = vmatprep.subr.mxu0 0.0
  %436 = vmatpush1.msra.mxu0 0.0
  %437 = vmatprep.subr.mxu0 0.0
  %438 = vmatpush1.msra.mxu0 0.0
  %439 = vmatprep.subr.mxu0 0.0
  %440 = vmatpush1.msra.mxu0 0.0
  %441 = vmatprep.subr.mxu0 0.0
  %442 = vmatpush1.msra.mxu0 0.0
  %443 = vmatprep.subr.mxu0 0.0
  %444 = vmatpush1.msra.mxu0 %v194
  %445 = vmatprep.subr.mxu0 0.0
  %446 = vmatpush1.msra.mxu0 %v193
  %447 = vmatprep.subr.mxu0 0.0
  %448 = vmatpush1.msra.mxu0 %v192
  %449 = vmatprep.subr.mxu0 0.0
  %450 = vmatpush1.msra.mxu0 %v191
  %451 = vmatprep.subr.mxu0 0.0
  %452 = vmatpush2.msra.mxu0 0.0
  %453 = vmatprep.subr.mxu0 0.0
  %454 = vmatpush2.msra.mxu0 0.0
  %455 = vmatprep.subr.mxu0 0.0
  %456 = vmatpush2.msra.mxu0 0.0
  %457 = vmatprep.subr.mxu0 0.0
  %458 = vmatpush2.msra.mxu0 0.0
  %459 = vmatprep.subr.mxu0 0.0
  %460 = vmatpush2.msra.mxu0 0.0
  %461 = vmatprep.subr.mxu0 0.0
  %462 = vmatpush2.msra.mxu0 0.0
  %463 = vmatprep.subr.mxu0 0.0
  %464 = vmatpush2.msra.mxu0 0.0
  %465 = vmatprep.subr.mxu0 0.0
  %466 = vmatpush2.msra.mxu0 0.0
  %467 = vmatprep.subr.mxu0 0.0
  %468 = vmatpush2.msra.mxu0 0.0
  %469 = vmatprep.subr.mxu0 0.0
  %470 = vmatpush2.msra.mxu0 0.0
  %471 = vmatprep.subr.mxu0 0.0
  %472 = vmatpush2.msra.mxu0 0.0
  %473 = vmatprep.subr.mxu0 0.0
  %474 = vmatpush2.msra.mxu0 0.0
  %475 = vmatprep.subr.mxu0 0.0
  %476 = vmatpush2.msra.mxu0 0.0
  %477 = vmatprep.subr.mxu0 0.0
  %478 = vmatpush2.msra.mxu0 0.0
  %479 = vmatprep.subr.mxu0 0.0
  %480 = vmatpush2.msra.mxu0 0.0
  %481 = vmatprep.subr.mxu0 0.0
  %482 = vmatpush2.msra.mxu0 0.0
  %483 = vmatprep.mubr.f32.mxu0 0.0
  %484 = vmatmul.mubr.f32.gmra.mxu0 %v417
  %v485 = vpop.f32.mrf.mxu0
  %v486 = vadd.f32 0.0, %v485
  %v487 = vpop.f32.mrf.mxu0
  %488 = vdwg.mxu0
  %v489 = vadd.f32 %v413, %v486
  %v490 = vtanh.pop %v489
  %v491 = vmul.f32 %v490, 0.5
  %v492 = vadd.f32 %v491, 0.5
  %v493 = vmul.f32 %v492, %v396
  %495 = vrot.lane.b32.xlu0 %v490, 64
  %v496 = vpop.permute.xlu0 %495
  %v498 = vmul.f32 %v492, %v496
  %500 = vrot.lane.b32.xlu0 %v498, 32
  %v501 = vpop.permute.xlu0 %500
  %v503 = vadd.f32 %v493, %v501
  %v504 = vtanh.pop %v503
  %506 = vrot.lane.b32.xlu0 %v504, 64
  %v507 = vpop.permute.xlu0 %506
  %v509 = vmul.f32 %v492, %v507
  %v510 = vpack.c.bf16 %v509, %v509
  %v512 = vunpack.c.l.b16 %v510
  %v513 = vpack.c.b16 %v512, %v512
  %514 = vrot.lane.b32.xlu0 %v513, 32
  %v515 = vpop.permute.xlu0 %514
  %s517 = scalar_lea.vmem [#allocation3], 8
  %518 = vst.msk [vmem:[%s517] sm:$0xf] %vm303, %v515
  %s519 = scalar_lea.vmem [#allocation2], 24
  %v520 = vld [vmem:[%s519] sm:$0xff]
  %522 = vrot.lane.b32.xlu0 %v509, 32
  %v523 = vpop.permute.xlu0 %522
  %v524 = vsel %vm94, %v523, 0
  %526 = vmatprep.subr.mxu0 0.0
  %527 = vmatpush1.msra.mxu0 0.0
  %528 = vmatprep.subr.mxu0 0.0
  %529 = vmatpush1.msra.mxu0 0.0
  %530 = vmatprep.subr.mxu0 0.0
  %531 = vmatpush1.msra.mxu0 0.0
  %532 = vmatprep.subr.mxu0 0.0
  %533 = vmatpush1.msra.mxu0 0.0
  %534 = vmatprep.subr.mxu0 0.0
  %535 = vmatpush1.msra.mxu0 0.0
  %536 = vmatprep.subr.mxu0 0.0
  %537 = vmatpush1.msra.mxu0 0.0
  %538 = vmatprep.subr.mxu0 0.0
  %539 = vmatpush1.msra.mxu0 0.0
  %540 = vmatprep.subr.mxu0 0.0
  %541 = vmatpush1.msra.mxu0 0.0
  %542 = vmatprep.subr.mxu0 0.0
  %543 = vmatpush1.msra.mxu0 0.0
  %544 = vmatprep.subr.mxu0 0.0
  %545 = vmatpush1.msra.mxu0 0.0
  %546 = vmatprep.subr.mxu0 0.0
  %547 = vmatpush1.msra.mxu0 0.0
  %548 = vmatprep.subr.mxu0 0.0
  %549 = vmatpush1.msra.mxu0 0.0
  %550 = vmatprep.subr.mxu0 0.0
  %551 = vmatpush1.msra.mxu0 %v194
  %552 = vmatprep.subr.mxu0 0.0
  %553 = vmatpush1.msra.mxu0 %v193
  %554 = vmatprep.subr.mxu0 0.0
  %555 = vmatpush1.msra.mxu0 %v192
  %556 = vmatprep.subr.mxu0 0.0
  %557 = vmatpush1.msra.mxu0 %v191
  %558 = vmatprep.subr.mxu0 0.0
  %559 = vmatpush2.msra.mxu0 0.0
  %560 = vmatprep.subr.mxu0 0.0
  %561 = vmatpush2.msra.mxu0 0.0
  %562 = vmatprep.subr.mxu0 0.0
  %563 = vmatpush2.msra.mxu0 0.0
  %564 = vmatprep.subr.mxu0 0.0
  %565 = vmatpush2.msra.mxu0 0.0
  %566 = vmatprep.subr.mxu0 0.0
  %567 = vmatpush2.msra.mxu0 0.0
  %568 = vmatprep.subr.mxu0 0.0
  %569 = vmatpush2.msra.mxu0 0.0
  %570 = vmatprep.subr.mxu0 0.0
  %571 = vmatpush2.msra.mxu0 0.0
  %572 = vmatprep.subr.mxu0 0.0
  %573 = vmatpush2.msra.mxu0 0.0
  %574 = vmatprep.subr.mxu0 0.0
  %575 = vmatpush2.msra.mxu0 0.0
  %576 = vmatprep.subr.mxu0 0.0
  %577 = vmatpush2.msra.mxu0 0.0
  %578 = vmatprep.subr.mxu0 0.0
  %579 = vmatpush2.msra.mxu0 0.0
  %580 = vmatprep.subr.mxu0 0.0
  %581 = vmatpush2.msra.mxu0 0.0
  %582 = vmatprep.subr.mxu0 0.0
  %583 = vmatpush2.msra.mxu0 0.0
  %584 = vmatprep.subr.mxu0 0.0
  %585 = vmatpush2.msra.mxu0 0.0
  %586 = vmatprep.subr.mxu0 0.0
  %587 = vmatpush2.msra.mxu0 0.0
  %588 = vmatprep.subr.mxu0 0.0
  %589 = vmatpush2.msra.mxu0 0.0
  %590 = vmatprep.mubr.f32.mxu0 0.0
  %591 = vmatmul.mubr.f32.gmra.mxu0 %v524
  %v592 = vpop.f32.mrf.mxu0
  %v593 = vadd.f32 0.0, %v592
  %v594 = vpop.f32.mrf.mxu0
  %595 = vdwg.mxu0
  %v596 = vadd.f32 %v520, %v593
  %v597 = vtanh.pop %v596
  %v598 = vmul.f32 %v597, 0.5
  %v599 = vadd.f32 %v598, 0.5
  %v600 = vmul.f32 %v599, %v503
  %602 = vrot.lane.b32.xlu0 %v597, 64
  %v603 = vpop.permute.xlu0 %602
  %v605 = vmul.f32 %v599, %v603
  %607 = vrot.lane.b32.xlu0 %v605, 32
  %v608 = vpop.permute.xlu0 %607
  %v610 = vadd.f32 %v600, %v608
  %v611 = vtanh.pop %v610
  %613 = vrot.lane.b32.xlu0 %v611, 64
  %v614 = vpop.permute.xlu0 %613
  %v616 = vmul.f32 %v599, %v614
  %v617 = vpack.c.bf16 %v616, %v616
  %v619 = vunpack.c.l.b16 %v617
  %v620 = vpack.c.b16 %v619, %v619
  %621 = vrot.lane.b32.xlu0 %v620, 32
  %v622 = vpop.permute.xlu0 %621
  %s624 = scalar_lea.vmem [#allocation3], 12
  %625 = vst.msk [vmem:[%s624] sm:$0xf] %vm303, %v622
  %s626 = scalar_lea.vmem [#allocation2], 32
  %v627 = vld [vmem:[%s626] sm:$0xff]
  %629 = vrot.lane.b32.xlu0 %v616, 32
  %v630 = vpop.permute.xlu0 %629
  %v631 = vsel %vm94, %v630, 0
  %633 = vmatprep.subr.mxu0 0.0
  %634 = vmatpush1.msra.mxu0 0.0
  %635 = vmatprep.subr.mxu0 0.0
  %636 = vmatpush1.msra.mxu0 0.0
  %637 = vmatprep.subr.mxu0 0.0
  %638 = vmatpush1.msra.mxu0 0.0
  %639 = vmatprep.subr.mxu0 0.0
  %640 = vmatpush1.msra.mxu0 0.0
  %641 = vmatprep.subr.mxu0 0.0
  %642 = vmatpush1.msra.mxu0 0.0
  %643 = vmatprep.subr.mxu0 0.0
  %644 = vmatpush1.msra.mxu0 0.0
  %645 = vmatprep.subr.mxu0 0.0
  %646 = vmatpush1.msra.mxu0 0.0
  %647 = vmatprep.subr.mxu0 0.0
  %648 = vmatpush1.msra.mxu0 0.0
  %649 = vmatprep.subr.mxu0 0.0
  %650 = vmatpush1.msra.mxu0 0.0
  %651 = vmatprep.subr.mxu0 0.0
  %652 = vmatpush1.msra.mxu0 0.0
  %653 = vmatprep.subr.mxu0 0.0
  %654 = vmatpush1.msra.mxu0 0.0
  %655 = vmatprep.subr.mxu0 0.0
  %656 = vmatpush1.msra.mxu0 0.0
  %657 = vmatprep.subr.mxu0 0.0
  %658 = vmatpush1.msra.mxu0 %v194
  %659 = vmatprep.subr.mxu0 0.0
  %660 = vmatpush1.msra.mxu0 %v193
  %661 = vmatprep.subr.mxu0 0.0
  %662 = vmatpush1.msra.mxu0 %v192
  %663 = vmatprep.subr.mxu0 0.0
  %664 = vmatpush1.msra.mxu0 %v191
  %665 = vmatprep.subr.mxu0 0.0
  %666 = vmatpush2.msra.mxu0 0.0
  %667 = vmatprep.subr.mxu0 0.0
  %668 = vmatpush2.msra.mxu0 0.0
  %669 = vmatprep.subr.mxu0 0.0
  %670 = vmatpush2.msra.mxu0 0.0
  %671 = vmatprep.subr.mxu0 0.0
  %672 = vmatpush2.msra.mxu0 0.0
  %673 = vmatprep.subr.mxu0 0.0
  %674 = vmatpush2.msra.mxu0 0.0
  %675 = vmatprep.subr.mxu0 0.0
  %676 = vmatpush2.msra.mxu0 0.0
  %677 = vmatprep.subr.mxu0 0.0
  %678 = vmatpush2.msra.mxu0 0.0
  %679 = vmatprep.subr.mxu0 0.0
  %680 = vmatpush2.msra.mxu0 0.0
  %681 = vmatprep.subr.mxu0 0.0
  %682 = vmatpush2.msra.mxu0 0.0
  %683 = vmatprep.subr.mxu0 0.0
  %684 = vmatpush2.msra.mxu0 0.0
  %685 = vmatprep.subr.mxu0 0.0
  %686 = vmatpush2.msra.mxu0 0.0
  %687 = vmatprep.subr.mxu0 0.0
  %688 = vmatpush2.msra.mxu0 0.0
  %689 = vmatprep.subr.mxu0 0.0
  %690 = vmatpush2.msra.mxu0 0.0
  %691 = vmatprep.subr.mxu0 0.0
  %692 = vmatpush2.msra.mxu0 0.0
  %693 = vmatprep.subr.mxu0 0.0
  %694 = vmatpush2.msra.mxu0 0.0
  %695 = vmatprep.subr.mxu0 0.0
  %696 = vmatpush2.msra.mxu0 0.0
  %697 = vmatprep.mubr.f32.mxu0 0.0
  %698 = vmatmul.mubr.f32.gmra.mxu0 %v631
  %v699 = vpop.f32.mrf.mxu0
  %v700 = vadd.f32 0.0, %v699
  %v701 = vpop.f32.mrf.mxu0
  %702 = vdwg.mxu0
  %v703 = vadd.f32 %v627, %v700
  %v704 = vtanh.pop %v703
  %v705 = vmul.f32 %v704, 0.5
  %v706 = vadd.f32 %v705, 0.5
  %v707 = vmul.f32 %v706, %v610
  %709 = vrot.lane.b32.xlu0 %v704, 64
  %v710 = vpop.permute.xlu0 %709
  %v712 = vmul.f32 %v706, %v710
  %714 = vrot.lane.b32.xlu0 %v712, 32
  %v715 = vpop.permute.xlu0 %714
  %v717 = vadd.f32 %v707, %v715
  %v718 = vtanh.pop %v717
  %720 = vrot.lane.b32.xlu0 %v718, 64
  %v721 = vpop.permute.xlu0 %720
  %v723 = vmul.f32 %v706, %v721
  %v724 = vpack.c.bf16 %v723, %v723
  %v726 = vunpack.c.l.b16 %v724
  %v727 = vpack.c.b16 %v726, %v726
  %728 = vrot.lane.b32.xlu0 %v727, 32
  %v729 = vpop.permute.xlu0 %728
  %s731 = scalar_lea.vmem [#allocation3], 16
  %732 = vst.msk [vmem:[%s731] sm:$0xf] %vm303, %v729
  %s733 = scalar_lea.vmem [#allocation2], 40
  %v734 = vld [vmem:[%s733] sm:$0xff]
  %736 = vrot.lane.b32.xlu0 %v723, 32
  %v737 = vpop.permute.xlu0 %736
  %v738 = vsel %vm94, %v737, 0
  %740 = vmatprep.subr.mxu0 0.0
  %741 = vmatpush1.msra.mxu0 0.0
  %742 = vmatprep.subr.mxu0 0.0
  %743 = vmatpush1.msra.mxu0 0.0
  %744 = vmatprep.subr.mxu0 0.0
  %745 = vmatpush1.msra.mxu0 0.0
  %746 = vmatprep.subr.mxu0 0.0
  %747 = vmatpush1.msra.mxu0 0.0
  %748 = vmatprep.subr.mxu0 0.0
  %749 = vmatpush1.msra.mxu0 0.0
  %750 = vmatprep.subr.mxu0 0.0
  %751 = vmatpush1.msra.mxu0 0.0
  %752 = vmatprep.subr.mxu0 0.0
  %753 = vmatpush1.msra.mxu0 0.0
  %754 = vmatprep.subr.mxu0 0.0
  %755 = vmatpush1.msra.mxu0 0.0
  %756 = vmatprep.subr.mxu0 0.0
  %757 = vmatpush1.msra.mxu0 0.0
  %758 = vmatprep.subr.mxu0 0.0
  %759 = vmatpush1.msra.mxu0 0.0
  %760 = vmatprep.subr.mxu0 0.0
  %761 = vmatpush1.msra.mxu0 0.0
  %762 = vmatprep.subr.mxu0 0.0
  %763 = vmatpush1.msra.mxu0 0.0
  %764 = vmatprep.subr.mxu0 0.0
  %765 = vmatpush1.msra.mxu0 %v194
  %766 = vmatprep.subr.mxu0 0.0
  %767 = vmatpush1.msra.mxu0 %v193
  %768 = vmatprep.subr.mxu0 0.0
  %769 = vmatpush1.msra.mxu0 %v192
  %770 = vmatprep.subr.mxu0 0.0
  %771 = vmatpush1.msra.mxu0 %v191
  %772 = vmatprep.subr.mxu0 0.0
  %773 = vmatpush2.msra.mxu0 0.0
  %774 = vmatprep.subr.mxu0 0.0
  %775 = vmatpush2.msra.mxu0 0.0
  %776 = vmatprep.subr.mxu0 0.0
  %777 = vmatpush2.msra.mxu0 0.0
  %778 = vmatprep.subr.mxu0 0.0
  %779 = vmatpush2.msra.mxu0 0.0
  %780 = vmatprep.subr.mxu0 0.0
  %781 = vmatpush2.msra.mxu0 0.0
  %782 = vmatprep.subr.mxu0 0.0
  %783 = vmatpush2.msra.mxu0 0.0
  %784 = vmatprep.subr.mxu0 0.0
  %785 = vmatpush2.msra.mxu0 0.0
  %786 = vmatprep.subr.mxu0 0.0
  %787 = vmatpush2.msra.mxu0 0.0
  %788 = vmatprep.subr.mxu0 0.0
  %789 = vmatpush2.msra.mxu0 0.0
  %790 = vmatprep.subr.mxu0 0.0
  %791 = vmatpush2.msra.mxu0 0.0
  %792 = vmatprep.subr.mxu0 0.0
  %793 = vmatpush2.msra.mxu0 0.0
  %794 = vmatprep.subr.mxu0 0.0
  %795 = vmatpush2.msra.mxu0 0.0
  %796 = vmatprep.subr.mxu0 0.0
  %797 = vmatpush2.msra.mxu0 0.0
  %798 = vmatprep.subr.mxu0 0.0
  %799 = vmatpush2.msra.mxu0 0.0
  %800 = vmatprep.subr.mxu0 0.0
  %801 = vmatpush2.msra.mxu0 0.0
  %802 = vmatprep.subr.mxu0 0.0
  %803 = vmatpush2.msra.mxu0 0.0
  %804 = vmatprep.mubr.f32.mxu0 0.0
  %805 = vmatmul.mubr.f32.gmra.mxu0 %v738
  %v806 = vpop.f32.mrf.mxu0
  %v807 = vadd.f32 0.0, %v806
  %v808 = vpop.f32.mrf.mxu0
  %809 = vdwg.mxu0
  %v810 = vadd.f32 %v734, %v807
  %v811 = vtanh.pop %v810
  %v812 = vmul.f32 %v811, 0.5
  %v813 = vadd.f32 %v812, 0.5
  %v814 = vmul.f32 %v813, %v717
  %816 = vrot.lane.b32.xlu0 %v811, 64
  %v817 = vpop.permute.xlu0 %816
  %v819 = vmul.f32 %v813, %v817
  %821 = vrot.lane.b32.xlu0 %v819, 32
  %v822 = vpop.permute.xlu0 %821
  %v824 = vadd.f32 %v814, %v822
  %v825 = vtanh.pop %v824
  %827 = vrot.lane.b32.xlu0 %v825, 64
  %v828 = vpop.permute.xlu0 %827
  %v830 = vmul.f32 %v813, %v828
  %v831 = vpack.c.bf16 %v830, %v830
  %v833 = vunpack.c.l.b16 %v831
  %v834 = vpack.c.b16 %v833, %v833
  %835 = vrot.lane.b32.xlu0 %v834, 32
  %v836 = vpop.permute.xlu0 %835
  %s838 = scalar_lea.vmem [#allocation3], 20
  %839 = vst.msk [vmem:[%s838] sm:$0xf] %vm303, %v836
  %s840 = scalar_lea.vmem [#allocation2], 48
  %v841 = vld [vmem:[%s840] sm:$0xff]
  %843 = vrot.lane.b32.xlu0 %v830, 32
  %v844 = vpop.permute.xlu0 %843
  %v845 = vsel %vm94, %v844, 0
  %847 = vmatprep.subr.mxu0 0.0
  %848 = vmatpush1.msra.mxu0 0.0
  %849 = vmatprep.subr.mxu0 0.0
  %850 = vmatpush1.msra.mxu0 0.0
  %851 = vmatprep.subr.mxu0 0.0
  %852 = vmatpush1.msra.mxu0 0.0
  %853 = vmatprep.subr.mxu0 0.0
  %854 = vmatpush1.msra.mxu0 0.0
  %855 = vmatprep.subr.mxu0 0.0
  %856 = vmatpush1.msra.mxu0 0.0
  %857 = vmatprep.subr.mxu0 0.0
  %858 = vmatpush1.msra.mxu0 0.0
  %859 = vmatprep.subr.mxu0 0.0
  %860 = vmatpush1.msra.mxu0 0.0
  %861 = vmatprep.subr.mxu0 0.0
  %862 = vmatpush1.msra.mxu0 0.0
  %863 = vmatprep.subr.mxu0 0.0
  %864 = vmatpush1.msra.mxu0 0.0
  %865 = vmatprep.subr.mxu0 0.0
  %866 = vmatpush1.msra.mxu0 0.0
  %867 = vmatprep.subr.mxu0 0.0
  %868 = vmatpush1.msra.mxu0 0.0
  %869 = vmatprep.subr.mxu0 0.0
  %870 = vmatpush1.msra.mxu0 0.0
  %871 = vmatprep.subr.mxu0 0.0
  %872 = vmatpush1.msra.mxu0 %v194
  %873 = vmatprep.subr.mxu0 0.0
  %874 = vmatpush1.msra.mxu0 %v193
  %875 = vmatprep.subr.mxu0 0.0
  %876 = vmatpush1.msra.mxu0 %v192
  %877 = vmatprep.subr.mxu0 0.0
  %878 = vmatpush1.msra.mxu0 %v191
  %879 = vmatprep.subr.mxu0 0.0
  %880 = vmatpush2.msra.mxu0 0.0
  %881 = vmatprep.subr.mxu0 0.0
  %882 = vmatpush2.msra.mxu0 0.0
  %883 = vmatprep.subr.mxu0 0.0
  %884 = vmatpush2.msra.mxu0 0.0
  %885 = vmatprep.subr.mxu0 0.0
  %886 = vmatpush2.msra.mxu0 0.0
  %887 = vmatprep.subr.mxu0 0.0
  %888 = vmatpush2.msra.mxu0 0.0
  %889 = vmatprep.subr.mxu0 0.0
  %890 = vmatpush2.msra.mxu0 0.0
  %891 = vmatprep.subr.mxu0 0.0
  %892 = vmatpush2.msra.mxu0 0.0
  %893 = vmatprep.subr.mxu0 0.0
  %894 = vmatpush2.msra.mxu0 0.0
  %895 = vmatprep.subr.mxu0 0.0
  %896 = vmatpush2.msra.mxu0 0.0
  %897 = vmatprep.subr.mxu0 0.0
  %898 = vmatpush2.msra.mxu0 0.0
  %899 = vmatprep.subr.mxu0 0.0
  %900 = vmatpush2.msra.mxu0 0.0
  %901 = vmatprep.subr.mxu0 0.0
  %902 = vmatpush2.msra.mxu0 0.0
  %903 = vmatprep.subr.mxu0 0.0
  %904 = vmatpush2.msra.mxu0 0.0
  %905 = vmatprep.subr.mxu0 0.0
  %906 = vmatpush2.msra.mxu0 0.0
  %907 = vmatprep.subr.mxu0 0.0
  %908 = vmatpush2.msra.mxu0 0.0
  %909 = vmatprep.subr.mxu0 0.0
  %910 = vmatpush2.msra.mxu0 0.0
  %911 = vmatprep.mubr.f32.mxu0 0.0
  %912 = vmatmul.mubr.f32.gmra.mxu0 %v845
  %v913 = vpop.f32.mrf.mxu0
  %v914 = vadd.f32 0.0, %v913
  %v915 = vpop.f32.mrf.mxu0
  %916 = vdwg.mxu0
  %v917 = vadd.f32 %v841, %v914
  %v918 = vtanh.pop %v917
  %v919 = vmul.f32 %v918, 0.5
  %v920 = vadd.f32 %v919, 0.5
  %v921 = vmul.f32 %v920, %v824
  %923 = vrot.lane.b32.xlu0 %v918, 64
  %v924 = vpop.permute.xlu0 %923
  %v926 = vmul.f32 %v920, %v924
  %928 = vrot.lane.b32.xlu0 %v926, 32
  %v929 = vpop.permute.xlu0 %928
  %v931 = vadd.f32 %v921, %v929
  %v932 = vtanh.pop %v931
  %934 = vrot.lane.b32.xlu0 %v932, 64
  %v935 = vpop.permute.xlu0 %934
  %v937 = vmul.f32 %v920, %v935
  %v938 = vpack.c.bf16 %v937, %v937
  %v940 = vunpack.c.l.b16 %v938
  %v941 = vpack.c.b16 %v940, %v940
  %942 = vrot.lane.b32.xlu0 %v941, 32
  %v943 = vpop.permute.xlu0 %942
  %s945 = scalar_lea.vmem [#allocation3], 24
  %946 = vst.msk [vmem:[%s945] sm:$0xf] %vm303, %v943
  %s947 = scalar_lea.vmem [#allocation2], 56
  %v948 = vld [vmem:[%s947] sm:$0xff]
  %950 = vrot.lane.b32.xlu0 %v937, 32
  %v951 = vpop.permute.xlu0 %950
  %v952 = vsel %vm94, %v951, 0
  %954 = vmatprep.subr.mxu0 0.0
  %955 = vmatpush1.msra.mxu0 0.0
  %956 = vmatprep.subr.mxu0 0.0
  %957 = vmatpush1.msra.mxu0 0.0
  %958 = vmatprep.subr.mxu0 0.0
  %959 = vmatpush1.msra.mxu0 0.0
  %960 = vmatprep.subr.mxu0 0.0
  %961 = vmatpush1.msra.mxu0 0.0
  %962 = vmatprep.subr.mxu0 0.0
  %963 = vmatpush1.msra.mxu0 0.0
  %964 = vmatprep.subr.mxu0 0.0
  %965 = vmatpush1.msra.mxu0 0.0
  %966 = vmatprep.subr.mxu0 0.0
  %967 = vmatpush1.msra.mxu0 0.0
  %968 = vmatprep.subr.mxu0 0.0
  %969 = vmatpush1.msra.mxu0 0.0
  %970 = vmatprep.subr.mxu0 0.0
  %971 = vmatpush1.msra.mxu0 0.0
  %972 = vmatprep.subr.mxu0 0.0
  %973 = vmatpush1.msra.mxu0 0.0
  %974 = vmatprep.subr.mxu0 0.0
  %975 = vmatpush1.msra.mxu0 0.0
  %976 = vmatprep.subr.mxu0 0.0
  %977 = vmatpush1.msra.mxu0 0.0
  %978 = vmatprep.subr.mxu0 0.0
  %979 = vmatpush1.msra.mxu0 %v194
  %980 = vmatprep.subr.mxu0 0.0
  %981 = vmatpush1.msra.mxu0 %v193
  %982 = vmatprep.subr.mxu0 0.0
  %983 = vmatpush1.msra.mxu0 %v192
  %984 = vmatprep.subr.mxu0 0.0
  %985 = vmatpush1.msra.mxu0 %v191
  %986 = vmatprep.subr.mxu0 0.0
  %987 = vmatpush2.msra.mxu0 0.0
  %988 = vmatprep.subr.mxu0 0.0
  %989 = vmatpush2.msra.mxu0 0.0
  %990 = vmatprep.subr.mxu0 0.0
  %991 = vmatpush2.msra.mxu0 0.0
  %992 = vmatprep.subr.mxu0 0.0
  %993 = vmatpush2.msra.mxu0 0.0
  %994 = vmatprep.subr.mxu0 0.0
  %995 = vmatpush2.msra.mxu0 0.0
  %996 = vmatprep.subr.mxu0 0.0
  %997 = vmatpush2.msra.mxu0 0.0
  %998 = vmatprep.subr.mxu0 0.0
  %999 = vmatpush2.msra.mxu0 0.0
  %1000 = vmatprep.subr.mxu0 0.0
  %1001 = vmatpush2.msra.mxu0 0.0
  %1002 = vmatprep.subr.mxu0 0.0
  %1003 = vmatpush2.msra.mxu0 0.0
  %1004 = vmatprep.subr.mxu0 0.0
  %1005 = vmatpush2.msra.mxu0 0.0
  %1006 = vmatprep.subr.mxu0 0.0
  %1007 = vmatpush2.msra.mxu0 0.0
  %1008 = vmatprep.subr.mxu0 0.0
  %1009 = vmatpush2.msra.mxu0 0.0
  %1010 = vmatprep.subr.mxu0 0.0
  %1011 = vmatpush2.msra.mxu0 0.0
  %1012 = vmatprep.subr.mxu0 0.0
  %1013 = vmatpush2.msra.mxu0 0.0
  %1014 = vmatprep.subr.mxu0 0.0
  %1015 = vmatpush2.msra.mxu0 0.0
  %1016 = vmatprep.subr.mxu0 0.0
  %1017 = vmatpush2.msra.mxu0 0.0
  %1018 = vmatprep.mubr.f32.mxu0 0.0
  %1019 = vmatmul.mubr.f32.gmra.mxu0 %v952
  %v1020 = vpop.f32.mrf.mxu0
  %v1021 = vadd.f32 0.0, %v1020
  %v1022 = vpop.f32.mrf.mxu0
  %1023 = vdwg.mxu0
  %v1024 = vadd.f32 %v948, %v1021
  %v1025 = vtanh.pop %v1024
  %v1026 = vmul.f32 %v1025, 0.5
  %v1027 = vadd.f32 %v1026, 0.5
  %v1028 = vmul.f32 %v1027, %v931
  %1030 = vrot.lane.b32.xlu0 %v1025, 64
  %v1031 = vpop.permute.xlu0 %1030
  %v1033 = vmul.f32 %v1027, %v1031
  %1035 = vrot.lane.b32.xlu0 %v1033, 32
  %v1036 = vpop.permute.xlu0 %1035
  %v1038 = vadd.f32 %v1028, %v1036
  %v1039 = vtanh.pop %v1038
  %1041 = vrot.lane.b32.xlu0 %v1039, 64
  %v1042 = vpop.permute.xlu0 %1041
  %v1044 = vmul.f32 %v1027, %v1042
  %v1045 = vpack.c.bf16 %v1044, %v1044
  %v1047 = vunpack.c.l.b16 %v1045
  %v1048 = vpack.c.b16 %v1047, %v1047
  %1049 = vrot.lane.b32.xlu0 %v1048, 32
  %v1050 = vpop.permute.xlu0 %1049
  %s1052 = scalar_lea.vmem [#allocation3], 28
  %1053 = vst.msk [vmem:[%s1052] sm:$0xf] %vm303, %v1050
  %s1054 = scalar_lea.vmem [#allocation2], 64
  %v1055 = vld [vmem:[%s1054] sm:$0xff]
  %1057 = vrot.lane.b32.xlu0 %v1044, 32
  %v1058 = vpop.permute.xlu0 %1057
  %v1059 = vsel %vm94, %v1058, 0
  %1061 = vmatprep.subr.mxu0 0.0
  %1062 = vmatpush1.msra.mxu0 0.0
  %1063 = vmatprep.subr.mxu0 0.0
  %1064 = vmatpush1.msra.mxu0 0.0
  %1065 = vmatprep.subr.mxu0 0.0
  %1066 = vmatpush1.msra.mxu0 0.0
  %1067 = vmatprep.subr.mxu0 0.0
  %1068 = vmatpush1.msra.mxu0 0.0
  %1069 = vmatprep.subr.mxu0 0.0
  %1070 = vmatpush1.msra.mxu0 0.0
  %1071 = vmatprep.subr.mxu0 0.0
  %1072 = vmatpush1.msra.mxu0 0.0
  %1073 = vmatprep.subr.mxu0 0.0
  %1074 = vmatpush1.msra.mxu0 0.0
  %1075 = vmatprep.subr.mxu0 0.0
  %1076 = vmatpush1.msra.mxu0 0.0
  %1077 = vmatprep.subr.mxu0 0.0
  %1078 = vmatpush1.msra.mxu0 0.0
  %1079 = vmatprep.subr.mxu0 0.0
  %1080 = vmatpush1.msra.mxu0 0.0
  %1081 = vmatprep.subr.mxu0 0.0
  %1082 = vmatpush1.msra.mxu0 0.0
  %1083 = vmatprep.subr.mxu0 0.0
  %1084 = vmatpush1.msra.mxu0 0.0
  %1085 = vmatprep.subr.mxu0 0.0
  %1086 = vmatpush1.msra.mxu0 %v194
  %1087 = vmatprep.subr.mxu0 0.0
  %1088 = vmatpush1.msra.mxu0 %v193
  %1089 = vmatprep.subr.mxu0 0.0
  %1090 = vmatpush1.msra.mxu0 %v192
  %1091 = vmatprep.subr.mxu0 0.0
  %1092 = vmatpush1.msra.mxu0 %v191
  %1093 = vmatprep.subr.mxu0 0.0
  %1094 = vmatpush2.msra.mxu0 0.0
  %1095 = vmatprep.subr.mxu0 0.0
  %1096 = vmatpush2.msra.mxu0 0.0
  %1097 = vmatprep.subr.mxu0 0.0
  %1098 = vmatpush2.msra.mxu0 0.0
  %1099 = vmatprep.subr.mxu0 0.0
  %1100 = vmatpush2.msra.mxu0 0.0
  %1101 = vmatprep.subr.mxu0 0.0
  %1102 = vmatpush2.msra.mxu0 0.0
  %1103 = vmatprep.subr.mxu0 0.0
  %1104 = vmatpush2.msra.mxu0 0.0
  %1105 = vmatprep.subr.mxu0 0.0
  %1106 = vmatpush2.msra.mxu0 0.0
  %1107 = vmatprep.subr.mxu0 0.0
  %1108 = vmatpush2.msra.mxu0 0.0
  %1109 = vmatprep.subr.mxu0 0.0
  %1110 = vmatpush2.msra.mxu0 0.0
  %1111 = vmatprep.subr.mxu0 0.0
  %1112 = vmatpush2.msra.mxu0 0.0
  %1113 = vmatprep.subr.mxu0 0.0
  %1114 = vmatpush2.msra.mxu0 0.0
  %1115 = vmatprep.subr.mxu0 0.0
  %1116 = vmatpush2.msra.mxu0 0.0
  %1117 = vmatprep.subr.mxu0 0.0
  %1118 = vmatpush2.msra.mxu0 0.0
  %1119 = vmatprep.subr.mxu0 0.0
  %1120 = vmatpush2.msra.mxu0 0.0
  %1121 = vmatprep.subr.mxu0 0.0
  %1122 = vmatpush2.msra.mxu0 0.0
  %1123 = vmatprep.subr.mxu0 0.0
  %1124 = vmatpush2.msra.mxu0 0.0
  %1125 = vmatprep.mubr.f32.mxu0 0.0
  %1126 = vmatmul.mubr.f32.gmra.mxu0 %v1059
  %v1127 = vpop.f32.mrf.mxu0
  %v1128 = vadd.f32 0.0, %v1127
  %v1129 = vpop.f32.mrf.mxu0
  %1130 = vdwg.mxu0
  %v1131 = vadd.f32 %v1055, %v1128
  %v1132 = vtanh.pop %v1131
  %v1133 = vmul.f32 %v1132, 0.5
  %v1134 = vadd.f32 %v1133, 0.5
  %v1135 = vmul.f32 %v1134, %v1038
  %1137 = vrot.lane.b32.xlu0 %v1132, 64
  %v1138 = vpop.permute.xlu0 %1137
  %v1140 = vmul.f32 %v1134, %v1138
  %1142 = vrot.lane.b32.xlu0 %v1140, 32
  %v1143 = vpop.permute.xlu0 %1142
  %v1145 = vadd.f32 %v1135, %v1143
  %v1146 = vtanh.pop %v1145
  %1148 = vrot.lane.b32.xlu0 %v1146, 64
  %v1149 = vpop.permute.xlu0 %1148
  %v1151 = vmul.f32 %v1134, %v1149
  %v1152 = vpack.c.bf16 %v1151, %v1151
  %v1154 = vunpack.c.l.b16 %v1152
  %v1155 = vpack.c.b16 %v1154, %v1154
  %1156 = vrot.lane.b32.xlu0 %v1155, 32
  %v1157 = vpop.permute.xlu0 %1156
  %s1159 = scalar_lea.vmem [#allocation3], 32
  %1160 = vst.msk [vmem:[%s1159] sm:$0xf] %vm303, %v1157
  %v1161 = vld [vmem:[#allocation3] sm:$0xf]
  %v1162 = vld [vmem:[#allocation3 + $0x4] sm:$0xf]
  %v1163 = vld [vmem:[#allocation3 + $0x8] sm:$0xf]
  %v1164 = vld [vmem:[#allocation3 + $0xc] sm:$0xf]
  %v1165 = vld [vmem:[#allocation3 + $0x10] sm:$0xf]
  %v1166 = vld [vmem:[#allocation3 + $0x14] sm:$0xf]
  %v1167 = vld [vmem:[#allocation3 + $0x18] sm:$0xf]
  %v1168 = vld [vmem:[#allocation3 + $0x1c] sm:$0xf]
  %v1169 = vld [vmem:[#allocation3 + $0x20] sm:$0xf]
  %v1170 = vld [vmem:[%s4] sm:$0xf]
  %v1171 = vld [vmem:[%s4 + $0x4] sm:$0xf]
  %v1172 = vld [vmem:[%s4 + $0x8] sm:$0xf]
  %v1173 = vld [vmem:[%s4 + $0xc] sm:$0xf]
  %v1174 = vld [vmem:[%s6] sm:$0x1]
  %v1176 = vlaneseq
  %v1177 = vshrl.u32 %v1176, 7
  %v1178 = vsub.s32 0, %v1177
  %v1179 = vrot.slane %v1174, %v1178
  %v1190 = vunpack.c.l.b16 %v1161
  %v1191 = vunpack.c.l.b16 %v1162
  %v1192 = vunpack.c.l.b16 %v1163
  %v1193 = vunpack.c.l.b16 %v1164
  %v1194 = vunpack.c.l.b16 %v1165
  %v1195 = vunpack.c.l.b16 %v1166
  %v1196 = vunpack.c.l.b16 %v1167
  %v1197 = vunpack.c.l.b16 %v1168
  %v1198 = vunpack.c.l.b16 %v1169
  %v1199 = vpack.c.b16 %v1191, %v1190
  %v1200 = vpack.c.b16 %v1193, %v1192
  %v1201 = vpack.c.b16 %v1195, %v1194
  %v1202 = vpack.c.b16 %v1197, %v1196
  %v1203 = vpack.c.b16 %v1198, %v1198
  %v1208 = vunpack.c.l.b16 %v1170
  %v1209 = vunpack.c.l.b16 %v1171
  %v1210 = vunpack.c.l.b16 %v1172
  %v1211 = vunpack.c.l.b16 %v1173
  %v1212 = vpack.c.b16 %v1209, %v1208
  %v1213 = vpack.c.b16 %v1211, %v1210
  %v1217 = vsel %vm94, %v1199, 0
  %v1220 = vsel %vm94, %v1200, 0
  %v1223 = vsel %vm94, %v1201, 0
  %v1226 = vsel %vm94, %v1202, 0
  %v1229 = vsel %vm94, %v1203, 0
  %1231 = vmatprep.subr.bf16.mxu0 0
  %1232 = vmatpush1.bf16.msra.mxu0 0
  %1233 = vmatprep.subr.bf16.mxu0 0
  %1234 = vmatpush1.bf16.msra.mxu0 0
  %1235 = vmatprep.subr.bf16.mxu0 0
  %1236 = vmatpush1.bf16.msra.mxu0 0
  %1237 = vmatprep.subr.bf16.mxu0 0
  %1238 = vmatpush1.bf16.msra.mxu0 0
  %1239 = vmatprep.subr.bf16.mxu0 0
  %1240 = vmatpush1.bf16.msra.mxu0 0
  %1241 = vmatprep.subr.bf16.mxu0 0
  %1242 = vmatpush1.bf16.msra.mxu0 0
  %1243 = vmatprep.subr.bf16.mxu0 0
  %1244 = vmatpush1.bf16.msra.mxu0 %v1213
  %1245 = vmatprep.subr.bf16.mxu0 0
  %1246 = vmatpush1.bf16.msra.mxu0 %v1212
  %1247 = vmatprep.subr.bf16.mxu0 0
  %1248 = vmatpush2.bf16.msra.mxu0 0
  %1249 = vmatprep.subr.bf16.mxu0 0
  %1250 = vmatpush2.bf16.msra.mxu0 0
  %1251 = vmatprep.subr.bf16.mxu0 0
  %1252 = vmatpush2.bf16.msra.mxu0 0
  %1253 = vmatprep.subr.bf16.mxu0 0
  %1254 = vmatpush2.bf16.msra.mxu0 0
  %1255 = vmatprep.subr.bf16.mxu0 0
  %1256 = vmatpush2.bf16.msra.mxu0 0
  %1257 = vmatprep.subr.bf16.mxu0 0
  %1258 = vmatpush2.bf16.msra.mxu0 0
  %1259 = vmatprep.subr.bf16.mxu0 0
  %1260 = vmatpush2.bf16.msra.mxu0 0
  %1261 = vmatprep.subr.bf16.mxu0 0
  %1262 = vmatpush2.bf16.msra.mxu0 0
  %1263 = vmatprep.mubr.bf16.mxu0 0
  %1264 = vmatmul.mubr.bf16.gmra.mxu0 %v1217
  %v1265 = vpop.f32.mrf.mxu0
  %v1266 = vadd.f32 %v1179, %v1265
  %v1267 = vpop.f32.mrf.mxu0
  %v1268 = vpop.f32.mrf.mxu0
  %v1269 = vadd.f32 %v1179, %v1268
  %v1270 = vpop.f32.mrf.mxu0
  %1271 = vmatprep.mubr.bf16.mxu0 0
  %1272 = vmatmul.mubr.bf16.gmra.mxu0 %v1220
  %v1273 = vpop.f32.mrf.mxu0
  %v1274 = vadd.f32 %v1179, %v1273
  %v1275 = vpop.f32.mrf.mxu0
  %v1276 = vpop.f32.mrf.mxu0
  %v1277 = vadd.f32 %v1179, %v1276
  %v1278 = vpop.f32.mrf.mxu0
  %1279 = vmatprep.mubr.bf16.mxu0 0
  %1280 = vmatmul.mubr.bf16.gmra.mxu0 %v1223
  %v1281 = vpop.f32.mrf.mxu0
  %v1282 = vadd.f32 %v1179, %v1281
  %v1283 = vpop.f32.mrf.mxu0
  %v1284 = vpop.f32.mrf.mxu0
  %v1285 = vadd.f32 %v1179, %v1284
  %v1286 = vpop.f32.mrf.mxu0
  %1287 = vmatprep.mubr.bf16.mxu0 0
  %1288 = vmatmul.mubr.bf16.gmra.mxu0 %v1226
  %v1289 = vpop.f32.mrf.mxu0
  %v1290 = vadd.f32 %v1179, %v1289
  %v1291 = vpop.f32.mrf.mxu0
  %v1292 = vpop.f32.mrf.mxu0
  %v1293 = vadd.f32 %v1179, %v1292
  %v1294 = vpop.f32.mrf.mxu0
  %1295 = vmatprep.mubr.bf16.mxu0 0
  %1296 = vmatmul.mubr.bf16.gmra.mxu0 %v1229
  %v1297 = vpop.f32.mrf.mxu0
  %v1298 = vadd.f32 %v1179, %v1297
  %v1299 = vpop.f32.mrf.mxu0
  %v1300 = vpop.f32.mrf.mxu0
  %v1301 = vpop.f32.mrf.mxu0
  %1302 = vdwg.mxu0
  %1303 = vst [vmem:[#allocation2] sm:$0xff] %v1266
  %1304 = vst [vmem:[#allocation2 + $0x8] sm:$0xff] %v1269
  %1305 = vst [vmem:[#allocation2 + $0x10] sm:$0xff] %v1274
  %1306 = vst [vmem:[#allocation2 + $0x18] sm:$0xff] %v1277
  %1307 = vst [vmem:[#allocation2 + $0x20] sm:$0xff] %v1282
  %1308 = vst [vmem:[#allocation2 + $0x28] sm:$0xff] %v1285
  %1309 = vst [vmem:[#allocation2 + $0x30] sm:$0xff] %v1290
  %1310 = vst [vmem:[#allocation2 + $0x38] sm:$0xff] %v1293
  %1311 = vst [vmem:[#allocation2 + $0x40] sm:$0xff] %v1298
  %v1312 = vld [vmem:[%s5] sm:$0xff]
  %v1313 = vld [vmem:[%s5 + $0x8] sm:$0xff]
  %v1314 = vld [vmem:[%s5 + $0x10] sm:$0xff]
  %v1315 = vld [vmem:[%s5 + $0x18] sm:$0xff]
  %s1316 = scalar_lea.vmem %s9, 8
  %v1317 = vld [vmem:[%s1316] sm:$0xff]
  %s1318 = scalar_lea.vmem %s10, 8
  %v1319 = vld [vmem:[%s1318] sm:$0xff]
  %v1320 = vld [vmem:[#allocation2] sm:$0xff]
  %v1322 = vsel %vm94, %v1317, 0
  %1324 = vmatprep.subr.mxu0 0.0
  %1325 = vmatpush1.msra.mxu0 0.0
  %1326 = vmatprep.subr.mxu0 0.0
  %1327 = vmatpush1.msra.mxu0 0.0
  %1328 = vmatprep.subr.mxu0 0.0
  %1329 = vmatpush1.msra.mxu0 0.0
  %1330 = vmatprep.subr.mxu0 0.0
  %1331 = vmatpush1.msra.mxu0 0.0
  %1332 = vmatprep.subr.mxu0 0.0
  %1333 = vmatpush1.msra.mxu0 0.0
  %1334 = vmatprep.subr.mxu0 0.0
  %1335 = vmatpush1.msra.mxu0 0.0
  %1336 = vmatprep.subr.mxu0 0.0
  %1337 = vmatpush1.msra.mxu0 0.0
  %1338 = vmatprep.subr.mxu0 0.0
  %1339 = vmatpush1.msra.mxu0 0.0
  %1340 = vmatprep.subr.mxu0 0.0
  %1341 = vmatpush1.msra.mxu0 0.0
  %1342 = vmatprep.subr.mxu0 0.0
  %1343 = vmatpush1.msra.mxu0 0.0
  %1344 = vmatprep.subr.mxu0 0.0
  %1345 = vmatpush1.msra.mxu0 0.0
  %1346 = vmatprep.subr.mxu0 0.0
  %1347 = vmatpush1.msra.mxu0 0.0
  %1348 = vmatprep.subr.mxu0 0.0
  %1349 = vmatpush1.msra.mxu0 %v1315
  %1350 = vmatprep.subr.mxu0 0.0
  %1351 = vmatpush1.msra.mxu0 %v1314
  %1352 = vmatprep.subr.mxu0 0.0
  %1353 = vmatpush1.msra.mxu0 %v1313
  %1354 = vmatprep.subr.mxu0 0.0
  %1355 = vmatpush1.msra.mxu0 %v1312
  %1356 = vmatprep.subr.mxu0 0.0
  %1357 = vmatpush2.msra.mxu0 0.0
  %1358 = vmatprep.subr.mxu0 0.0
  %1359 = vmatpush2.msra.mxu0 0.0
  %1360 = vmatprep.subr.mxu0 0.0
  %1361 = vmatpush2.msra.mxu0 0.0
  %1362 = vmatprep.subr.mxu0 0.0
  %1363 = vmatpush2.msra.mxu0 0.0
  %1364 = vmatprep.subr.mxu0 0.0
  %1365 = vmatpush2.msra.mxu0 0.0
  %1366 = vmatprep.subr.mxu0 0.0
  %1367 = vmatpush2.msra.mxu0 0.0
  %1368 = vmatprep.subr.mxu0 0.0
  %1369 = vmatpush2.msra.mxu0 0.0
  %1370 = vmatprep.subr.mxu0 0.0
  %1371 = vmatpush2.msra.mxu0 0.0
  %1372 = vmatprep.subr.mxu0 0.0
  %1373 = vmatpush2.msra.mxu0 0.0
  %1374 = vmatprep.subr.mxu0 0.0
  %1375 = vmatpush2.msra.mxu0 0.0
  %1376 = vmatprep.subr.mxu0 0.0
  %1377 = vmatpush2.msra.mxu0 0.0
  %1378 = vmatprep.subr.mxu0 0.0
  %1379 = vmatpush2.msra.mxu0 0.0
  %1380 = vmatprep.subr.mxu0 0.0
  %1381 = vmatpush2.msra.mxu0 0.0
  %1382 = vmatprep.subr.mxu0 0.0
  %1383 = vmatpush2.msra.mxu0 0.0
  %1384 = vmatprep.subr.mxu0 0.0
  %1385 = vmatpush2.msra.mxu0 0.0
  %1386 = vmatprep.subr.mxu0 0.0
  %1387 = vmatpush2.msra.mxu0 0.0
  %1388 = vmatprep.mubr.f32.mxu0 0.0
  %1389 = vmatmul.mubr.f32.gmra.mxu0 %v1322
  %v1390 = vpop.f32.mrf.mxu0
  %v1391 = vadd.f32 0.0, %v1390
  %v1392 = vpop.f32.mrf.mxu0
  %1393 = vdwg.mxu0
  %v1394 = vadd.f32 %v1320, %v1391
  %v1395 = vtanh.pop %v1394
  %v1396 = vmul.f32 %v1395, 0.5
  %v1397 = vadd.f32 %v1396, 0.5
  %1399 = vrot.lane.b32.xlu0 %v1319, 32
  %v1400 = vpop.permute.xlu0 %1399
  %v1402 = vmul.f32 %v1397, %v1400
  %1404 = vrot.lane.b32.xlu0 %v1395, 64
  %v1405 = vpop.permute.xlu0 %1404
  %v1407 = vmul.f32 %v1397, %v1405
  %1409 = vrot.lane.b32.xlu0 %v1407, 32
  %v1410 = vpop.permute.xlu0 %1409
  %v1412 = vadd.f32 %v1402, %v1410
  %v1413 = vtanh.pop %v1412
  %1415 = vrot.lane.b32.xlu0 %v1413, 64
  %v1416 = vpop.permute.xlu0 %1415
  %v1418 = vmul.f32 %v1397, %v1416
  %v1419 = vld [vmem:[%s305] sm:$0xff]
  %1421 = vrot.lane.b32.xlu0 %v1418, 32
  %v1422 = vpop.permute.xlu0 %1421
  %v1423 = vsel %vm94, %v1422, 0
  %1425 = vmatprep.subr.mxu0 0.0
  %1426 = vmatpush1.msra.mxu0 0.0
  %1427 = vmatprep.subr.mxu0 0.0
  %1428 = vmatpush1.msra.mxu0 0.0
  %1429 = vmatprep.subr.mxu0 0.0
  %1430 = vmatpush1.msra.mxu0 0.0
  %1431 = vmatprep.subr.mxu0 0.0
  %1432 = vmatpush1.msra.mxu0 0.0
  %1433 = vmatprep.subr.mxu0 0.0
  %1434 = vmatpush1.msra.mxu0 0.0
  %1435 = vmatprep.subr.mxu0 0.0
  %1436 = vmatpush1.msra.mxu0 0.0
  %1437 = vmatprep.subr.mxu0 0.0
  %1438 = vmatpush1.msra.mxu0 0.0
  %1439 = vmatprep.subr.mxu0 0.0
  %1440 = vmatpush1.msra.mxu0 0.0
  %1441 = vmatprep.subr.mxu0 0.0
  %1442 = vmatpush1.msra.mxu0 0.0
  %1443 = vmatprep.subr.mxu0 0.0
  %1444 = vmatpush1.msra.mxu0 0.0
  %1445 = vmatprep.subr.mxu0 0.0
  %1446 = vmatpush1.msra.mxu0 0.0
  %1447 = vmatprep.subr.mxu0 0.0
  %1448 = vmatpush1.msra.mxu0 0.0
  %1449 = vmatprep.subr.mxu0 0.0
  %1450 = vmatpush1.msra.mxu0 %v1315
  %1451 = vmatprep.subr.mxu0 0.0
  %1452 = vmatpush1.msra.mxu0 %v1314
  %1453 = vmatprep.subr.mxu0 0.0
  %1454 = vmatpush1.msra.mxu0 %v1313
  %1455 = vmatprep.subr.mxu0 0.0
  %1456 = vmatpush1.msra.mxu0 %v1312
  %1457 = vmatprep.subr.mxu0 0.0
  %1458 = vmatpush2.msra.mxu0 0.0
  %1459 = vmatprep.subr.mxu0 0.0
  %1460 = vmatpush2.msra.mxu0 0.0
  %1461 = vmatprep.subr.mxu0 0.0
  %1462 = vmatpush2.msra.mxu0 0.0
  %1463 = vmatprep.subr.mxu0 0.0
  %1464 = vmatpush2.msra.mxu0 0.0
  %1465 = vmatprep.subr.mxu0 0.0
  %1466 = vmatpush2.msra.mxu0 0.0
  %1467 = vmatprep.subr.mxu0 0.0
  %1468 = vmatpush2.msra.mxu0 0.0
  %1469 = vmatprep.subr.mxu0 0.0
  %1470 = vmatpush2.msra.mxu0 0.0
  %1471 = vmatprep.subr.mxu0 0.0
  %1472 = vmatpush2.msra.mxu0 0.0
  %1473 = vmatprep.subr.mxu0 0.0
  %1474 = vmatpush2.msra.mxu0 0.0
  %1475 = vmatprep.subr.mxu0 0.0
  %1476 = vmatpush2.msra.mxu0 0.0
  %1477 = vmatprep.subr.mxu0 0.0
  %1478 = vmatpush2.msra.mxu0 0.0
  %1479 = vmatprep.subr.mxu0 0.0
  %1480 = vmatpush2.msra.mxu0 0.0
  %1481 = vmatprep.subr.mxu0 0.0
  %1482 = vmatpush2.msra.mxu0 0.0
  %1483 = vmatprep.subr.mxu0 0.0
  %1484 = vmatpush2.msra.mxu0 0.0
  %1485 = vmatprep.subr.mxu0 0.0
  %1486 = vmatpush2.msra.mxu0 0.0
  %1487 = vmatprep.subr.mxu0 0.0
  %1488 = vmatpush2.msra.mxu0 0.0
  %1489 = vmatprep.mubr.f32.mxu0 0.0
  %1490 = vmatmul.mubr.f32.gmra.mxu0 %v1423
  %v1491 = vpop.f32.mrf.mxu0
  %v1492 = vadd.f32 0.0, %v1491
  %v1493 = vpop.f32.mrf.mxu0
  %1494 = vdwg.mxu0
  %v1495 = vadd.f32 %v1419, %v1492
  %v1496 = vtanh.pop %v1495
  %v1497 = vmul.f32 %v1496, 0.5
  %v1498 = vadd.f32 %v1497, 0.5
  %v1499 = vmul.f32 %v1498, %v1412
  %1501 = vrot.lane.b32.xlu0 %v1496, 64
  %v1502 = vpop.permute.xlu0 %1501
  %v1504 = vmul.f32 %v1498, %v1502
  %1506 = vrot.lane.b32.xlu0 %v1504, 32
  %v1507 = vpop.permute.xlu0 %1506
  %v1509 = vadd.f32 %v1499, %v1507
  %v1510 = vtanh.pop %v1509
  %1512 = vrot.lane.b32.xlu0 %v1510, 64
  %v1513 = vpop.permute.xlu0 %1512
  %v1515 = vmul.f32 %v1498, %v1513
  %v1516 = vld [vmem:[%s412] sm:$0xff]
  %1518 = vrot.lane.b32.xlu0 %v1515, 32
  %v1519 = vpop.permute.xlu0 %1518
  %v1520 = vsel %vm94, %v1519, 0
  %1522 = vmatprep.subr.mxu0 0.0
  %1523 = vmatpush1.msra.mxu0 0.0
  %1524 = vmatprep.subr.mxu0 0.0
  %1525 = vmatpush1.msra.mxu0 0.0
  %1526 = vmatprep.subr.mxu0 0.0
  %1527 = vmatpush1.msra.mxu0 0.0
  %1528 = vmatprep.subr.mxu0 0.0
  %1529 = vmatpush1.msra.mxu0 0.0
  %1530 = vmatprep.subr.mxu0 0.0
  %1531 = vmatpush1.msra.mxu0 0.0
  %1532 = vmatprep.subr.mxu0 0.0
  %1533 = vmatpush1.msra.mxu0 0.0
  %1534 = vmatprep.subr.mxu0 0.0
  %1535 = vmatpush1.msra.mxu0 0.0
  %1536 = vmatprep.subr.mxu0 0.0
  %1537 = vmatpush1.msra.mxu0 0.0
  %1538 = vmatprep.subr.mxu0 0.0
  %1539 = vmatpush1.msra.mxu0 0.0
  %1540 = vmatprep.subr.mxu0 0.0
  %1541 = vmatpush1.msra.mxu0 0.0
  %1542 = vmatprep.subr.mxu0 0.0
  %1543 = vmatpush1.msra.mxu0 0.0
  %1544 = vmatprep.subr.mxu0 0.0
  %1545 = vmatpush1.msra.mxu0 0.0
  %1546 = vmatprep.subr.mxu0 0.0
  %1547 = vmatpush1.msra.mxu0 %v1315
  %1548 = vmatprep.subr.mxu0 0.0
  %1549 = vmatpush1.msra.mxu0 %v1314
  %1550 = vmatprep.subr.mxu0 0.0
  %1551 = vmatpush1.msra.mxu0 %v1313
  %1552 = vmatprep.subr.mxu0 0.0
  %1553 = vmatpush1.msra.mxu0 %v1312
  %1554 = vmatprep.subr.mxu0 0.0
  %1555 = vmatpush2.msra.mxu0 0.0
  %1556 = vmatprep.subr.mxu0 0.0
  %1557 = vmatpush2.msra.mxu0 0.0
  %1558 = vmatprep.subr.mxu0 0.0
  %1559 = vmatpush2.msra.mxu0 0.0
  %1560 = vmatprep.subr.mxu0 0.0
  %1561 = vmatpush2.msra.mxu0 0.0
  %1562 = vmatprep.subr.mxu0 0.0
  %1563 = vmatpush2.msra.mxu0 0.0
  %1564 = vmatprep.subr.mxu0 0.0
  %1565 = vmatpush2.msra.mxu0 0.0
  %1566 = vmatprep.subr.mxu0 0.0
  %1567 = vmatpush2.msra.mxu0 0.0
  %1568 = vmatprep.subr.mxu0 0.0
  %1569 = vmatpush2.msra.mxu0 0.0
  %1570 = vmatprep.subr.mxu0 0.0
  %1571 = vmatpush2.msra.mxu0 0.0
  %1572 = vmatprep.subr.mxu0 0.0
  %1573 = vmatpush2.msra.mxu0 0.0
  %1574 = vmatprep.subr.mxu0 0.0
  %1575 = vmatpush2.msra.mxu0 0.0
  %1576 = vmatprep.subr.mxu0 0.0
  %1577 = vmatpush2.msra.mxu0 0.0
  %1578 = vmatprep.subr.mxu0 0.0
  %1579 = vmatpush2.msra.mxu0 0.0
  %1580 = vmatprep.subr.mxu0 0.0
  %1581 = vmatpush2.msra.mxu0 0.0
  %1582 = vmatprep.subr.mxu0 0.0
  %1583 = vmatpush2.msra.mxu0 0.0
  %1584 = vmatprep.subr.mxu0 0.0
  %1585 = vmatpush2.msra.mxu0 0.0
  %1586 = vmatprep.mubr.f32.mxu0 0.0
  %1587 = vmatmul.mubr.f32.gmra.mxu0 %v1520
  %v1588 = vpop.f32.mrf.mxu0
  %v1589 = vadd.f32 0.0, %v1588
  %v1590 = vpop.f32.mrf.mxu0
  %1591 = vdwg.mxu0
  %v1592 = vadd.f32 %v1516, %v1589
  %v1593 = vtanh.pop %v1592
  %v1594 = vmul.f32 %v1593, 0.5
  %v1595 = vadd.f32 %v1594, 0.5
  %v1596 = vmul.f32 %v1595, %v1509
  %1598 = vrot.lane.b32.xlu0 %v1593, 64
  %v1599 = vpop.permute.xlu0 %1598
  %v1601 = vmul.f32 %v1595, %v1599
  %1603 = vrot.lane.b32.xlu0 %v1601, 32
  %v1604 = vpop.permute.xlu0 %1603
  %v1606 = vadd.f32 %v1596, %v1604
  %v1607 = vtanh.pop %v1606
  %1609 = vrot.lane.b32.xlu0 %v1607, 64
  %v1610 = vpop.permute.xlu0 %1609
  %v1612 = vmul.f32 %v1595, %v1610
  %v1613 = vld [vmem:[%s519] sm:$0xff]
  %1615 = vrot.lane.b32.xlu0 %v1612, 32
  %v1616 = vpop.permute.xlu0 %1615
  %v1617 = vsel %vm94, %v1616, 0
  %1619 = vmatprep.subr.mxu0 0.0
  %1620 = vmatpush1.msra.mxu0 0.0
  %1621 = vmatprep.subr.mxu0 0.0
  %1622 = vmatpush1.msra.mxu0 0.0
  %1623 = vmatprep.subr.mxu0 0.0
  %1624 = vmatpush1.msra.mxu0 0.0
  %1625 = vmatprep.subr.mxu0 0.0
  %1626 = vmatpush1.msra.mxu0 0.0
  %1627 = vmatprep.subr.mxu0 0.0
  %1628 = vmatpush1.msra.mxu0 0.0
  %1629 = vmatprep.subr.mxu0 0.0
  %1630 = vmatpush1.msra.mxu0 0.0
  %1631 = vmatprep.subr.mxu0 0.0
  %1632 = vmatpush1.msra.mxu0 0.0
  %1633 = vmatprep.subr.mxu0 0.0
  %1634 = vmatpush1.msra.mxu0 0.0
  %1635 = vmatprep.subr.mxu0 0.0
  %1636 = vmatpush1.msra.mxu0 0.0
  %1637 = vmatprep.subr.mxu0 0.0
  %1638 = vmatpush1.msra.mxu0 0.0
  %1639 = vmatprep.subr.mxu0 0.0
  %1640 = vmatpush1.msra.mxu0 0.0
  %1641 = vmatprep.subr.mxu0 0.0
  %1642 = vmatpush1.msra.mxu0 0.0
  %1643 = vmatprep.subr.mxu0 0.0
  %1644 = vmatpush1.msra.mxu0 %v1315
  %1645 = vmatprep.subr.mxu0 0.0
  %1646 = vmatpush1.msra.mxu0 %v1314
  %1647 = vmatprep.subr.mxu0 0.0
  %1648 = vmatpush1.msra.mxu0 %v1313
  %1649 = vmatprep.subr.mxu0 0.0
  %1650 = vmatpush1.msra.mxu0 %v1312
  %1651 = vmatprep.subr.mxu0 0.0
  %1652 = vmatpush2.msra.mxu0 0.0
  %1653 = vmatprep.subr.mxu0 0.0
  %1654 = vmatpush2.msra.mxu0 0.0
  %1655 = vmatprep.subr.mxu0 0.0
  %1656 = vmatpush2.msra.mxu0 0.0
  %1657 = vmatprep.subr.mxu0 0.0
  %1658 = vmatpush2.msra.mxu0 0.0
  %1659 = vmatprep.subr.mxu0 0.0
  %1660 = vmatpush2.msra.mxu0 0.0
  %1661 = vmatprep.subr.mxu0 0.0
  %1662 = vmatpush2.msra.mxu0 0.0
  %1663 = vmatprep.subr.mxu0 0.0
  %1664 = vmatpush2.msra.mxu0 0.0
  %1665 = vmatprep.subr.mxu0 0.0
  %1666 = vmatpush2.msra.mxu0 0.0
  %1667 = vmatprep.subr.mxu0 0.0
  %1668 = vmatpush2.msra.mxu0 0.0
  %1669 = vmatprep.subr.mxu0 0.0
  %1670 = vmatpush2.msra.mxu0 0.0
  %1671 = vmatprep.subr.mxu0 0.0
  %1672 = vmatpush2.msra.mxu0 0.0
  %1673 = vmatprep.subr.mxu0 0.0
  %1674 = vmatpush2.msra.mxu0 0.0
  %1675 = vmatprep.subr.mxu0 0.0
  %1676 = vmatpush2.msra.mxu0 0.0
  %1677 = vmatprep.subr.mxu0 0.0
  %1678 = vmatpush2.msra.mxu0 0.0
  %1679 = vmatprep.subr.mxu0 0.0
  %1680 = vmatpush2.msra.mxu0 0.0
  %1681 = vmatprep.subr.mxu0 0.0
  %1682 = vmatpush2.msra.mxu0 0.0
  %1683 = vmatprep.mubr.f32.mxu0 0.0
  %1684 = vmatmul.mubr.f32.gmra.mxu0 %v1617
  %v1685 = vpop.f32.mrf.mxu0
  %v1686 = vadd.f32 0.0, %v1685
  %v1687 = vpop.f32.mrf.mxu0
  %1688 = vdwg.mxu0
  %v1689 = vadd.f32 %v1613, %v1686
  %v1690 = vtanh.pop %v1689
  %v1691 = vmul.f32 %v1690, 0.5
  %v1692 = vadd.f32 %v1691, 0.5
  %v1693 = vmul.f32 %v1692, %v1606
  %1695 = vrot.lane.b32.xlu0 %v1690, 64
  %v1696 = vpop.permute.xlu0 %1695
  %v1698 = vmul.f32 %v1692, %v1696
  %1700 = vrot.lane.b32.xlu0 %v1698, 32
  %v1701 = vpop.permute.xlu0 %1700
  %v1703 = vadd.f32 %v1693, %v1701
  %v1704 = vtanh.pop %v1703
  %1706 = vrot.lane.b32.xlu0 %v1704, 64
  %v1707 = vpop.permute.xlu0 %1706
  %v1709 = vmul.f32 %v1692, %v1707
  %v1710 = vld [vmem:[%s626] sm:$0xff]
  %1712 = vrot.lane.b32.xlu0 %v1709, 32
  %v1713 = vpop.permute.xlu0 %1712
  %v1714 = vsel %vm94, %v1713, 0
  %1716 = vmatprep.subr.mxu0 0.0
  %1717 = vmatpush1.msra.mxu0 0.0
  %1718 = vmatprep.subr.mxu0 0.0
  %1719 = vmatpush1.msra.mxu0 0.0
  %1720 = vmatprep.subr.mxu0 0.0
  %1721 = vmatpush1.msra.mxu0 0.0
  %1722 = vmatprep.subr.mxu0 0.0
  %1723 = vmatpush1.msra.mxu0 0.0
  %1724 = vmatprep.subr.mxu0 0.0
  %1725 = vmatpush1.msra.mxu0 0.0
  %1726 = vmatprep.subr.mxu0 0.0
  %1727 = vmatpush1.msra.mxu0 0.0
  %1728 = vmatprep.subr.mxu0 0.0
  %1729 = vmatpush1.msra.mxu0 0.0
  %1730 = vmatprep.subr.mxu0 0.0
  %1731 = vmatpush1.msra.mxu0 0.0
  %1732 = vmatprep.subr.mxu0 0.0
  %1733 = vmatpush1.msra.mxu0 0.0
  %1734 = vmatprep.subr.mxu0 0.0
  %1735 = vmatpush1.msra.mxu0 0.0
  %1736 = vmatprep.subr.mxu0 0.0
  %1737 = vmatpush1.msra.mxu0 0.0
  %1738 = vmatprep.subr.mxu0 0.0
  %1739 = vmatpush1.msra.mxu0 0.0
  %1740 = vmatprep.subr.mxu0 0.0
  %1741 = vmatpush1.msra.mxu0 %v1315
  %1742 = vmatprep.subr.mxu0 0.0
  %1743 = vmatpush1.msra.mxu0 %v1314
  %1744 = vmatprep.subr.mxu0 0.0
  %1745 = vmatpush1.msra.mxu0 %v1313
  %1746 = vmatprep.subr.mxu0 0.0
  %1747 = vmatpush1.msra.mxu0 %v1312
  %1748 = vmatprep.subr.mxu0 0.0
  %1749 = vmatpush2.msra.mxu0 0.0
  %1750 = vmatprep.subr.mxu0 0.0
  %1751 = vmatpush2.msra.mxu0 0.0
  %1752 = vmatprep.subr.mxu0 0.0
  %1753 = vmatpush2.msra.mxu0 0.0
  %1754 = vmatprep.subr.mxu0 0.0
  %1755 = vmatpush2.msra.mxu0 0.0
  %1756 = vmatprep.subr.mxu0 0.0
  %1757 = vmatpush2.msra.mxu0 0.0
  %1758 = vmatprep.subr.mxu0 0.0
  %1759 = vmatpush2.msra.mxu0 0.0
  %1760 = vmatprep.subr.mxu0 0.0
  %1761 = vmatpush2.msra.mxu0 0.0
  %1762 = vmatprep.subr.mxu0 0.0
  %1763 = vmatpush2.msra.mxu0 0.0
  %1764 = vmatprep.subr.mxu0 0.0
  %1765 = vmatpush2.msra.mxu0 0.0
  %1766 = vmatprep.subr.mxu0 0.0
  %1767 = vmatpush2.msra.mxu0 0.0
  %1768 = vmatprep.subr.mxu0 0.0
  %1769 = vmatpush2.msra.mxu0 0.0
  %1770 = vmatprep.subr.mxu0 0.0
  %1771 = vmatpush2.msra.mxu0 0.0
  %1772 = vmatprep.subr.mxu0 0.0
  %1773 = vmatpush2.msra.mxu0 0.0
  %1774 = vmatprep.subr.mxu0 0.0
  %1775 = vmatpush2.msra.mxu0 0.0
  %1776 = vmatprep.subr.mxu0 0.0
  %1777 = vmatpush2.msra.mxu0 0.0
  %1778 = vmatprep.subr.mxu0 0.0
  %1779 = vmatpush2.msra.mxu0 0.0
  %1780 = vmatprep.mubr.f32.mxu0 0.0
  %1781 = vmatmul.mubr.f32.gmra.mxu0 %v1714
  %v1782 = vpop.f32.mrf.mxu0
  %v1783 = vadd.f32 0.0, %v1782
  %v1784 = vpop.f32.mrf.mxu0
  %1785 = vdwg.mxu0
  %v1786 = vadd.f32 %v1710, %v1783
  %v1787 = vtanh.pop %v1786
  %v1788 = vmul.f32 %v1787, 0.5
  %v1789 = vadd.f32 %v1788, 0.5
  %v1790 = vmul.f32 %v1789, %v1703
  %1792 = vrot.lane.b32.xlu0 %v1787, 64
  %v1793 = vpop.permute.xlu0 %1792
  %v1795 = vmul.f32 %v1789, %v1793
  %1797 = vrot.lane.b32.xlu0 %v1795, 32
  %v1798 = vpop.permute.xlu0 %1797
  %v1800 = vadd.f32 %v1790, %v1798
  %v1801 = vtanh.pop %v1800
  %1803 = vrot.lane.b32.xlu0 %v1801, 64
  %v1804 = vpop.permute.xlu0 %1803
  %v1806 = vmul.f32 %v1789, %v1804
  %v1807 = vld [vmem:[%s733] sm:$0xff]
  %1809 = vrot.lane.b32.xlu0 %v1806, 32
  %v1810 = vpop.permute.xlu0 %1809
  %v1811 = vsel %vm94, %v1810, 0
  %1813 = vmatprep.subr.mxu0 0.0
  %1814 = vmatpush1.msra.mxu0 0.0
  %1815 = vmatprep.subr.mxu0 0.0
  %1816 = vmatpush1.msra.mxu0 0.0
  %1817 = vmatprep.subr.mxu0 0.0
  %1818 = vmatpush1.msra.mxu0 0.0
  %1819 = vmatprep.subr.mxu0 0.0
  %1820 = vmatpush1.msra.mxu0 0.0
  %1821 = vmatprep.subr.mxu0 0.0
  %1822 = vmatpush1.msra.mxu0 0.0
  %1823 = vmatprep.subr.mxu0 0.0
  %1824 = vmatpush1.msra.mxu0 0.0
  %1825 = vmatprep.subr.mxu0 0.0
  %1826 = vmatpush1.msra.mxu0 0.0
  %1827 = vmatprep.subr.mxu0 0.0
  %1828 = vmatpush1.msra.mxu0 0.0
  %1829 = vmatprep.subr.mxu0 0.0
  %1830 = vmatpush1.msra.mxu0 0.0
  %1831 = vmatprep.subr.mxu0 0.0
  %1832 = vmatpush1.msra.mxu0 0.0
  %1833 = vmatprep.subr.mxu0 0.0
  %1834 = vmatpush1.msra.mxu0 0.0
  %1835 = vmatprep.subr.mxu0 0.0
  %1836 = vmatpush1.msra.mxu0 0.0
  %1837 = vmatprep.subr.mxu0 0.0
  %1838 = vmatpush1.msra.mxu0 %v1315
  %1839 = vmatprep.subr.mxu0 0.0
  %1840 = vmatpush1.msra.mxu0 %v1314
  %1841 = vmatprep.subr.mxu0 0.0
  %1842 = vmatpush1.msra.mxu0 %v1313
  %1843 = vmatprep.subr.mxu0 0.0
  %1844 = vmatpush1.msra.mxu0 %v1312
  %1845 = vmatprep.subr.mxu0 0.0
  %1846 = vmatpush2.msra.mxu0 0.0
  %1847 = vmatprep.subr.mxu0 0.0
  %1848 = vmatpush2.msra.mxu0 0.0
  %1849 = vmatprep.subr.mxu0 0.0
  %1850 = vmatpush2.msra.mxu0 0.0
  %1851 = vmatprep.subr.mxu0 0.0
  %1852 = vmatpush2.msra.mxu0 0.0
  %1853 = vmatprep.subr.mxu0 0.0
  %1854 = vmatpush2.msra.mxu0 0.0
  %1855 = vmatprep.subr.mxu0 0.0
  %1856 = vmatpush2.msra.mxu0 0.0
  %1857 = vmatprep.subr.mxu0 0.0
  %1858 = vmatpush2.msra.mxu0 0.0
  %1859 = vmatprep.subr.mxu0 0.0
  %1860 = vmatpush2.msra.mxu0 0.0
  %1861 = vmatprep.subr.mxu0 0.0
  %1862 = vmatpush2.msra.mxu0 0.0
  %1863 = vmatprep.subr.mxu0 0.0
  %1864 = vmatpush2.msra.mxu0 0.0
  %1865 = vmatprep.subr.mxu0 0.0
  %1866 = vmatpush2.msra.mxu0 0.0
  %1867 = vmatprep.subr.mxu0 0.0
  %1868 = vmatpush2.msra.mxu0 0.0
  %1869 = vmatprep.subr.mxu0 0.0
  %1870 = vmatpush2.msra.mxu0 0.0
  %1871 = vmatprep.subr.mxu0 0.0
  %1872 = vmatpush2.msra.mxu0 0.0
  %1873 = vmatprep.subr.mxu0 0.0
  %1874 = vmatpush2.msra.mxu0 0.0
  %1875 = vmatprep.subr.mxu0 0.0
  %1876 = vmatpush2.msra.mxu0 0.0
  %1877 = vmatprep.mubr.f32.mxu0 0.0
  %1878 = vmatmul.mubr.f32.gmra.mxu0 %v1811
  %v1879 = vpop.f32.mrf.mxu0
  %v1880 = vadd.f32 0.0, %v1879
  %v1881 = vpop.f32.mrf.mxu0
  %1882 = vdwg.mxu0
  %v1883 = vadd.f32 %v1807, %v1880
  %v1884 = vtanh.pop %v1883
  %v1885 = vmul.f32 %v1884, 0.5
  %v1886 = vadd.f32 %v1885, 0.5
  %v1887 = vmul.f32 %v1886, %v1800
  %1889 = vrot.lane.b32.xlu0 %v1884, 64
  %v1890 = vpop.permute.xlu0 %1889
  %v1892 = vmul.f32 %v1886, %v1890
  %1894 = vrot.lane.b32.xlu0 %v1892, 32
  %v1895 = vpop.permute.xlu0 %1894
  %v1897 = vadd.f32 %v1887, %v1895
  %v1898 = vtanh.pop %v1897
  %1900 = vrot.lane.b32.xlu0 %v1898, 64
  %v1901 = vpop.permute.xlu0 %1900
  %v1903 = vmul.f32 %v1886, %v1901
  %v1904 = vld [vmem:[%s840] sm:$0xff]
  %1906 = vrot.lane.b32.xlu0 %v1903, 32
  %v1907 = vpop.permute.xlu0 %1906
  %v1908 = vsel %vm94, %v1907, 0
  %1910 = vmatprep.subr.mxu0 0.0
  %1911 = vmatpush1.msra.mxu0 0.0
  %1912 = vmatprep.subr.mxu0 0.0
  %1913 = vmatpush1.msra.mxu0 0.0
  %1914 = vmatprep.subr.mxu0 0.0
  %1915 = vmatpush1.msra.mxu0 0.0
  %1916 = vmatprep.subr.mxu0 0.0
  %1917 = vmatpush1.msra.mxu0 0.0
  %1918 = vmatprep.subr.mxu0 0.0
  %1919 = vmatpush1.msra.mxu0 0.0
  %1920 = vmatprep.subr.mxu0 0.0
  %1921 = vmatpush1.msra.mxu0 0.0
  %1922 = vmatprep.subr.mxu0 0.0
  %1923 = vmatpush1.msra.mxu0 0.0
  %1924 = vmatprep.subr.mxu0 0.0
  %1925 = vmatpush1.msra.mxu0 0.0
  %1926 = vmatprep.subr.mxu0 0.0
  %1927 = vmatpush1.msra.mxu0 0.0
  %1928 = vmatprep.subr.mxu0 0.0
  %1929 = vmatpush1.msra.mxu0 0.0
  %1930 = vmatprep.subr.mxu0 0.0
  %1931 = vmatpush1.msra.mxu0 0.0
  %1932 = vmatprep.subr.mxu0 0.0
  %1933 = vmatpush1.msra.mxu0 0.0
  %1934 = vmatprep.subr.mxu0 0.0
  %1935 = vmatpush1.msra.mxu0 %v1315
  %1936 = vmatprep.subr.mxu0 0.0
  %1937 = vmatpush1.msra.mxu0 %v1314
  %1938 = vmatprep.subr.mxu0 0.0
  %1939 = vmatpush1.msra.mxu0 %v1313
  %1940 = vmatprep.subr.mxu0 0.0
  %1941 = vmatpush1.msra.mxu0 %v1312
  %1942 = vmatprep.subr.mxu0 0.0
  %1943 = vmatpush2.msra.mxu0 0.0
  %1944 = vmatprep.subr.mxu0 0.0
  %1945 = vmatpush2.msra.mxu0 0.0
  %1946 = vmatprep.subr.mxu0 0.0
  %1947 = vmatpush2.msra.mxu0 0.0
  %1948 = vmatprep.subr.mxu0 0.0
  %1949 = vmatpush2.msra.mxu0 0.0
  %1950 = vmatprep.subr.mxu0 0.0
  %1951 = vmatpush2.msra.mxu0 0.0
  %1952 = vmatprep.subr.mxu0 0.0
  %1953 = vmatpush2.msra.mxu0 0.0
  %1954 = vmatprep.subr.mxu0 0.0
  %1955 = vmatpush2.msra.mxu0 0.0
  %1956 = vmatprep.subr.mxu0 0.0
  %1957 = vmatpush2.msra.mxu0 0.0
  %1958 = vmatprep.subr.mxu0 0.0
  %1959 = vmatpush2.msra.mxu0 0.0
  %1960 = vmatprep.subr.mxu0 0.0
  %1961 = vmatpush2.msra.mxu0 0.0
  %1962 = vmatprep.subr.mxu0 0.0
  %1963 = vmatpush2.msra.mxu0 0.0
  %1964 = vmatprep.subr.mxu0 0.0
  %1965 = vmatpush2.msra.mxu0 0.0
  %1966 = vmatprep.subr.mxu0 0.0
  %1967 = vmatpush2.msra.mxu0 0.0
  %1968 = vmatprep.subr.mxu0 0.0
  %1969 = vmatpush2.msra.mxu0 0.0
  %1970 = vmatprep.subr.mxu0 0.0
  %1971 = vmatpush2.msra.mxu0 0.0
  %1972 = vmatprep.subr.mxu0 0.0
  %1973 = vmatpush2.msra.mxu0 0.0
  %1974 = vmatprep.mubr.f32.mxu0 0.0
  %1975 = vmatmul.mubr.f32.gmra.mxu0 %v1908
  %v1976 = vpop.f32.mrf.mxu0
  %v1977 = vadd.f32 0.0, %v1976
  %v1978 = vpop.f32.mrf.mxu0
  %1979 = vdwg.mxu0
  %v1980 = vadd.f32 %v1904, %v1977
  %v1981 = vtanh.pop %v1980
  %v1982 = vmul.f32 %v1981, 0.5
  %v1983 = vadd.f32 %v1982, 0.5
  %v1984 = vmul.f32 %v1983, %v1897
  %1986 = vrot.lane.b32.xlu0 %v1981, 64
  %v1987 = vpop.permute.xlu0 %1986
  %v1989 = vmul.f32 %v1983, %v1987
  %1991 = vrot.lane.b32.xlu0 %v1989, 32
  %v1992 = vpop.permute.xlu0 %1991
  %v1994 = vadd.f32 %v1984, %v1992
  %v1995 = vtanh.pop %v1994
  %1997 = vrot.lane.b32.xlu0 %v1995, 64
  %v1998 = vpop.permute.xlu0 %1997
  %v2000 = vmul.f32 %v1983, %v1998
  %v2001 = vld [vmem:[%s947] sm:$0xff]
  %2003 = vrot.lane.b32.xlu0 %v2000, 32
  %v2004 = vpop.permute.xlu0 %2003
  %v2005 = vsel %vm94, %v2004, 0
  %2007 = vmatprep.subr.mxu0 0.0
  %2008 = vmatpush1.msra.mxu0 0.0
  %2009 = vmatprep.subr.mxu0 0.0
  %2010 = vmatpush1.msra.mxu0 0.0
  %2011 = vmatprep.subr.mxu0 0.0
  %2012 = vmatpush1.msra.mxu0 0.0
  %2013 = vmatprep.subr.mxu0 0.0
  %2014 = vmatpush1.msra.mxu0 0.0
  %2015 = vmatprep.subr.mxu0 0.0
  %2016 = vmatpush1.msra.mxu0 0.0
  %2017 = vmatprep.subr.mxu0 0.0
  %2018 = vmatpush1.msra.mxu0 0.0
  %2019 = vmatprep.subr.mxu0 0.0
  %2020 = vmatpush1.msra.mxu0 0.0
  %2021 = vmatprep.subr.mxu0 0.0
  %2022 = vmatpush1.msra.mxu0 0.0
  %2023 = vmatprep.subr.mxu0 0.0
  %2024 = vmatpush1.msra.mxu0 0.0
  %2025 = vmatprep.subr.mxu0 0.0
  %2026 = vmatpush1.msra.mxu0 0.0
  %2027 = vmatprep.subr.mxu0 0.0
  %2028 = vmatpush1.msra.mxu0 0.0
  %2029 = vmatprep.subr.mxu0 0.0
  %2030 = vmatpush1.msra.mxu0 0.0
  %2031 = vmatprep.subr.mxu0 0.0
  %2032 = vmatpush1.msra.mxu0 %v1315
  %2033 = vmatprep.subr.mxu0 0.0
  %2034 = vmatpush1.msra.mxu0 %v1314
  %2035 = vmatprep.subr.mxu0 0.0
  %2036 = vmatpush1.msra.mxu0 %v1313
  %2037 = vmatprep.subr.mxu0 0.0
  %2038 = vmatpush1.msra.mxu0 %v1312
  %2039 = vmatprep.subr.mxu0 0.0
  %2040 = vmatpush2.msra.mxu0 0.0
  %2041 = vmatprep.subr.mxu0 0.0
  %2042 = vmatpush2.msra.mxu0 0.0
  %2043 = vmatprep.subr.mxu0 0.0
  %2044 = vmatpush2.msra.mxu0 0.0
  %2045 = vmatprep.subr.mxu0 0.0
  %2046 = vmatpush2.msra.mxu0 0.0
  %2047 = vmatprep.subr.mxu0 0.0
  %2048 = vmatpush2.msra.mxu0 0.0
  %2049 = vmatprep.subr.mxu0 0.0
  %2050 = vmatpush2.msra.mxu0 0.0
  %2051 = vmatprep.subr.mxu0 0.0
  %2052 = vmatpush2.msra.mxu0 0.0
  %2053 = vmatprep.subr.mxu0 0.0
  %2054 = vmatpush2.msra.mxu0 0.0
  %2055 = vmatprep.subr.mxu0 0.0
  %2056 = vmatpush2.msra.mxu0 0.0
  %2057 = vmatprep.subr.mxu0 0.0
  %2058 = vmatpush2.msra.mxu0 0.0
  %2059 = vmatprep.subr.mxu0 0.0
  %2060 = vmatpush2.msra.mxu0 0.0
  %2061 = vmatprep.subr.mxu0 0.0
  %2062 = vmatpush2.msra.mxu0 0.0
  %2063 = vmatprep.subr.mxu0 0.0
  %2064 = vmatpush2.msra.mxu0 0.0
  %2065 = vmatprep.subr.mxu0 0.0
  %2066 = vmatpush2.msra.mxu0 0.0
  %2067 = vmatprep.subr.mxu0 0.0
  %2068 = vmatpush2.msra.mxu0 0.0
  %2069 = vmatprep.subr.mxu0 0.0
  %2070 = vmatpush2.msra.mxu0 0.0
  %2071 = vmatprep.mubr.f32.mxu0 0.0
  %2072 = vmatmul.mubr.f32.gmra.mxu0 %v2005
  %v2073 = vpop.f32.mrf.mxu0
  %v2074 = vadd.f32 0.0, %v2073
  %v2075 = vpop.f32.mrf.mxu0
  %2076 = vdwg.mxu0
  %v2077 = vadd.f32 %v2001, %v2074
  %v2078 = vtanh.pop %v2077
  %v2079 = vmul.f32 %v2078, 0.5
  %v2080 = vadd.f32 %v2079, 0.5
  %v2081 = vmul.f32 %v2080, %v1994
  %2083 = vrot.lane.b32.xlu0 %v2078, 64
  %v2084 = vpop.permute.xlu0 %2083
  %v2086 = vmul.f32 %v2080, %v2084
  %2088 = vrot.lane.b32.xlu0 %v2086, 32
  %v2089 = vpop.permute.xlu0 %2088
  %v2091 = vadd.f32 %v2081, %v2089
  %v2092 = vtanh.pop %v2091
  %2094 = vrot.lane.b32.xlu0 %v2092, 64
  %v2095 = vpop.permute.xlu0 %2094
  %v2097 = vmul.f32 %v2080, %v2095
  %v2098 = vld [vmem:[%s1054] sm:$0xff]
  %2100 = vrot.lane.b32.xlu0 %v2097, 32
  %v2101 = vpop.permute.xlu0 %2100
  %v2102 = vsel %vm94, %v2101, 0
  %2104 = vmatprep.subr.mxu0 0.0
  %2105 = vmatpush1.msra.mxu0 0.0
  %2106 = vmatprep.subr.mxu0 0.0
  %2107 = vmatpush1.msra.mxu0 0.0
  %2108 = vmatprep.subr.mxu0 0.0
  %2109 = vmatpush1.msra.mxu0 0.0
  %2110 = vmatprep.subr.mxu0 0.0
  %2111 = vmatpush1.msra.mxu0 0.0
  %2112 = vmatprep.subr.mxu0 0.0
  %2113 = vmatpush1.msra.mxu0 0.0
  %2114 = vmatprep.subr.mxu0 0.0
  %2115 = vmatpush1.msra.mxu0 0.0
  %2116 = vmatprep.subr.mxu0 0.0
  %2117 = vmatpush1.msra.mxu0 0.0
  %2118 = vmatprep.subr.mxu0 0.0
  %2119 = vmatpush1.msra.mxu0 0.0
  %2120 = vmatprep.subr.mxu0 0.0
  %2121 = vmatpush1.msra.mxu0 0.0
  %2122 = vmatprep.subr.mxu0 0.0
  %2123 = vmatpush1.msra.mxu0 0.0
  %2124 = vmatprep.subr.mxu0 0.0
  %2125 = vmatpush1.msra.mxu0 0.0
  %2126 = vmatprep.subr.mxu0 0.0
  %2127 = vmatpush1.msra.mxu0 0.0
  %2128 = vmatprep.subr.mxu0 0.0
  %2129 = vmatpush1.msra.mxu0 %v1315
  %2130 = vmatprep.subr.mxu0 0.0
  %2131 = vmatpush1.msra.mxu0 %v1314
  %2132 = vmatprep.subr.mxu0 0.0
  %2133 = vmatpush1.msra.mxu0 %v1313
  %2134 = vmatprep.subr.mxu0 0.0
  %2135 = vmatpush1.msra.mxu0 %v1312
  %2136 = vmatprep.subr.mxu0 0.0
  %2137 = vmatpush2.msra.mxu0 0.0
  %2138 = vmatprep.subr.mxu0 0.0
  %2139 = vmatpush2.msra.mxu0 0.0
  %2140 = vmatprep.subr.mxu0 0.0
  %2141 = vmatpush2.msra.mxu0 0.0
  %2142 = vmatprep.subr.mxu0 0.0
  %2143 = vmatpush2.msra.mxu0 0.0
  %2144 = vmatprep.subr.mxu0 0.0
  %2145 = vmatpush2.msra.mxu0 0.0
  %2146 = vmatprep.subr.mxu0 0.0
  %2147 = vmatpush2.msra.mxu0 0.0
  %2148 = vmatprep.subr.mxu0 0.0
  %2149 = vmatpush2.msra.mxu0 0.0
  %2150 = vmatprep.subr.mxu0 0.0
  %2151 = vmatpush2.msra.mxu0 0.0
  %2152 = vmatprep.subr.mxu0 0.0
  %2153 = vmatpush2.msra.mxu0 0.0
  %2154 = vmatprep.subr.mxu0 0.0
  %2155 = vmatpush2.msra.mxu0 0.0
  %2156 = vmatprep.subr.mxu0 0.0
  %2157 = vmatpush2.msra.mxu0 0.0
  %2158 = vmatprep.subr.mxu0 0.0
  %2159 = vmatpush2.msra.mxu0 0.0
  %2160 = vmatprep.subr.mxu0 0.0
  %2161 = vmatpush2.msra.mxu0 0.0
  %2162 = vmatprep.subr.mxu0 0.0
  %2163 = vmatpush2.msra.mxu0 0.0
  %2164 = vmatprep.subr.mxu0 0.0
  %2165 = vmatpush2.msra.mxu0 0.0
  %2166 = vmatprep.subr.mxu0 0.0
  %2167 = vmatpush2.msra.mxu0 0.0
  %2168 = vmatprep.mubr.f32.mxu0 0.0
  %2169 = vmatmul.mubr.f32.gmra.mxu0 %v2102
  %v2170 = vpop.f32.mrf.mxu0
  %v2171 = vadd.f32 0.0, %v2170
  %v2172 = vpop.f32.mrf.mxu0
  %2173 = vdwg.mxu0
  %v2174 = vadd.f32 %v2098, %v2171
  %v2175 = vtanh.pop %v2174
  %v2176 = vmul.f32 %v2175, 0.5
  %v2177 = vadd.f32 %v2176, 0.5
  %v2178 = vmul.f32 %v2177, %v2091
  %2180 = vrot.lane.b32.xlu0 %v2175, 64
  %v2181 = vpop.permute.xlu0 %2180
  %v2183 = vmul.f32 %v2177, %v2181
  %2185 = vrot.lane.b32.xlu0 %v2183, 32
  %v2186 = vpop.permute.xlu0 %2185
  %v2188 = vadd.f32 %v2178, %v2186
  %v2189 = vtanh.pop %v2188
  %2191 = vrot.lane.b32.xlu0 %v2189, 64
  %v2192 = vpop.permute.xlu0 %2191
  %v2194 = vmul.f32 %v2177, %v2192
  %v2195 = vld [vmem:[%s7] sm:$0xff]
  %v2196 = vld [vmem:[%s7 + $0x8] sm:$0xff]
  %v2197 = vld [vmem:[%s7 + $0x10] sm:$0xff]
  %v2198 = vld [vmem:[%s7 + $0x18] sm:$0xff]
  %v2199 = vld [vmem:[%s8] sm:$0x1]
  %v2201 = vlaneseq
  %v2202 = vshrl.u32 %v2201, 7
  %v2203 = vsub.s32 0, %v2202
  %v2204 = vrot.slane %v2199, %v2203
  %2207 = vrot.lane.b32.xlu0 %v2194, 32
  %v2208 = vpop.permute.xlu0 %2207
  %v2209 = vsel %vm94, %v2208, 0
  %2211 = vmatprep.subr.mxu0 0.0
  %2212 = vmatpush1.msra.mxu0 0.0
  %2213 = vmatprep.subr.mxu0 0.0
  %2214 = vmatpush1.msra.mxu0 0.0
  %2215 = vmatprep.subr.mxu0 0.0
  %2216 = vmatpush1.msra.mxu0 0.0
  %2217 = vmatprep.subr.mxu0 0.0
  %2218 = vmatpush1.msra.mxu0 0.0
  %2219 = vmatprep.subr.mxu0 0.0
  %2220 = vmatpush1.msra.mxu0 0.0
  %2221 = vmatprep.subr.mxu0 0.0
  %2222 = vmatpush1.msra.mxu0 0.0
  %2223 = vmatprep.subr.mxu0 0.0
  %2224 = vmatpush1.msra.mxu0 0.0
  %2225 = vmatprep.subr.mxu0 0.0
  %2226 = vmatpush1.msra.mxu0 0.0
  %2227 = vmatprep.subr.mxu0 0.0
  %2228 = vmatpush1.msra.mxu0 0.0
  %2229 = vmatprep.subr.mxu0 0.0
  %2230 = vmatpush1.msra.mxu0 0.0
  %2231 = vmatprep.subr.mxu0 0.0
  %2232 = vmatpush1.msra.mxu0 0.0
  %2233 = vmatprep.subr.mxu0 0.0
  %2234 = vmatpush1.msra.mxu0 0.0
  %2235 = vmatprep.subr.mxu0 0.0
  %2236 = vmatpush1.msra.mxu0 %v2198
  %2237 = vmatprep.subr.mxu0 0.0
  %2238 = vmatpush1.msra.mxu0 %v2197
  %2239 = vmatprep.subr.mxu0 0.0
  %2240 = vmatpush1.msra.mxu0 %v2196
  %2241 = vmatprep.subr.mxu0 0.0
  %2242 = vmatpush1.msra.mxu0 %v2195
  %2243 = vmatprep.subr.mxu0 0.0
  %2244 = vmatpush2.msra.mxu0 0.0
  %2245 = vmatprep.subr.mxu0 0.0
  %2246 = vmatpush2.msra.mxu0 0.0
  %2247 = vmatprep.subr.mxu0 0.0
  %2248 = vmatpush2.msra.mxu0 0.0
  %2249 = vmatprep.subr.mxu0 0.0
  %2250 = vmatpush2.msra.mxu0 0.0
  %2251 = vmatprep.subr.mxu0 0.0
  %2252 = vmatpush2.msra.mxu0 0.0
  %2253 = vmatprep.subr.mxu0 0.0
  %2254 = vmatpush2.msra.mxu0 0.0
  %2255 = vmatprep.subr.mxu0 0.0
  %2256 = vmatpush2.msra.mxu0 0.0
  %2257 = vmatprep.subr.mxu0 0.0
  %2258 = vmatpush2.msra.mxu0 0.0
  %2259 = vmatprep.subr.mxu0 0.0
  %2260 = vmatpush2.msra.mxu0 0.0
  %2261 = vmatprep.subr.mxu0 0.0
  %2262 = vmatpush2.msra.mxu0 0.0
  %2263 = vmatprep.subr.mxu0 0.0
  %2264 = vmatpush2.msra.mxu0 0.0
  %2265 = vmatprep.subr.mxu0 0.0
  %2266 = vmatpush2.msra.mxu0 0.0
  %2267 = vmatprep.subr.mxu0 0.0
  %2268 = vmatpush2.msra.mxu0 0.0
  %2269 = vmatprep.subr.mxu0 0.0
  %2270 = vmatpush2.msra.mxu0 0.0
  %2271 = vmatprep.subr.mxu0 0.0
  %2272 = vmatpush2.msra.mxu0 0.0
  %2273 = vmatprep.subr.mxu0 0.0
  %2274 = vmatpush2.msra.mxu0 0.0
  %2275 = vmatprep.mubr.f32.mxu0 0.0
  %2276 = vmatmul.mubr.f32.gmra.mxu0 %v2209
  %v2277 = vpop.f32.mrf.mxu0
  %v2278 = vadd.f32 %v2204, %v2277
  %v2279 = vpop.f32.mrf.mxu0
  %2280 = vdwg.mxu0
  %2281 = vst [vmem:[%s11] sm:$0xff] %v2278
  // Predicated region
  $region46: #{rnn_forward.1} parent=0 // pred_check
    _
  $region47: #{rnn_forward.1} parent=0 // pred_check_branch
    %2283 = sbr.rel (0) target = $region49
  $region48: #{rnn_forward.1} parent=0 // pred_region
    _
  $region49: #{rnn_forward.1} parent=0 // pred_fallthru
    _
  // Predicated region
  $region50: #{rnn_forward.1} parent=0 // pred_check
    _
  $region51: #{rnn_forward.1} parent=0 // pred_check_branch
    %2285 = sbr.rel (0) target = $region53
  $region52: #{rnn_forward.1} parent=0 // pred_region
    _
  $region53: #{rnn_forward.1} parent=0 // pred_fallthru
    _

</llo_original>
